<compile_context>
chip_gen: v7x
topology: tpu7x:2x2x1
jax: 0.10.0
libtpu: 0.0.40
codegen_flags: <defaults>
</compile_context>

<pallas_src>
import jax
import jax.numpy as jnp
from jax.experimental import pallas as pl
from jax.experimental.pallas import tpu as pltpu

# ---------------- model config (small, consistent with a VideoMAE classifier) ----
B = 2          # batch
T = 4          # frames
C = 3          # channels
IMG = 16       # spatial size
PATCH = 8      # spatial patch
TUBELET = 2    # temporal tubelet
HIDDEN = 32    # hidden size
HEADS = 4      # attention heads
HEAD_DIM = HIDDEN // HEADS
LAYERS = 2     # encoder layers
INTER = 64     # MLP intermediate
SEQ = (T // TUBELET) * (IMG // PATCH) * (IMG // PATCH)   # 8 tokens
PATCH_DIM = C * TUBELET * PATCH * PATCH                  # 384
NUM_VERBS = 6
NUM_NOUNS = 10
NUM_PAD = 128  # lane-dense padded logits width (verb/noun columns sliced outside)
LN_EPS = 1e-6

# Order of per-classifier stacked parameter tensors fed to the fused kernel.
_CLS_KEYS = ("patch_w", "pos_bias",
             "ln1_g", "ln1_b", "wqkv", "bqkv", "wo", "bo",
             "ln2_g", "ln2_b", "w1", "b1", "w2", "b2",
             "fc_g", "fc_b", "head_w", "head_b")


# ---------------------------------- Pallas kernel ---------------------------------
def _fused_videomae_kernel(
        # shared inputs
        patches_ref,
        # per-classifier stacked params (leading classifier axis squeezed away)
        patch_w_ref, pos_bias_ref,
        ln1_g_ref, ln1_b_ref, wqkv_ref, bqkv_ref, wo_ref, bo_ref,
        ln2_g_ref, ln2_b_ref, w1_ref, b1_ref, w2_ref, b2_ref,
        fc_g_ref, fc_b_ref, head_w_ref, head_b_ref,
        # output
        logits_ref):
    """One grid step == one full VideoMAE classifier forward, entirely in VMEM."""

    def layer_norm(x, g, b):
        mu = jnp.mean(x, axis=-1, keepdims=True)
        var = jnp.mean((x - mu) ** 2, axis=-1, keepdims=True)
        return (x - mu) * jax.lax.rsqrt(var + LN_EPS) * g + b

    # --- tubelet/patch embedding (Conv3d as matmul) + fused (bias + positions) ---
    x = jnp.dot(patches_ref[...], patch_w_ref[...],
                preferred_element_type=jnp.float32)
    x = x + pos_bias_ref[...]                                     # (B*SEQ, HIDDEN)

    # --- encoder layers (unrolled in Python, all data stays in VMEM) ---
    for l in range(LAYERS):
        # self-attention (pre-LN), fused QKV projection
        # (1/sqrt(head_dim) is pre-folded into the Q slice of wqkv/bqkv)
        xn = layer_norm(x, ln1_g_ref[l], ln1_b_ref[l])
        qkv = jnp.dot(xn, wqkv_ref[l],
                      preferred_element_type=jnp.float32) + bqkv_ref[l]
        q = qkv[:, 0:HIDDEN]
        k = qkv[:, HIDDEN:2 * HIDDEN]
        v = qkv[:, 2 * HIDDEN:3 * HIDDEN]

        o_rows = []
        for b in range(B):
            r0 = b * SEQ
            o_heads = []
            for h in range(HEADS):
                c0 = h * HEAD_DIM
                qh = q[r0:r0 + SEQ, c0:c0 + HEAD_DIM]             # (SEQ, HEAD_DIM)
                kh = k[r0:r0 + SEQ, c0:c0 + HEAD_DIM]
                vh = v[r0:r0 + SEQ, c0:c0 + HEAD_DIM]
                s = jax.lax.dot_general(qh, kh, (((1,), (1,)), ((), ())),
                                        preferred_element_type=jnp.float32)
                s = s - jnp.max(s, axis=-1, keepdims=True)
                p = jnp.exp(s)
                p = p * pl.reciprocal(jnp.sum(p, axis=-1, keepdims=True),
                                      approx=True)
                o_heads.append(jnp.dot(p, vh,
                                       preferred_element_type=jnp.float32))
            o_rows.append(jnp.concatenate(o_heads, axis=-1))      # (SEQ, HIDDEN)
        o = jnp.concatenate(o_rows, axis=0)                       # (B*SEQ, HIDDEN)

        # output projection + residual (folded)
        x = x + jnp.dot(o, wo_ref[l],
                        preferred_element_type=jnp.float32) + bo_ref[l]

        # MLP (pre-LN) + residual (folded)
        xn = layer_norm(x, ln2_g_ref[l], ln2_b_ref[l])
        h1 = jnp.dot(xn, w1_ref[l],
                     preferred_element_type=jnp.float32) + b1_ref[l]
        # TODO(synk): HF VideoMAE uses exact (erf) GELU; tanh approximation kept
        #             here for Mosaic-safe lowering.
        h1 = jax.nn.gelu(h1)
        x = x + jnp.dot(h1, w2_ref[l],
                        preferred_element_type=jnp.float32) + b2_ref[l]

    # --- mean-pool over tokens + fc_norm + classifier head (lane-dense store) ---
    pooled = jnp.concatenate(
        [jnp.mean(x[b * SEQ:(b + 1) * SEQ, :], axis=0, keepdims=True)
         for b in range(B)], axis=0)                              # (B, HIDDEN)
    pooled = layer_norm(pooled, fc_g_ref[...], fc_b_ref[...])
    logits_ref[...] = (jnp.dot(pooled, head_w_ref[...],
                               preferred_element_type=jnp.float32)
                       + head_b_ref[...])                          # (B, NUM_PAD)


# ----------------------------- pallas_call wrapper ---------------------------------
def _shared_spec(shape):
    n = len(shape)
    return pl.BlockSpec(tuple(shape), lambda g, _n=n: (0,) * _n)


def _per_classifier_spec(shape):
    n = len(shape) - 1
    return pl.BlockSpec((None,) + tuple(shape[1:]),
                        lambda g, _n=n: (g,) + (0,) * _n)


def _run_fused(patches, sp):
    cls_args = [sp[k] for k in _CLS_KEYS]
    in_specs = ([_shared_spec(patches.shape)] +
                [_per_classifier_spec(a.shape) for a in cls_args])
    return pl.pallas_call(
        _fused_videomae_kernel,
        out_shape=jax.ShapeDtypeStruct((2, B, NUM_PAD), jnp.float32),
        grid=(2,),  # classifier axis: verb=0, noun=1
        in_specs=in_specs,
        out_specs=pl.BlockSpec((None, B, NUM_PAD), lambda g: (g, 0, 0)),
        compiler_params=pltpu.CompilerParams(
            dimension_semantics=("parallel",)),   # two TensorCores on v7x
    )(patches, *cls_args)


# ---------------------------------- parameter init --------------------------------
def _sinusoid_pos_emb(seq, hidden):
    pos = jnp.arange(seq, dtype=jnp.float32)[:, None]
    i = jnp.arange(hidden, dtype=jnp.float32)[None, :]
    angle = pos / jnp.power(10000.0, (2.0 * jnp.floor(i / 2.0)) / hidden)
    return jnp.where((jnp.arange(hidden)[None, :] % 2) == 0,
                     jnp.sin(angle), jnp.cos(angle)).astype(jnp.float32)


def init_classifier_params(key, num_labels):
    """Synthetic deterministic parameters for one VideoMAEForVideoClassification."""
    ks = iter(jax.random.split(key, 8 + LAYERS * 16))

    def w(shape, scale=0.02):
        return scale * jax.random.normal(next(ks), shape, jnp.float32)

    params = {
        "patch_w": w((PATCH_DIM, HIDDEN)),          # Conv3d kernel flattened (C,t,h,w) -> hidden
        "patch_b": jnp.zeros((HIDDEN,), jnp.float32),
        "pos_emb": _sinusoid_pos_emb(SEQ, HIDDEN),  # fixed sinusoidal positions (VideoMAE)
        "layers": [],
        "fc_g": jnp.ones((HIDDEN,), jnp.float32),   # fc_norm (use_mean_pooling=True)
        "fc_b": jnp.zeros((HIDDEN,), jnp.float32),
        "head_w": w((HIDDEN, num_labels)),
        "head_b": jnp.zeros((num_labels,), jnp.float32),
    }
    for _ in range(LAYERS):
        params["layers"].append({
            "ln1_g": jnp.ones((HIDDEN,), jnp.float32),
            "ln1_b": jnp.zeros((HIDDEN,), jnp.float32),
            "wq": w((HIDDEN, HIDDEN)), "bq": w((HIDDEN,)),
            "wk": w((HIDDEN, HIDDEN)), "bk": jnp.zeros((HIDDEN,), jnp.float32),  # K bias is zero in VideoMAE
            "wv": w((HIDDEN, HIDDEN)), "bv": w((HIDDEN,)),
            "wo": w((HIDDEN, HIDDEN)), "bo": jnp.zeros((HIDDEN,), jnp.float32),
            "ln2_g": jnp.ones((HIDDEN,), jnp.float32),
            "ln2_b": jnp.zeros((HIDDEN,), jnp.float32),
            "w1": w((HIDDEN, INTER)), "b1": jnp.zeros((INTER,), jnp.float32),
            "w2": w((INTER, HIDDEN)), "b2": jnp.zeros((HIDDEN,), jnp.float32),
        })
    return params


def _stack_classifier_params(pv, pn):
    """Stack verb/noun params along a leading axis of 2.

    Fuses QKV (with the 1/sqrt(head_dim) scale folded into the Q slice), fuses
    patch bias + positional embedding into one additive table, and pads the
    classifier heads to a lane-dense NUM_PAD width.
    """
    scale = 1.0 / (HEAD_DIM ** 0.5)

    def per_cls(p):
        Ls = p["layers"]
        n_lab = p["head_w"].shape[1]
        return {
            "patch_w": p["patch_w"],
            # patch-embed bias + sinusoidal positions, tiled over batch: (B*SEQ, HIDDEN)
            "pos_bias": (jnp.tile(p["pos_emb"], (B, 1))
                         + p["patch_b"].reshape(1, HIDDEN)),
            "ln1_g": jnp.stack([L["ln1_g"].reshape(1, HIDDEN) for L in Ls]),
            "ln1_b": jnp.stack([L["ln1_b"].reshape(1, HIDDEN) for L in Ls]),
            # softmax scale folded into the Q projection (weights + bias)
            "wqkv": jnp.stack([jnp.concatenate([L["wq"] * scale, L["wk"], L["wv"]],
                                               axis=1) for L in Ls]),
            "bqkv": jnp.stack([jnp.concatenate([L["bq"] * scale, L["bk"], L["bv"]]
                                               ).reshape(1, 3 * HIDDEN)
                               for L in Ls]),
            "wo": jnp.stack([L["wo"] for L in Ls]),
            "bo": jnp.stack([L["bo"].reshape(1, HIDDEN) for L in Ls]),
            "ln2_g": jnp.stack([L["ln2_g"].reshape(1, HIDDEN) for L in Ls]),
            "ln2_b": jnp.stack([L["ln2_b"].reshape(1, HIDDEN) for L in Ls]),
            "w1": jnp.stack([L["w1"] for L in Ls]),
            "b1": jnp.stack([L["b1"].reshape(1, INTER) for L in Ls]),
            "w2": jnp.stack([L["w2"] for L in Ls]),
            "b2": jnp.stack([L["b2"].reshape(1, HIDDEN) for L in Ls]),
            "fc_g": p["fc_g"].reshape(1, HIDDEN),
            "fc_b": p["fc_b"].reshape(1, HIDDEN),
            "head_w": jnp.pad(p["head_w"], ((0, 0), (0, NUM_PAD - n_lab))),
            "head_b": jnp.pad(p["head_b"], (0, NUM_PAD - n_lab)).reshape(1, NUM_PAD),
        }
    dv, dn = per_cls(pv), per_cls(pn)
    return {k: jnp.stack([dv[k], dn[k]], axis=0) for k in _CLS_KEYS}


# ---------------------------------- forward (glue) --------------------------------
def _patchify(pixel_values):
    """(B, T, C, H, W) -> (B, SEQ, C*TUBELET*PATCH*PATCH), matching Conv3d tubelet embed."""
    x = jnp.transpose(pixel_values, (0, 2, 1, 3, 4))  # (B, C, T, H, W)
    x = x.reshape(B, C, T // TUBELET, TUBELET, IMG // PATCH, PATCH, IMG // PATCH, PATCH)
    x = jnp.transpose(x, (0, 2, 4, 6, 1, 3, 5, 7))    # (B, t', h', w', C, tub, ph, pw)
    return x.reshape(B, SEQ, PATCH_DIM)


def verb_noun_forward(pixel_values, verb_params, noun_params):
    """VerbNounClassifier.forward: one fused Pallas kernel for both classifiers."""
    patches = _patchify(pixel_values).reshape(B * SEQ, PATCH_DIM)
    stacked = _stack_classifier_params(verb_params, noun_params)
    logits = _run_fused(patches, stacked)                         # (2, B, NUM_PAD)
    return {"verb_logits": logits[0, :, :NUM_VERBS],
            "noun_logits": logits[1, :, :NUM_NOUNS]}


# ---------------------------------------- main -------------------------------------
if __name__ == "__main__":
    root = jax.random.PRNGKey(0)
    k_in, k_verb, k_noun = jax.random.split(root, 3)

    pixel_values = jax.random.normal(k_in, (B, T, C, IMG, IMG), jnp.float32)
    verb_params = init_classifier_params(k_verb, NUM_VERBS)
    noun_params = init_classifier_params(k_noun, NUM_NOUNS)

    fwd = jax.jit(verb_noun_forward)
    out = fwd(pixel_values, verb_params, noun_params)
    out = jax.block_until_ready(out)

    assert out["verb_logits"].shape == (B, NUM_VERBS)
    assert out["noun_logits"].shape == (B, NUM_NOUNS)
    assert jnp.all(jnp.isfinite(out["verb_logits"]))
    assert jnp.all(jnp.isfinite(out["noun_logits"]))
    print("KERNEL_OK")
</pallas_src>

<mosaic_0001>
module attributes {stable_mosaic.version = 11 : i64} {
  func.func @_fused_videomae_kernel(%arg0: i32, %arg1: memref<16x384xf32, #tpu.memory_space<vmem>>, %arg2: memref<1x384x32xf32, #tpu.memory_space<vmem>>, %arg3: memref<1x16x32xf32, #tpu.memory_space<vmem>>, %arg4: memref<1x2x1x32xf32, #tpu.memory_space<vmem>>, %arg5: memref<1x2x1x32xf32, #tpu.memory_space<vmem>>, %arg6: memref<1x2x32x96xf32, #tpu.memory_space<vmem>>, %arg7: memref<1x2x1x96xf32, #tpu.memory_space<vmem>>, %arg8: memref<1x2x32x32xf32, #tpu.memory_space<vmem>>, %arg9: memref<1x2x1x32xf32, #tpu.memory_space<vmem>>, %arg10: memref<1x2x1x32xf32, #tpu.memory_space<vmem>>, %arg11: memref<1x2x1x32xf32, #tpu.memory_space<vmem>>, %arg12: memref<1x2x32x64xf32, #tpu.memory_space<vmem>>, %arg13: memref<1x2x1x64xf32, #tpu.memory_space<vmem>>, %arg14: memref<1x2x64x32xf32, #tpu.memory_space<vmem>>, %arg15: memref<1x2x1x32xf32, #tpu.memory_space<vmem>>, %arg16: memref<1x1x32xf32, #tpu.memory_space<vmem>>, %arg17: memref<1x1x32xf32, #tpu.memory_space<vmem>>, %arg18: memref<1x32x128xf32, #tpu.memory_space<vmem>>, %arg19: memref<1x1x128xf32, #tpu.memory_space<vmem>>, %arg20: memref<1x2x128xf32, #tpu.memory_space<vmem>>) attributes {dimension_semantics = [#tpu.dimension_semantics<parallel>], iteration_bounds = array<i64: 2>, scalar_prefetch = 0 : i64, scratch_operands = 0 : i64, tpu.core_type = #tpu.core_type<tc>, window_params = [{pipeline_mode = #tpu.pipeline_mode<synchronous>, transform_indices = @transform_0, window_bounds = array<i64: 16, 384>}, {transform_indices = @transform_1, window_bounds = array<i64: 1, 384, 32>}, {transform_indices = @transform_2, window_bounds = array<i64: 1, 16, 32>}, {transform_indices = @transform_3, window_bounds = array<i64: 1, 2, 1, 32>}, {transform_indices = @transform_4, window_bounds = array<i64: 1, 2, 1, 32>}, {transform_indices = @transform_5, window_bounds = array<i64: 1, 2, 32, 96>}, {transform_indices = @transform_6, window_bounds = array<i64: 1, 2, 1, 96>}, {transform_indices = @transform_7, window_bounds = array<i64: 1, 2, 32, 32>}, {transform_indices = @transform_8, window_bounds = array<i64: 1, 2, 1, 32>}, {transform_indices = @transform_9, window_bounds = array<i64: 1, 2, 1, 32>}, {transform_indices = @transform_10, window_bounds = array<i64: 1, 2, 1, 32>}, {transform_indices = @transform_11, window_bounds = array<i64: 1, 2, 32, 64>}, {transform_indices = @transform_12, window_bounds = array<i64: 1, 2, 1, 64>}, {transform_indices = @transform_13, window_bounds = array<i64: 1, 2, 64, 32>}, {transform_indices = @transform_14, window_bounds = array<i64: 1, 2, 1, 32>}, {transform_indices = @transform_15, window_bounds = array<i64: 1, 1, 32>}, {transform_indices = @transform_16, window_bounds = array<i64: 1, 1, 32>}, {transform_indices = @transform_17, window_bounds = array<i64: 1, 32, 128>}, {transform_indices = @transform_18, window_bounds = array<i64: 1, 1, 128>}, {transform_indices = @transform_19, window_bounds = array<i64: 1, 2, 128>}]} {
    %c0 = arith.constant 0 : index
    %c0_0 = arith.constant 0 : index
    %0 = vector.load %arg1[%c0, %c0_0] : memref<16x384xf32, #tpu.memory_space<vmem>>, vector<16x384xf32>
    %c0_1 = arith.constant 0 : index
    %c0_2 = arith.constant 0 : index
    %c0_3 = arith.constant 0 : index
    %1 = vector.load %arg2[%c0_1, %c0_2, %c0_3] : memref<1x384x32xf32, #tpu.memory_space<vmem>>, vector<1x384x32xf32>
    %2 = vector.shape_cast %1 : vector<1x384x32xf32> to vector<384x32xf32>
    %cst = arith.constant dense<0.000000e+00> : vector<16x32xf32>
    %3 = tpu.matmul %0, %2, %cst {dimension_numbers = #tpu.dot_dimension_numbers<[1], [0], [0], [1], [0, 0, 1, 1], [], []>} : vector<16x384xf32>, vector<384x32xf32>, vector<16x32xf32> -> vector<16x32xf32>
    %c0_4 = arith.constant 0 : index
    %c0_5 = arith.constant 0 : index
    %c0_6 = arith.constant 0 : index
    %4 = vector.load %arg3[%c0_4, %c0_5, %c0_6] : memref<1x16x32xf32, #tpu.memory_space<vmem>>, vector<1x16x32xf32>
    %5 = vector.shape_cast %4 : vector<1x16x32xf32> to vector<16x32xf32>
    %6 = arith.addf %3, %5 : vector<16x32xf32>
    %c0_7 = arith.constant 0 : index
    %c0_8 = arith.constant 0 : index
    %c0_9 = arith.constant 0 : index
    %c0_10 = arith.constant 0 : index
    %7 = vector.load %arg4[%c0_7, %c0_8, %c0_9, %c0_10] : memref<1x2x1x32xf32, #tpu.memory_space<vmem>>, vector<1x1x1x32xf32>
    %8 = vector.shape_cast %7 : vector<1x1x1x32xf32> to vector<1x32xf32>
    %c0_11 = arith.constant 0 : index
    %c0_12 = arith.constant 0 : index
    %c0_13 = arith.constant 0 : index
    %c0_14 = arith.constant 0 : index
    %9 = vector.load %arg5[%c0_11, %c0_12, %c0_13, %c0_14] : memref<1x2x1x32xf32, #tpu.memory_space<vmem>>, vector<1x1x1x32xf32>
    %10 = vector.shape_cast %9 : vector<1x1x1x32xf32> to vector<1x32xf32>
    %cst_15 = arith.constant dense<0.000000e+00> : vector<16xf32>
    %11 = vector.multi_reduction <add>, %6, %cst_15 [1] : vector<16x32xf32> to vector<16xf32>
    %12 = vector.shape_cast %11 : vector<16xf32> to vector<16x1xf32>
    %cst_16 = arith.constant 3.200000e+01 : f32
    %13 = vector.broadcast %cst_16 : f32 to vector<16x1xf32>
    %14 = arith.divf %12, %13 : vector<16x1xf32>
    %15 = vector.broadcast %14 : vector<16x1xf32> to vector<16x32xf32>
    %16 = arith.subf %6, %15 : vector<16x32xf32>
    %17 = arith.mulf %16, %16 : vector<16x32xf32>
    %cst_17 = arith.constant dense<0.000000e+00> : vector<16xf32>
    %18 = vector.multi_reduction <add>, %17, %cst_17 [1] : vector<16x32xf32> to vector<16xf32>
    %19 = vector.shape_cast %18 : vector<16xf32> to vector<16x1xf32>
    %cst_18 = arith.constant 3.200000e+01 : f32
    %20 = vector.broadcast %cst_18 : f32 to vector<16x1xf32>
    %21 = arith.divf %19, %20 : vector<16x1xf32>
    %22 = vector.broadcast %14 : vector<16x1xf32> to vector<16x32xf32>
    %23 = arith.subf %6, %22 : vector<16x32xf32>
    %cst_19 = arith.constant 9.99999997E-7 : f32
    %24 = vector.broadcast %cst_19 : f32 to vector<16x1xf32>
    %25 = arith.addf %21, %24 : vector<16x1xf32>
    %26 = math.rsqrt %25 : vector<16x1xf32>
    %27 = vector.broadcast %26 : vector<16x1xf32> to vector<16x32xf32>
    %28 = arith.mulf %23, %27 : vector<16x32xf32>
    %29 = vector.broadcast %8 : vector<1x32xf32> to vector<16x32xf32>
    %30 = arith.mulf %28, %29 : vector<16x32xf32>
    %31 = vector.broadcast %10 : vector<1x32xf32> to vector<16x32xf32>
    %32 = arith.addf %30, %31 : vector<16x32xf32>
    %c0_20 = arith.constant 0 : index
    %c0_21 = arith.constant 0 : index
    %c0_22 = arith.constant 0 : index
    %c0_23 = arith.constant 0 : index
    %33 = vector.load %arg6[%c0_20, %c0_21, %c0_22, %c0_23] : memref<1x2x32x96xf32, #tpu.memory_space<vmem>>, vector<1x1x32x96xf32>
    %34 = vector.shape_cast %33 : vector<1x1x32x96xf32> to vector<32x96xf32>
    %cst_24 = arith.constant dense<0.000000e+00> : vector<16x96xf32>
    %35 = tpu.matmul %32, %34, %cst_24 {dimension_numbers = #tpu.dot_dimension_numbers<[1], [0], [0], [1], [0, 0, 1, 1], [], []>} : vector<16x32xf32>, vector<32x96xf32>, vector<16x96xf32> -> vector<16x96xf32>
    %c0_25 = arith.constant 0 : index
    %c0_26 = arith.constant 0 : index
    %c0_27 = arith.constant 0 : index
    %c0_28 = arith.constant 0 : index
    %36 = vector.load %arg7[%c0_25, %c0_26, %c0_27, %c0_28] : memref<1x2x1x96xf32, #tpu.memory_space<vmem>>, vector<1x1x1x96xf32>
    %37 = vector.shape_cast %36 : vector<1x1x1x96xf32> to vector<1x96xf32>
    %38 = vector.broadcast %37 : vector<1x96xf32> to vector<16x96xf32>
    %39 = arith.addf %35, %38 : vector<16x96xf32>
    %40 = vector.extract_strided_slice %39 {offsets = [0, 0], sizes = [16, 32], strides = [1, 1]} : vector<16x96xf32> to vector<16x32xf32>
    %41 = vector.extract_strided_slice %39 {offsets = [0, 32], sizes = [16, 32], strides = [1, 1]} : vector<16x96xf32> to vector<16x32xf32>
    %42 = vector.extract_strided_slice %39 {offsets = [0, 64], sizes = [16, 32], strides = [1, 1]} : vector<16x96xf32> to vector<16x32xf32>
    %43 = vector.extract_strided_slice %40 {offsets = [0, 0], sizes = [8, 8], strides = [1, 1]} : vector<16x32xf32> to vector<8x8xf32>
    %44 = vector.extract_strided_slice %41 {offsets = [0, 0], sizes = [8, 8], strides = [1, 1]} : vector<16x32xf32> to vector<8x8xf32>
    %45 = vector.extract_strided_slice %42 {offsets = [0, 0], sizes = [8, 8], strides = [1, 1]} : vector<16x32xf32> to vector<8x8xf32>
    %cst_29 = arith.constant dense<0.000000e+00> : vector<8x8xf32>
    %46 = tpu.matmul %43, %44, %cst_29 {dimension_numbers = #tpu.dot_dimension_numbers<[1], [1], [0], [0], [0, 0, 1, 0], [], []>} : vector<8x8xf32>, vector<8x8xf32>, vector<8x8xf32> -> vector<8x8xf32>
    %cst_30 = arith.constant dense<0xFF800000> : vector<8xf32>
    %47 = vector.multi_reduction <maximumf>, %46, %cst_30 [1] : vector<8x8xf32> to vector<8xf32>
    %48 = vector.shape_cast %47 : vector<8xf32> to vector<8x1xf32>
    %49 = vector.broadcast %48 : vector<8x1xf32> to vector<8x8xf32>
    %50 = arith.subf %46, %49 : vector<8x8xf32>
    %51 = math.exp %50 : vector<8x8xf32>
    %cst_31 = arith.constant dense<0.000000e+00> : vector<8xf32>
    %52 = vector.multi_reduction <add>, %51, %cst_31 [1] : vector<8x8xf32> to vector<8xf32>
    %53 = vector.shape_cast %52 : vector<8xf32> to vector<8x1xf32>
    %54 = tpu.reciprocal %53 {approx = true} : vector<8x1xf32> -> vector<8x1xf32>
    %55 = vector.broadcast %54 : vector<8x1xf32> to vector<8x8xf32>
    %56 = arith.mulf %51, %55 : vector<8x8xf32>
    %cst_32 = arith.constant dense<0.000000e+00> : vector<8x8xf32>
    %57 = tpu.matmul %56, %45, %cst_32 {dimension_numbers = #tpu.dot_dimension_numbers<[1], [0], [0], [1], [0, 0, 1, 1], [], []>} : vector<8x8xf32>, vector<8x8xf32>, vector<8x8xf32> -> vector<8x8xf32>
    %58 = vector.extract_strided_slice %40 {offsets = [0, 8], sizes = [8, 8], strides = [1, 1]} : vector<16x32xf32> to vector<8x8xf32>
    %59 = vector.extract_strided_slice %41 {offsets = [0, 8], sizes = [8, 8], strides = [1, 1]} : vector<16x32xf32> to vector<8x8xf32>
    %60 = vector.extract_strided_slice %42 {offsets = [0, 8], sizes = [8, 8], strides = [1, 1]} : vector<16x32xf32> to vector<8x8xf32>
    %cst_33 = arith.constant dense<0.000000e+00> : vector<8x8xf32>
    %61 = tpu.matmul %58, %59, %cst_33 {dimension_numbers = #tpu.dot_dimension_numbers<[1], [1], [0], [0], [0, 0, 1, 0], [], []>} : vector<8x8xf32>, vector<8x8xf32>, vector<8x8xf32> -> vector<8x8xf32>
    %cst_34 = arith.constant dense<0xFF800000> : vector<8xf32>
    %62 = vector.multi_reduction <maximumf>, %61, %cst_34 [1] : vector<8x8xf32> to vector<8xf32>
    %63 = vector.shape_cast %62 : vector<8xf32> to vector<8x1xf32>
    %64 = vector.broadcast %63 : vector<8x1xf32> to vector<8x8xf32>
    %65 = arith.subf %61, %64 : vector<8x8xf32>
    %66 = math.exp %65 : vector<8x8xf32>
    %cst_35 = arith.constant dense<0.000000e+00> : vector<8xf32>
    %67 = vector.multi_reduction <add>, %66, %cst_35 [1] : vector<8x8xf32> to vector<8xf32>
    %68 = vector.shape_cast %67 : vector<8xf32> to vector<8x1xf32>
    %69 = tpu.reciprocal %68 {approx = true} : vector<8x1xf32> -> vector<8x1xf32>
    %70 = vector.broadcast %69 : vector<8x1xf32> to vector<8x8xf32>
    %71 = arith.mulf %66, %70 : vector<8x8xf32>
    %cst_36 = arith.constant dense<0.000000e+00> : vector<8x8xf32>
    %72 = tpu.matmul %71, %60, %cst_36 {dimension_numbers = #tpu.dot_dimension_numbers<[1], [0], [0], [1], [0, 0, 1, 1], [], []>} : vector<8x8xf32>, vector<8x8xf32>, vector<8x8xf32> -> vector<8x8xf32>
    %73 = vector.extract_strided_slice %40 {offsets = [0, 16], sizes = [8, 8], strides = [1, 1]} : vector<16x32xf32> to vector<8x8xf32>
    %74 = vector.extract_strided_slice %41 {offsets = [0, 16], sizes = [8, 8], strides = [1, 1]} : vector<16x32xf32> to vector<8x8xf32>
    %75 = vector.extract_strided_slice %42 {offsets = [0, 16], sizes = [8, 8], strides = [1, 1]} : vector<16x32xf32> to vector<8x8xf32>
    %cst_37 = arith.constant dense<0.000000e+00> : vector<8x8xf32>
    %76 = tpu.matmul %73, %74, %cst_37 {dimension_numbers = #tpu.dot_dimension_numbers<[1], [1], [0], [0], [0, 0, 1, 0], [], []>} : vector<8x8xf32>, vector<8x8xf32>, vector<8x8xf32> -> vector<8x8xf32>
    %cst_38 = arith.constant dense<0xFF800000> : vector<8xf32>
    %77 = vector.multi_reduction <maximumf>, %76, %cst_38 [1] : vector<8x8xf32> to vector<8xf32>
    %78 = vector.shape_cast %77 : vector<8xf32> to vector<8x1xf32>
    %79 = vector.broadcast %78 : vector<8x1xf32> to vector<8x8xf32>
    %80 = arith.subf %76, %79 : vector<8x8xf32>
    %81 = math.exp %80 : vector<8x8xf32>
    %cst_39 = arith.constant dense<0.000000e+00> : vector<8xf32>
    %82 = vector.multi_reduction <add>, %81, %cst_39 [1] : vector<8x8xf32> to vector<8xf32>
    %83 = vector.shape_cast %82 : vector<8xf32> to vector<8x1xf32>
    %84 = tpu.reciprocal %83 {approx = true} : vector<8x1xf32> -> vector<8x1xf32>
    %85 = vector.broadcast %84 : vector<8x1xf32> to vector<8x8xf32>
    %86 = arith.mulf %81, %85 : vector<8x8xf32>
    %cst_40 = arith.constant dense<0.000000e+00> : vector<8x8xf32>
    %87 = tpu.matmul %86, %75, %cst_40 {dimension_numbers = #tpu.dot_dimension_numbers<[1], [0], [0], [1], [0, 0, 1, 1], [], []>} : vector<8x8xf32>, vector<8x8xf32>, vector<8x8xf32> -> vector<8x8xf32>
    %88 = vector.extract_strided_slice %40 {offsets = [0, 24], sizes = [8, 8], strides = [1, 1]} : vector<16x32xf32> to vector<8x8xf32>
    %89 = vector.extract_strided_slice %41 {offsets = [0, 24], sizes = [8, 8], strides = [1, 1]} : vector<16x32xf32> to vector<8x8xf32>
    %90 = vector.extract_strided_slice %42 {offsets = [0, 24], sizes = [8, 8], strides = [1, 1]} : vector<16x32xf32> to vector<8x8xf32>
    %cst_41 = arith.constant dense<0.000000e+00> : vector<8x8xf32>
    %91 = tpu.matmul %88, %89, %cst_41 {dimension_numbers = #tpu.dot_dimension_numbers<[1], [1], [0], [0], [0, 0, 1, 0], [], []>} : vector<8x8xf32>, vector<8x8xf32>, vector<8x8xf32> -> vector<8x8xf32>
    %cst_42 = arith.constant dense<0xFF800000> : vector<8xf32>
    %92 = vector.multi_reduction <maximumf>, %91, %cst_42 [1] : vector<8x8xf32> to vector<8xf32>
    %93 = vector.shape_cast %92 : vector<8xf32> to vector<8x1xf32>
    %94 = vector.broadcast %93 : vector<8x1xf32> to vector<8x8xf32>
    %95 = arith.subf %91, %94 : vector<8x8xf32>
    %96 = math.exp %95 : vector<8x8xf32>
    %cst_43 = arith.constant dense<0.000000e+00> : vector<8xf32>
    %97 = vector.multi_reduction <add>, %96, %cst_43 [1] : vector<8x8xf32> to vector<8xf32>
    %98 = vector.shape_cast %97 : vector<8xf32> to vector<8x1xf32>
    %99 = tpu.reciprocal %98 {approx = true} : vector<8x1xf32> -> vector<8x1xf32>
    %100 = vector.broadcast %99 : vector<8x1xf32> to vector<8x8xf32>
    %101 = arith.mulf %96, %100 : vector<8x8xf32>
    %cst_44 = arith.constant dense<0.000000e+00> : vector<8x8xf32>
    %102 = tpu.matmul %101, %90, %cst_44 {dimension_numbers = #tpu.dot_dimension_numbers<[1], [0], [0], [1], [0, 0, 1, 1], [], []>} : vector<8x8xf32>, vector<8x8xf32>, vector<8x8xf32> -> vector<8x8xf32>
    %103 = tpu.concatenate %57, %72, %87, %102 in 1 : vector<8x8xf32>, vector<8x8xf32>, vector<8x8xf32>, vector<8x8xf32> -> vector<8x32xf32>
    %104 = vector.extract_strided_slice %40 {offsets = [8, 0], sizes = [8, 8], strides = [1, 1]} : vector<16x32xf32> to vector<8x8xf32>
    %105 = vector.extract_strided_slice %41 {offsets = [8, 0], sizes = [8, 8], strides = [1, 1]} : vector<16x32xf32> to vector<8x8xf32>
    %106 = vector.extract_strided_slice %42 {offsets = [8, 0], sizes = [8, 8], strides = [1, 1]} : vector<16x32xf32> to vector<8x8xf32>
    %cst_45 = arith.constant dense<0.000000e+00> : vector<8x8xf32>
    %107 = tpu.matmul %104, %105, %cst_45 {dimension_numbers = #tpu.dot_dimension_numbers<[1], [1], [0], [0], [0, 0, 1, 0], [], []>} : vector<8x8xf32>, vector<8x8xf32>, vector<8x8xf32> -> vector<8x8xf32>
    %cst_46 = arith.constant dense<0xFF800000> : vector<8xf32>
    %108 = vector.multi_reduction <maximumf>, %107, %cst_46 [1] : vector<8x8xf32> to vector<8xf32>
    %109 = vector.shape_cast %108 : vector<8xf32> to vector<8x1xf32>
    %110 = vector.broadcast %109 : vector<8x1xf32> to vector<8x8xf32>
    %111 = arith.subf %107, %110 : vector<8x8xf32>
    %112 = math.exp %111 : vector<8x8xf32>
    %cst_47 = arith.constant dense<0.000000e+00> : vector<8xf32>
    %113 = vector.multi_reduction <add>, %112, %cst_47 [1] : vector<8x8xf32> to vector<8xf32>
    %114 = vector.shape_cast %113 : vector<8xf32> to vector<8x1xf32>
    %115 = tpu.reciprocal %114 {approx = true} : vector<8x1xf32> -> vector<8x1xf32>
    %116 = vector.broadcast %115 : vector<8x1xf32> to vector<8x8xf32>
    %117 = arith.mulf %112, %116 : vector<8x8xf32>
    %cst_48 = arith.constant dense<0.000000e+00> : vector<8x8xf32>
    %118 = tpu.matmul %117, %106, %cst_48 {dimension_numbers = #tpu.dot_dimension_numbers<[1], [0], [0], [1], [0, 0, 1, 1], [], []>} : vector<8x8xf32>, vector<8x8xf32>, vector<8x8xf32> -> vector<8x8xf32>
    %119 = vector.extract_strided_slice %40 {offsets = [8, 8], sizes = [8, 8], strides = [1, 1]} : vector<16x32xf32> to vector<8x8xf32>
    %120 = vector.extract_strided_slice %41 {offsets = [8, 8], sizes = [8, 8], strides = [1, 1]} : vector<16x32xf32> to vector<8x8xf32>
    %121 = vector.extract_strided_slice %42 {offsets = [8, 8], sizes = [8, 8], strides = [1, 1]} : vector<16x32xf32> to vector<8x8xf32>
    %cst_49 = arith.constant dense<0.000000e+00> : vector<8x8xf32>
    %122 = tpu.matmul %119, %120, %cst_49 {dimension_numbers = #tpu.dot_dimension_numbers<[1], [1], [0], [0], [0, 0, 1, 0], [], []>} : vector<8x8xf32>, vector<8x8xf32>, vector<8x8xf32> -> vector<8x8xf32>
    %cst_50 = arith.constant dense<0xFF800000> : vector<8xf32>
    %123 = vector.multi_reduction <maximumf>, %122, %cst_50 [1] : vector<8x8xf32> to vector<8xf32>
    %124 = vector.shape_cast %123 : vector<8xf32> to vector<8x1xf32>
    %125 = vector.broadcast %124 : vector<8x1xf32> to vector<8x8xf32>
    %126 = arith.subf %122, %125 : vector<8x8xf32>
    %127 = math.exp %126 : vector<8x8xf32>
    %cst_51 = arith.constant dense<0.000000e+00> : vector<8xf32>
    %128 = vector.multi_reduction <add>, %127, %cst_51 [1] : vector<8x8xf32> to vector<8xf32>
    %129 = vector.shape_cast %128 : vector<8xf32> to vector<8x1xf32>
    %130 = tpu.reciprocal %129 {approx = true} : vector<8x1xf32> -> vector<8x1xf32>
    %131 = vector.broadcast %130 : vector<8x1xf32> to vector<8x8xf32>
    %132 = arith.mulf %127, %131 : vector<8x8xf32>
    %cst_52 = arith.constant dense<0.000000e+00> : vector<8x8xf32>
    %133 = tpu.matmul %132, %121, %cst_52 {dimension_numbers = #tpu.dot_dimension_numbers<[1], [0], [0], [1], [0, 0, 1, 1], [], []>} : vector<8x8xf32>, vector<8x8xf32>, vector<8x8xf32> -> vector<8x8xf32>
    %134 = vector.extract_strided_slice %40 {offsets = [8, 16], sizes = [8, 8], strides = [1, 1]} : vector<16x32xf32> to vector<8x8xf32>
    %135 = vector.extract_strided_slice %41 {offsets = [8, 16], sizes = [8, 8], strides = [1, 1]} : vector<16x32xf32> to vector<8x8xf32>
    %136 = vector.extract_strided_slice %42 {offsets = [8, 16], sizes = [8, 8], strides = [1, 1]} : vector<16x32xf32> to vector<8x8xf32>
    %cst_53 = arith.constant dense<0.000000e+00> : vector<8x8xf32>
    %137 = tpu.matmul %134, %135, %cst_53 {dimension_numbers = #tpu.dot_dimension_numbers<[1], [1], [0], [0], [0, 0, 1, 0], [], []>} : vector<8x8xf32>, vector<8x8xf32>, vector<8x8xf32> -> vector<8x8xf32>
    %cst_54 = arith.constant dense<0xFF800000> : vector<8xf32>
    %138 = vector.multi_reduction <maximumf>, %137, %cst_54 [1] : vector<8x8xf32> to vector<8xf32>
    %139 = vector.shape_cast %138 : vector<8xf32> to vector<8x1xf32>
    %140 = vector.broadcast %139 : vector<8x1xf32> to vector<8x8xf32>
    %141 = arith.subf %137, %140 : vector<8x8xf32>
    %142 = math.exp %141 : vector<8x8xf32>
    %cst_55 = arith.constant dense<0.000000e+00> : vector<8xf32>
    %143 = vector.multi_reduction <add>, %142, %cst_55 [1] : vector<8x8xf32> to vector<8xf32>
    %144 = vector.shape_cast %143 : vector<8xf32> to vector<8x1xf32>
    %145 = tpu.reciprocal %144 {approx = true} : vector<8x1xf32> -> vector<8x1xf32>
    %146 = vector.broadcast %145 : vector<8x1xf32> to vector<8x8xf32>
    %147 = arith.mulf %142, %146 : vector<8x8xf32>
    %cst_56 = arith.constant dense<0.000000e+00> : vector<8x8xf32>
    %148 = tpu.matmul %147, %136, %cst_56 {dimension_numbers = #tpu.dot_dimension_numbers<[1], [0], [0], [1], [0, 0, 1, 1], [], []>} : vector<8x8xf32>, vector<8x8xf32>, vector<8x8xf32> -> vector<8x8xf32>
    %149 = vector.extract_strided_slice %40 {offsets = [8, 24], sizes = [8, 8], strides = [1, 1]} : vector<16x32xf32> to vector<8x8xf32>
    %150 = vector.extract_strided_slice %41 {offsets = [8, 24], sizes = [8, 8], strides = [1, 1]} : vector<16x32xf32> to vector<8x8xf32>
    %151 = vector.extract_strided_slice %42 {offsets = [8, 24], sizes = [8, 8], strides = [1, 1]} : vector<16x32xf32> to vector<8x8xf32>
    %cst_57 = arith.constant dense<0.000000e+00> : vector<8x8xf32>
    %152 = tpu.matmul %149, %150, %cst_57 {dimension_numbers = #tpu.dot_dimension_numbers<[1], [1], [0], [0], [0, 0, 1, 0], [], []>} : vector<8x8xf32>, vector<8x8xf32>, vector<8x8xf32> -> vector<8x8xf32>
    %cst_58 = arith.constant dense<0xFF800000> : vector<8xf32>
    %153 = vector.multi_reduction <maximumf>, %152, %cst_58 [1] : vector<8x8xf32> to vector<8xf32>
    %154 = vector.shape_cast %153 : vector<8xf32> to vector<8x1xf32>
    %155 = vector.broadcast %154 : vector<8x1xf32> to vector<8x8xf32>
    %156 = arith.subf %152, %155 : vector<8x8xf32>
    %157 = math.exp %156 : vector<8x8xf32>
    %cst_59 = arith.constant dense<0.000000e+00> : vector<8xf32>
    %158 = vector.multi_reduction <add>, %157, %cst_59 [1] : vector<8x8xf32> to vector<8xf32>
    %159 = vector.shape_cast %158 : vector<8xf32> to vector<8x1xf32>
    %160 = tpu.reciprocal %159 {approx = true} : vector<8x1xf32> -> vector<8x1xf32>
    %161 = vector.broadcast %160 : vector<8x1xf32> to vector<8x8xf32>
    %162 = arith.mulf %157, %161 : vector<8x8xf32>
    %cst_60 = arith.constant dense<0.000000e+00> : vector<8x8xf32>
    %163 = tpu.matmul %162, %151, %cst_60 {dimension_numbers = #tpu.dot_dimension_numbers<[1], [0], [0], [1], [0, 0, 1, 1], [], []>} : vector<8x8xf32>, vector<8x8xf32>, vector<8x8xf32> -> vector<8x8xf32>
    %164 = tpu.concatenate %118, %133, %148, %163 in 1 : vector<8x8xf32>, vector<8x8xf32>, vector<8x8xf32>, vector<8x8xf32> -> vector<8x32xf32>
    %165 = tpu.concatenate %103, %164 in 0 : vector<8x32xf32>, vector<8x32xf32> -> vector<16x32xf32>
    %c0_61 = arith.constant 0 : index
    %c0_62 = arith.constant 0 : index
    %c0_63 = arith.constant 0 : index
    %c0_64 = arith.constant 0 : index
    %166 = vector.load %arg8[%c0_61, %c0_62, %c0_63, %c0_64] : memref<1x2x32x32xf32, #tpu.memory_space<vmem>>, vector<1x1x32x32xf32>
    %167 = vector.shape_cast %166 : vector<1x1x32x32xf32> to vector<32x32xf32>
    %cst_65 = arith.constant dense<0.000000e+00> : vector<16x32xf32>
    %168 = tpu.matmul %165, %167, %cst_65 {dimension_numbers = #tpu.dot_dimension_numbers<[1], [0], [0], [1], [0, 0, 1, 1], [], []>} : vector<16x32xf32>, vector<32x32xf32>, vector<16x32xf32> -> vector<16x32xf32>
    %169 = arith.addf %6, %168 : vector<16x32xf32>
    %c0_66 = arith.constant 0 : index
    %c0_67 = arith.constant 0 : index
    %c0_68 = arith.constant 0 : index
    %c0_69 = arith.constant 0 : index
    %170 = vector.load %arg9[%c0_66, %c0_67, %c0_68, %c0_69] : memref<1x2x1x32xf32, #tpu.memory_space<vmem>>, vector<1x1x1x32xf32>
    %171 = vector.shape_cast %170 : vector<1x1x1x32xf32> to vector<1x32xf32>
    %172 = vector.broadcast %171 : vector<1x32xf32> to vector<16x32xf32>
    %173 = arith.addf %169, %172 : vector<16x32xf32>
    %c0_70 = arith.constant 0 : index
    %c0_71 = arith.constant 0 : index
    %c0_72 = arith.constant 0 : index
    %c0_73 = arith.constant 0 : index
    %174 = vector.load %arg10[%c0_70, %c0_71, %c0_72, %c0_73] : memref<1x2x1x32xf32, #tpu.memory_space<vmem>>, vector<1x1x1x32xf32>
    %175 = vector.shape_cast %174 : vector<1x1x1x32xf32> to vector<1x32xf32>
    %c0_74 = arith.constant 0 : index
    %c0_75 = arith.constant 0 : index
    %c0_76 = arith.constant 0 : index
    %c0_77 = arith.constant 0 : index
    %176 = vector.load %arg11[%c0_74, %c0_75, %c0_76, %c0_77] : memref<1x2x1x32xf32, #tpu.memory_space<vmem>>, vector<1x1x1x32xf32>
    %177 = vector.shape_cast %176 : vector<1x1x1x32xf32> to vector<1x32xf32>
    %cst_78 = arith.constant dense<0.000000e+00> : vector<16xf32>
    %178 = vector.multi_reduction <add>, %173, %cst_78 [1] : vector<16x32xf32> to vector<16xf32>
    %179 = vector.shape_cast %178 : vector<16xf32> to vector<16x1xf32>
    %cst_79 = arith.constant 3.200000e+01 : f32
    %180 = vector.broadcast %cst_79 : f32 to vector<16x1xf32>
    %181 = arith.divf %179, %180 : vector<16x1xf32>
    %182 = vector.broadcast %181 : vector<16x1xf32> to vector<16x32xf32>
    %183 = arith.subf %173, %182 : vector<16x32xf32>
    %184 = arith.mulf %183, %183 : vector<16x32xf32>
    %cst_80 = arith.constant dense<0.000000e+00> : vector<16xf32>
    %185 = vector.multi_reduction <add>, %184, %cst_80 [1] : vector<16x32xf32> to vector<16xf32>
    %186 = vector.shape_cast %185 : vector<16xf32> to vector<16x1xf32>
    %cst_81 = arith.constant 3.200000e+01 : f32
    %187 = vector.broadcast %cst_81 : f32 to vector<16x1xf32>
    %188 = arith.divf %186, %187 : vector<16x1xf32>
    %189 = vector.broadcast %181 : vector<16x1xf32> to vector<16x32xf32>
    %190 = arith.subf %173, %189 : vector<16x32xf32>
    %cst_82 = arith.constant 9.99999997E-7 : f32
    %191 = vector.broadcast %cst_82 : f32 to vector<16x1xf32>
    %192 = arith.addf %188, %191 : vector<16x1xf32>
    %193 = math.rsqrt %192 : vector<16x1xf32>
    %194 = vector.broadcast %193 : vector<16x1xf32> to vector<16x32xf32>
    %195 = arith.mulf %190, %194 : vector<16x32xf32>
    %196 = vector.broadcast %175 : vector<1x32xf32> to vector<16x32xf32>
    %197 = arith.mulf %195, %196 : vector<16x32xf32>
    %198 = vector.broadcast %177 : vector<1x32xf32> to vector<16x32xf32>
    %199 = arith.addf %197, %198 : vector<16x32xf32>
    %c0_83 = arith.constant 0 : index
    %c0_84 = arith.constant 0 : index
    %c0_85 = arith.constant 0 : index
    %c0_86 = arith.constant 0 : index
    %200 = vector.load %arg12[%c0_83, %c0_84, %c0_85, %c0_86] : memref<1x2x32x64xf32, #tpu.memory_space<vmem>>, vector<1x1x32x64xf32>
    %201 = vector.shape_cast %200 : vector<1x1x32x64xf32> to vector<32x64xf32>
    %cst_87 = arith.constant dense<0.000000e+00> : vector<16x64xf32>
    %202 = tpu.matmul %199, %201, %cst_87 {dimension_numbers = #tpu.dot_dimension_numbers<[1], [0], [0], [1], [0, 0, 1, 1], [], []>} : vector<16x32xf32>, vector<32x64xf32>, vector<16x64xf32> -> vector<16x64xf32>
    %c0_88 = arith.constant 0 : index
    %c0_89 = arith.constant 0 : index
    %c0_90 = arith.constant 0 : index
    %c0_91 = arith.constant 0 : index
    %203 = vector.load %arg13[%c0_88, %c0_89, %c0_90, %c0_91] : memref<1x2x1x64xf32, #tpu.memory_space<vmem>>, vector<1x1x1x64xf32>
    %204 = vector.shape_cast %203 : vector<1x1x1x64xf32> to vector<1x64xf32>
    %205 = vector.broadcast %204 : vector<1x64xf32> to vector<16x64xf32>
    %206 = arith.addf %202, %205 : vector<16x64xf32>
    %207 = arith.mulf %206, %206 : vector<16x64xf32>
    %208 = arith.mulf %206, %207 : vector<16x64xf32>
    %cst_92 = arith.constant 4.471500e-02 : f32
    %209 = vector.broadcast %cst_92 : f32 to vector<16x64xf32>
    %210 = arith.mulf %209, %208 : vector<16x64xf32>
    %211 = arith.addf %206, %210 : vector<16x64xf32>
    %cst_93 = arith.constant 0.797884583 : f32
    %212 = vector.broadcast %cst_93 : f32 to vector<16x64xf32>
    %213 = arith.mulf %212, %211 : vector<16x64xf32>
    %214 = math.tanh %213 : vector<16x64xf32>
    %cst_94 = arith.constant 1.000000e+00 : f32
    %215 = vector.broadcast %cst_94 : f32 to vector<16x64xf32>
    %216 = arith.addf %215, %214 : vector<16x64xf32>
    %cst_95 = arith.constant 5.000000e-01 : f32
    %217 = vector.broadcast %cst_95 : f32 to vector<16x64xf32>
    %218 = arith.mulf %217, %216 : vector<16x64xf32>
    %219 = arith.mulf %206, %218 : vector<16x64xf32>
    %c0_96 = arith.constant 0 : index
    %c0_97 = arith.constant 0 : index
    %c0_98 = arith.constant 0 : index
    %c0_99 = arith.constant 0 : index
    %220 = vector.load %arg14[%c0_96, %c0_97, %c0_98, %c0_99] : memref<1x2x64x32xf32, #tpu.memory_space<vmem>>, vector<1x1x64x32xf32>
    %221 = vector.shape_cast %220 : vector<1x1x64x32xf32> to vector<64x32xf32>
    %cst_100 = arith.constant dense<0.000000e+00> : vector<16x32xf32>
    %222 = tpu.matmul %219, %221, %cst_100 {dimension_numbers = #tpu.dot_dimension_numbers<[1], [0], [0], [1], [0, 0, 1, 1], [], []>} : vector<16x64xf32>, vector<64x32xf32>, vector<16x32xf32> -> vector<16x32xf32>
    %223 = arith.addf %173, %222 : vector<16x32xf32>
    %c0_101 = arith.constant 0 : index
    %c0_102 = arith.constant 0 : index
    %c0_103 = arith.constant 0 : index
    %c0_104 = arith.constant 0 : index
    %224 = vector.load %arg15[%c0_101, %c0_102, %c0_103, %c0_104] : memref<1x2x1x32xf32, #tpu.memory_space<vmem>>, vector<1x1x1x32xf32>
    %225 = vector.shape_cast %224 : vector<1x1x1x32xf32> to vector<1x32xf32>
    %226 = vector.broadcast %225 : vector<1x32xf32> to vector<16x32xf32>
    %227 = arith.addf %223, %226 : vector<16x32xf32>
    %c0_105 = arith.constant 0 : index
    %c1 = arith.constant 1 : index
    %c0_106 = arith.constant 0 : index
    %c0_107 = arith.constant 0 : index
    %228 = vector.load %arg4[%c0_105, %c1, %c0_106, %c0_107] : memref<1x2x1x32xf32, #tpu.memory_space<vmem>>, vector<1x1x1x32xf32>
    %229 = vector.shape_cast %228 : vector<1x1x1x32xf32> to vector<1x32xf32>
    %c0_108 = arith.constant 0 : index
    %c1_109 = arith.constant 1 : index
    %c0_110 = arith.constant 0 : index
    %c0_111 = arith.constant 0 : index
    %230 = vector.load %arg5[%c0_108, %c1_109, %c0_110, %c0_111] : memref<1x2x1x32xf32, #tpu.memory_space<vmem>>, vector<1x1x1x32xf32>
    %231 = vector.shape_cast %230 : vector<1x1x1x32xf32> to vector<1x32xf32>
    %cst_112 = arith.constant dense<0.000000e+00> : vector<16xf32>
    %232 = vector.multi_reduction <add>, %227, %cst_112 [1] : vector<16x32xf32> to vector<16xf32>
    %233 = vector.shape_cast %232 : vector<16xf32> to vector<16x1xf32>
    %cst_113 = arith.constant 3.200000e+01 : f32
    %234 = vector.broadcast %cst_113 : f32 to vector<16x1xf32>
    %235 = arith.divf %233, %234 : vector<16x1xf32>
    %236 = vector.broadcast %235 : vector<16x1xf32> to vector<16x32xf32>
    %237 = arith.subf %227, %236 : vector<16x32xf32>
    %238 = arith.mulf %237, %237 : vector<16x32xf32>
    %cst_114 = arith.constant dense<0.000000e+00> : vector<16xf32>
    %239 = vector.multi_reduction <add>, %238, %cst_114 [1] : vector<16x32xf32> to vector<16xf32>
    %240 = vector.shape_cast %239 : vector<16xf32> to vector<16x1xf32>
    %cst_115 = arith.constant 3.200000e+01 : f32
    %241 = vector.broadcast %cst_115 : f32 to vector<16x1xf32>
    %242 = arith.divf %240, %241 : vector<16x1xf32>
    %243 = vector.broadcast %235 : vector<16x1xf32> to vector<16x32xf32>
    %244 = arith.subf %227, %243 : vector<16x32xf32>
    %cst_116 = arith.constant 9.99999997E-7 : f32
    %245 = vector.broadcast %cst_116 : f32 to vector<16x1xf32>
    %246 = arith.addf %242, %245 : vector<16x1xf32>
    %247 = math.rsqrt %246 : vector<16x1xf32>
    %248 = vector.broadcast %247 : vector<16x1xf32> to vector<16x32xf32>
    %249 = arith.mulf %244, %248 : vector<16x32xf32>
    %250 = vector.broadcast %229 : vector<1x32xf32> to vector<16x32xf32>
    %251 = arith.mulf %249, %250 : vector<16x32xf32>
    %252 = vector.broadcast %231 : vector<1x32xf32> to vector<16x32xf32>
    %253 = arith.addf %251, %252 : vector<16x32xf32>
    %c0_117 = arith.constant 0 : index
    %c1_118 = arith.constant 1 : index
    %c0_119 = arith.constant 0 : index
    %c0_120 = arith.constant 0 : index
    %254 = vector.load %arg6[%c0_117, %c1_118, %c0_119, %c0_120] : memref<1x2x32x96xf32, #tpu.memory_space<vmem>>, vector<1x1x32x96xf32>
    %255 = vector.shape_cast %254 : vector<1x1x32x96xf32> to vector<32x96xf32>
    %cst_121 = arith.constant dense<0.000000e+00> : vector<16x96xf32>
    %256 = tpu.matmul %253, %255, %cst_121 {dimension_numbers = #tpu.dot_dimension_numbers<[1], [0], [0], [1], [0, 0, 1, 1], [], []>} : vector<16x32xf32>, vector<32x96xf32>, vector<16x96xf32> -> vector<16x96xf32>
    %c0_122 = arith.constant 0 : index
    %c1_123 = arith.constant 1 : index
    %c0_124 = arith.constant 0 : index
    %c0_125 = arith.constant 0 : index
    %257 = vector.load %arg7[%c0_122, %c1_123, %c0_124, %c0_125] : memref<1x2x1x96xf32, #tpu.memory_space<vmem>>, vector<1x1x1x96xf32>
    %258 = vector.shape_cast %257 : vector<1x1x1x96xf32> to vector<1x96xf32>
    %259 = vector.broadcast %258 : vector<1x96xf32> to vector<16x96xf32>
    %260 = arith.addf %256, %259 : vector<16x96xf32>
    %261 = vector.extract_strided_slice %260 {offsets = [0, 0], sizes = [16, 32], strides = [1, 1]} : vector<16x96xf32> to vector<16x32xf32>
    %262 = vector.extract_strided_slice %260 {offsets = [0, 32], sizes = [16, 32], strides = [1, 1]} : vector<16x96xf32> to vector<16x32xf32>
    %263 = vector.extract_strided_slice %260 {offsets = [0, 64], sizes = [16, 32], strides = [1, 1]} : vector<16x96xf32> to vector<16x32xf32>
    %264 = vector.extract_strided_slice %261 {offsets = [0, 0], sizes = [8, 8], strides = [1, 1]} : vector<16x32xf32> to vector<8x8xf32>
    %265 = vector.extract_strided_slice %262 {offsets = [0, 0], sizes = [8, 8], strides = [1, 1]} : vector<16x32xf32> to vector<8x8xf32>
    %266 = vector.extract_strided_slice %263 {offsets = [0, 0], sizes = [8, 8], strides = [1, 1]} : vector<16x32xf32> to vector<8x8xf32>
    %cst_126 = arith.constant dense<0.000000e+00> : vector<8x8xf32>
    %267 = tpu.matmul %264, %265, %cst_126 {dimension_numbers = #tpu.dot_dimension_numbers<[1], [1], [0], [0], [0, 0, 1, 0], [], []>} : vector<8x8xf32>, vector<8x8xf32>, vector<8x8xf32> -> vector<8x8xf32>
    %cst_127 = arith.constant dense<0xFF800000> : vector<8xf32>
    %268 = vector.multi_reduction <maximumf>, %267, %cst_127 [1] : vector<8x8xf32> to vector<8xf32>
    %269 = vector.shape_cast %268 : vector<8xf32> to vector<8x1xf32>
    %270 = vector.broadcast %269 : vector<8x1xf32> to vector<8x8xf32>
    %271 = arith.subf %267, %270 : vector<8x8xf32>
    %272 = math.exp %271 : vector<8x8xf32>
    %cst_128 = arith.constant dense<0.000000e+00> : vector<8xf32>
    %273 = vector.multi_reduction <add>, %272, %cst_128 [1] : vector<8x8xf32> to vector<8xf32>
    %274 = vector.shape_cast %273 : vector<8xf32> to vector<8x1xf32>
    %275 = tpu.reciprocal %274 {approx = true} : vector<8x1xf32> -> vector<8x1xf32>
    %276 = vector.broadcast %275 : vector<8x1xf32> to vector<8x8xf32>
    %277 = arith.mulf %272, %276 : vector<8x8xf32>
    %cst_129 = arith.constant dense<0.000000e+00> : vector<8x8xf32>
    %278 = tpu.matmul %277, %266, %cst_129 {dimension_numbers = #tpu.dot_dimension_numbers<[1], [0], [0], [1], [0, 0, 1, 1], [], []>} : vector<8x8xf32>, vector<8x8xf32>, vector<8x8xf32> -> vector<8x8xf32>
    %279 = vector.extract_strided_slice %261 {offsets = [0, 8], sizes = [8, 8], strides = [1, 1]} : vector<16x32xf32> to vector<8x8xf32>
    %280 = vector.extract_strided_slice %262 {offsets = [0, 8], sizes = [8, 8], strides = [1, 1]} : vector<16x32xf32> to vector<8x8xf32>
    %281 = vector.extract_strided_slice %263 {offsets = [0, 8], sizes = [8, 8], strides = [1, 1]} : vector<16x32xf32> to vector<8x8xf32>
    %cst_130 = arith.constant dense<0.000000e+00> : vector<8x8xf32>
    %282 = tpu.matmul %279, %280, %cst_130 {dimension_numbers = #tpu.dot_dimension_numbers<[1], [1], [0], [0], [0, 0, 1, 0], [], []>} : vector<8x8xf32>, vector<8x8xf32>, vector<8x8xf32> -> vector<8x8xf32>
    %cst_131 = arith.constant dense<0xFF800000> : vector<8xf32>
    %283 = vector.multi_reduction <maximumf>, %282, %cst_131 [1] : vector<8x8xf32> to vector<8xf32>
    %284 = vector.shape_cast %283 : vector<8xf32> to vector<8x1xf32>
    %285 = vector.broadcast %284 : vector<8x1xf32> to vector<8x8xf32>
    %286 = arith.subf %282, %285 : vector<8x8xf32>
    %287 = math.exp %286 : vector<8x8xf32>
    %cst_132 = arith.constant dense<0.000000e+00> : vector<8xf32>
    %288 = vector.multi_reduction <add>, %287, %cst_132 [1] : vector<8x8xf32> to vector<8xf32>
    %289 = vector.shape_cast %288 : vector<8xf32> to vector<8x1xf32>
    %290 = tpu.reciprocal %289 {approx = true} : vector<8x1xf32> -> vector<8x1xf32>
    %291 = vector.broadcast %290 : vector<8x1xf32> to vector<8x8xf32>
    %292 = arith.mulf %287, %291 : vector<8x8xf32>
    %cst_133 = arith.constant dense<0.000000e+00> : vector<8x8xf32>
    %293 = tpu.matmul %292, %281, %cst_133 {dimension_numbers = #tpu.dot_dimension_numbers<[1], [0], [0], [1], [0, 0, 1, 1], [], []>} : vector<8x8xf32>, vector<8x8xf32>, vector<8x8xf32> -> vector<8x8xf32>
    %294 = vector.extract_strided_slice %261 {offsets = [0, 16], sizes = [8, 8], strides = [1, 1]} : vector<16x32xf32> to vector<8x8xf32>
    %295 = vector.extract_strided_slice %262 {offsets = [0, 16], sizes = [8, 8], strides = [1, 1]} : vector<16x32xf32> to vector<8x8xf32>
    %296 = vector.extract_strided_slice %263 {offsets = [0, 16], sizes = [8, 8], strides = [1, 1]} : vector<16x32xf32> to vector<8x8xf32>
    %cst_134 = arith.constant dense<0.000000e+00> : vector<8x8xf32>
    %297 = tpu.matmul %294, %295, %cst_134 {dimension_numbers = #tpu.dot_dimension_numbers<[1], [1], [0], [0], [0, 0, 1, 0], [], []>} : vector<8x8xf32>, vector<8x8xf32>, vector<8x8xf32> -> vector<8x8xf32>
    %cst_135 = arith.constant dense<0xFF800000> : vector<8xf32>
    %298 = vector.multi_reduction <maximumf>, %297, %cst_135 [1] : vector<8x8xf32> to vector<8xf32>
    %299 = vector.shape_cast %298 : vector<8xf32> to vector<8x1xf32>
    %300 = vector.broadcast %299 : vector<8x1xf32> to vector<8x8xf32>
    %301 = arith.subf %297, %300 : vector<8x8xf32>
    %302 = math.exp %301 : vector<8x8xf32>
    %cst_136 = arith.constant dense<0.000000e+00> : vector<8xf32>
    %303 = vector.multi_reduction <add>, %302, %cst_136 [1] : vector<8x8xf32> to vector<8xf32>
    %304 = vector.shape_cast %303 : vector<8xf32> to vector<8x1xf32>
    %305 = tpu.reciprocal %304 {approx = true} : vector<8x1xf32> -> vector<8x1xf32>
    %306 = vector.broadcast %305 : vector<8x1xf32> to vector<8x8xf32>
    %307 = arith.mulf %302, %306 : vector<8x8xf32>
    %cst_137 = arith.constant dense<0.000000e+00> : vector<8x8xf32>
    %308 = tpu.matmul %307, %296, %cst_137 {dimension_numbers = #tpu.dot_dimension_numbers<[1], [0], [0], [1], [0, 0, 1, 1], [], []>} : vector<8x8xf32>, vector<8x8xf32>, vector<8x8xf32> -> vector<8x8xf32>
    %309 = vector.extract_strided_slice %261 {offsets = [0, 24], sizes = [8, 8], strides = [1, 1]} : vector<16x32xf32> to vector<8x8xf32>
    %310 = vector.extract_strided_slice %262 {offsets = [0, 24], sizes = [8, 8], strides = [1, 1]} : vector<16x32xf32> to vector<8x8xf32>
    %311 = vector.extract_strided_slice %263 {offsets = [0, 24], sizes = [8, 8], strides = [1, 1]} : vector<16x32xf32> to vector<8x8xf32>
    %cst_138 = arith.constant dense<0.000000e+00> : vector<8x8xf32>
    %312 = tpu.matmul %309, %310, %cst_138 {dimension_numbers = #tpu.dot_dimension_numbers<[1], [1], [0], [0], [0, 0, 1, 0], [], []>} : vector<8x8xf32>, vector<8x8xf32>, vector<8x8xf32> -> vector<8x8xf32>
    %cst_139 = arith.constant dense<0xFF800000> : vector<8xf32>
    %313 = vector.multi_reduction <maximumf>, %312, %cst_139 [1] : vector<8x8xf32> to vector<8xf32>
    %314 = vector.shape_cast %313 : vector<8xf32> to vector<8x1xf32>
    %315 = vector.broadcast %314 : vector<8x1xf32> to vector<8x8xf32>
    %316 = arith.subf %312, %315 : vector<8x8xf32>
    %317 = math.exp %316 : vector<8x8xf32>
    %cst_140 = arith.constant dense<0.000000e+00> : vector<8xf32>
    %318 = vector.multi_reduction <add>, %317, %cst_140 [1] : vector<8x8xf32> to vector<8xf32>
    %319 = vector.shape_cast %318 : vector<8xf32> to vector<8x1xf32>
    %320 = tpu.reciprocal %319 {approx = true} : vector<8x1xf32> -> vector<8x1xf32>
    %321 = vector.broadcast %320 : vector<8x1xf32> to vector<8x8xf32>
    %322 = arith.mulf %317, %321 : vector<8x8xf32>
    %cst_141 = arith.constant dense<0.000000e+00> : vector<8x8xf32>
    %323 = tpu.matmul %322, %311, %cst_141 {dimension_numbers = #tpu.dot_dimension_numbers<[1], [0], [0], [1], [0, 0, 1, 1], [], []>} : vector<8x8xf32>, vector<8x8xf32>, vector<8x8xf32> -> vector<8x8xf32>
    %324 = tpu.concatenate %278, %293, %308, %323 in 1 : vector<8x8xf32>, vector<8x8xf32>, vector<8x8xf32>, vector<8x8xf32> -> vector<8x32xf32>
    %325 = vector.extract_strided_slice %261 {offsets = [8, 0], sizes = [8, 8], strides = [1, 1]} : vector<16x32xf32> to vector<8x8xf32>
    %326 = vector.extract_strided_slice %262 {offsets = [8, 0], sizes = [8, 8], strides = [1, 1]} : vector<16x32xf32> to vector<8x8xf32>
    %327 = vector.extract_strided_slice %263 {offsets = [8, 0], sizes = [8, 8], strides = [1, 1]} : vector<16x32xf32> to vector<8x8xf32>
    %cst_142 = arith.constant dense<0.000000e+00> : vector<8x8xf32>
    %328 = tpu.matmul %325, %326, %cst_142 {dimension_numbers = #tpu.dot_dimension_numbers<[1], [1], [0], [0], [0, 0, 1, 0], [], []>} : vector<8x8xf32>, vector<8x8xf32>, vector<8x8xf32> -> vector<8x8xf32>
    %cst_143 = arith.constant dense<0xFF800000> : vector<8xf32>
    %329 = vector.multi_reduction <maximumf>, %328, %cst_143 [1] : vector<8x8xf32> to vector<8xf32>
    %330 = vector.shape_cast %329 : vector<8xf32> to vector<8x1xf32>
    %331 = vector.broadcast %330 : vector<8x1xf32> to vector<8x8xf32>
    %332 = arith.subf %328, %331 : vector<8x8xf32>
    %333 = math.exp %332 : vector<8x8xf32>
    %cst_144 = arith.constant dense<0.000000e+00> : vector<8xf32>
    %334 = vector.multi_reduction <add>, %333, %cst_144 [1] : vector<8x8xf32> to vector<8xf32>
    %335 = vector.shape_cast %334 : vector<8xf32> to vector<8x1xf32>
    %336 = tpu.reciprocal %335 {approx = true} : vector<8x1xf32> -> vector<8x1xf32>
    %337 = vector.broadcast %336 : vector<8x1xf32> to vector<8x8xf32>
    %338 = arith.mulf %333, %337 : vector<8x8xf32>
    %cst_145 = arith.constant dense<0.000000e+00> : vector<8x8xf32>
    %339 = tpu.matmul %338, %327, %cst_145 {dimension_numbers = #tpu.dot_dimension_numbers<[1], [0], [0], [1], [0, 0, 1, 1], [], []>} : vector<8x8xf32>, vector<8x8xf32>, vector<8x8xf32> -> vector<8x8xf32>
    %340 = vector.extract_strided_slice %261 {offsets = [8, 8], sizes = [8, 8], strides = [1, 1]} : vector<16x32xf32> to vector<8x8xf32>
    %341 = vector.extract_strided_slice %262 {offsets = [8, 8], sizes = [8, 8], strides = [1, 1]} : vector<16x32xf32> to vector<8x8xf32>
    %342 = vector.extract_strided_slice %263 {offsets = [8, 8], sizes = [8, 8], strides = [1, 1]} : vector<16x32xf32> to vector<8x8xf32>
    %cst_146 = arith.constant dense<0.000000e+00> : vector<8x8xf32>
    %343 = tpu.matmul %340, %341, %cst_146 {dimension_numbers = #tpu.dot_dimension_numbers<[1], [1], [0], [0], [0, 0, 1, 0], [], []>} : vector<8x8xf32>, vector<8x8xf32>, vector<8x8xf32> -> vector<8x8xf32>
    %cst_147 = arith.constant dense<0xFF800000> : vector<8xf32>
    %344 = vector.multi_reduction <maximumf>, %343, %cst_147 [1] : vector<8x8xf32> to vector<8xf32>
    %345 = vector.shape_cast %344 : vector<8xf32> to vector<8x1xf32>
    %346 = vector.broadcast %345 : vector<8x1xf32> to vector<8x8xf32>
    %347 = arith.subf %343, %346 : vector<8x8xf32>
    %348 = math.exp %347 : vector<8x8xf32>
    %cst_148 = arith.constant dense<0.000000e+00> : vector<8xf32>
    %349 = vector.multi_reduction <add>, %348, %cst_148 [1] : vector<8x8xf32> to vector<8xf32>
    %350 = vector.shape_cast %349 : vector<8xf32> to vector<8x1xf32>
    %351 = tpu.reciprocal %350 {approx = true} : vector<8x1xf32> -> vector<8x1xf32>
    %352 = vector.broadcast %351 : vector<8x1xf32> to vector<8x8xf32>
    %353 = arith.mulf %348, %352 : vector<8x8xf32>
    %cst_149 = arith.constant dense<0.000000e+00> : vector<8x8xf32>
    %354 = tpu.matmul %353, %342, %cst_149 {dimension_numbers = #tpu.dot_dimension_numbers<[1], [0], [0], [1], [0, 0, 1, 1], [], []>} : vector<8x8xf32>, vector<8x8xf32>, vector<8x8xf32> -> vector<8x8xf32>
    %355 = vector.extract_strided_slice %261 {offsets = [8, 16], sizes = [8, 8], strides = [1, 1]} : vector<16x32xf32> to vector<8x8xf32>
    %356 = vector.extract_strided_slice %262 {offsets = [8, 16], sizes = [8, 8], strides = [1, 1]} : vector<16x32xf32> to vector<8x8xf32>
    %357 = vector.extract_strided_slice %263 {offsets = [8, 16], sizes = [8, 8], strides = [1, 1]} : vector<16x32xf32> to vector<8x8xf32>
    %cst_150 = arith.constant dense<0.000000e+00> : vector<8x8xf32>
    %358 = tpu.matmul %355, %356, %cst_150 {dimension_numbers = #tpu.dot_dimension_numbers<[1], [1], [0], [0], [0, 0, 1, 0], [], []>} : vector<8x8xf32>, vector<8x8xf32>, vector<8x8xf32> -> vector<8x8xf32>
    %cst_151 = arith.constant dense<0xFF800000> : vector<8xf32>
    %359 = vector.multi_reduction <maximumf>, %358, %cst_151 [1] : vector<8x8xf32> to vector<8xf32>
    %360 = vector.shape_cast %359 : vector<8xf32> to vector<8x1xf32>
    %361 = vector.broadcast %360 : vector<8x1xf32> to vector<8x8xf32>
    %362 = arith.subf %358, %361 : vector<8x8xf32>
    %363 = math.exp %362 : vector<8x8xf32>
    %cst_152 = arith.constant dense<0.000000e+00> : vector<8xf32>
    %364 = vector.multi_reduction <add>, %363, %cst_152 [1] : vector<8x8xf32> to vector<8xf32>
    %365 = vector.shape_cast %364 : vector<8xf32> to vector<8x1xf32>
    %366 = tpu.reciprocal %365 {approx = true} : vector<8x1xf32> -> vector<8x1xf32>
    %367 = vector.broadcast %366 : vector<8x1xf32> to vector<8x8xf32>
    %368 = arith.mulf %363, %367 : vector<8x8xf32>
    %cst_153 = arith.constant dense<0.000000e+00> : vector<8x8xf32>
    %369 = tpu.matmul %368, %357, %cst_153 {dimension_numbers = #tpu.dot_dimension_numbers<[1], [0], [0], [1], [0, 0, 1, 1], [], []>} : vector<8x8xf32>, vector<8x8xf32>, vector<8x8xf32> -> vector<8x8xf32>
    %370 = vector.extract_strided_slice %261 {offsets = [8, 24], sizes = [8, 8], strides = [1, 1]} : vector<16x32xf32> to vector<8x8xf32>
    %371 = vector.extract_strided_slice %262 {offsets = [8, 24], sizes = [8, 8], strides = [1, 1]} : vector<16x32xf32> to vector<8x8xf32>
    %372 = vector.extract_strided_slice %263 {offsets = [8, 24], sizes = [8, 8], strides = [1, 1]} : vector<16x32xf32> to vector<8x8xf32>
    %cst_154 = arith.constant dense<0.000000e+00> : vector<8x8xf32>
    %373 = tpu.matmul %370, %371, %cst_154 {dimension_numbers = #tpu.dot_dimension_numbers<[1], [1], [0], [0], [0, 0, 1, 0], [], []>} : vector<8x8xf32>, vector<8x8xf32>, vector<8x8xf32> -> vector<8x8xf32>
    %cst_155 = arith.constant dense<0xFF800000> : vector<8xf32>
    %374 = vector.multi_reduction <maximumf>, %373, %cst_155 [1] : vector<8x8xf32> to vector<8xf32>
    %375 = vector.shape_cast %374 : vector<8xf32> to vector<8x1xf32>
    %376 = vector.broadcast %375 : vector<8x1xf32> to vector<8x8xf32>
    %377 = arith.subf %373, %376 : vector<8x8xf32>
    %378 = math.exp %377 : vector<8x8xf32>
    %cst_156 = arith.constant dense<0.000000e+00> : vector<8xf32>
    %379 = vector.multi_reduction <add>, %378, %cst_156 [1] : vector<8x8xf32> to vector<8xf32>
    %380 = vector.shape_cast %379 : vector<8xf32> to vector<8x1xf32>
    %381 = tpu.reciprocal %380 {approx = true} : vector<8x1xf32> -> vector<8x1xf32>
    %382 = vector.broadcast %381 : vector<8x1xf32> to vector<8x8xf32>
    %383 = arith.mulf %378, %382 : vector<8x8xf32>
    %cst_157 = arith.constant dense<0.000000e+00> : vector<8x8xf32>
    %384 = tpu.matmul %383, %372, %cst_157 {dimension_numbers = #tpu.dot_dimension_numbers<[1], [0], [0], [1], [0, 0, 1, 1], [], []>} : vector<8x8xf32>, vector<8x8xf32>, vector<8x8xf32> -> vector<8x8xf32>
    %385 = tpu.concatenate %339, %354, %369, %384 in 1 : vector<8x8xf32>, vector<8x8xf32>, vector<8x8xf32>, vector<8x8xf32> -> vector<8x32xf32>
    %386 = tpu.concatenate %324, %385 in 0 : vector<8x32xf32>, vector<8x32xf32> -> vector<16x32xf32>
    %c0_158 = arith.constant 0 : index
    %c1_159 = arith.constant 1 : index
    %c0_160 = arith.constant 0 : index
    %c0_161 = arith.constant 0 : index
    %387 = vector.load %arg8[%c0_158, %c1_159, %c0_160, %c0_161] : memref<1x2x32x32xf32, #tpu.memory_space<vmem>>, vector<1x1x32x32xf32>
    %388 = vector.shape_cast %387 : vector<1x1x32x32xf32> to vector<32x32xf32>
    %cst_162 = arith.constant dense<0.000000e+00> : vector<16x32xf32>
    %389 = tpu.matmul %386, %388, %cst_162 {dimension_numbers = #tpu.dot_dimension_numbers<[1], [0], [0], [1], [0, 0, 1, 1], [], []>} : vector<16x32xf32>, vector<32x32xf32>, vector<16x32xf32> -> vector<16x32xf32>
    %390 = arith.addf %227, %389 : vector<16x32xf32>
    %c0_163 = arith.constant 0 : index
    %c1_164 = arith.constant 1 : index
    %c0_165 = arith.constant 0 : index
    %c0_166 = arith.constant 0 : index
    %391 = vector.load %arg9[%c0_163, %c1_164, %c0_165, %c0_166] : memref<1x2x1x32xf32, #tpu.memory_space<vmem>>, vector<1x1x1x32xf32>
    %392 = vector.shape_cast %391 : vector<1x1x1x32xf32> to vector<1x32xf32>
    %393 = vector.broadcast %392 : vector<1x32xf32> to vector<16x32xf32>
    %394 = arith.addf %390, %393 : vector<16x32xf32>
    %c0_167 = arith.constant 0 : index
    %c1_168 = arith.constant 1 : index
    %c0_169 = arith.constant 0 : index
    %c0_170 = arith.constant 0 : index
    %395 = vector.load %arg10[%c0_167, %c1_168, %c0_169, %c0_170] : memref<1x2x1x32xf32, #tpu.memory_space<vmem>>, vector<1x1x1x32xf32>
    %396 = vector.shape_cast %395 : vector<1x1x1x32xf32> to vector<1x32xf32>
    %c0_171 = arith.constant 0 : index
    %c1_172 = arith.constant 1 : index
    %c0_173 = arith.constant 0 : index
    %c0_174 = arith.constant 0 : index
    %397 = vector.load %arg11[%c0_171, %c1_172, %c0_173, %c0_174] : memref<1x2x1x32xf32, #tpu.memory_space<vmem>>, vector<1x1x1x32xf32>
    %398 = vector.shape_cast %397 : vector<1x1x1x32xf32> to vector<1x32xf32>
    %cst_175 = arith.constant dense<0.000000e+00> : vector<16xf32>
    %399 = vector.multi_reduction <add>, %394, %cst_175 [1] : vector<16x32xf32> to vector<16xf32>
    %400 = vector.shape_cast %399 : vector<16xf32> to vector<16x1xf32>
    %cst_176 = arith.constant 3.200000e+01 : f32
    %401 = vector.broadcast %cst_176 : f32 to vector<16x1xf32>
    %402 = arith.divf %400, %401 : vector<16x1xf32>
    %403 = vector.broadcast %402 : vector<16x1xf32> to vector<16x32xf32>
    %404 = arith.subf %394, %403 : vector<16x32xf32>
    %405 = arith.mulf %404, %404 : vector<16x32xf32>
    %cst_177 = arith.constant dense<0.000000e+00> : vector<16xf32>
    %406 = vector.multi_reduction <add>, %405, %cst_177 [1] : vector<16x32xf32> to vector<16xf32>
    %407 = vector.shape_cast %406 : vector<16xf32> to vector<16x1xf32>
    %cst_178 = arith.constant 3.200000e+01 : f32
    %408 = vector.broadcast %cst_178 : f32 to vector<16x1xf32>
    %409 = arith.divf %407, %408 : vector<16x1xf32>
    %410 = vector.broadcast %402 : vector<16x1xf32> to vector<16x32xf32>
    %411 = arith.subf %394, %410 : vector<16x32xf32>
    %cst_179 = arith.constant 9.99999997E-7 : f32
    %412 = vector.broadcast %cst_179 : f32 to vector<16x1xf32>
    %413 = arith.addf %409, %412 : vector<16x1xf32>
    %414 = math.rsqrt %413 : vector<16x1xf32>
    %415 = vector.broadcast %414 : vector<16x1xf32> to vector<16x32xf32>
    %416 = arith.mulf %411, %415 : vector<16x32xf32>
    %417 = vector.broadcast %396 : vector<1x32xf32> to vector<16x32xf32>
    %418 = arith.mulf %416, %417 : vector<16x32xf32>
    %419 = vector.broadcast %398 : vector<1x32xf32> to vector<16x32xf32>
    %420 = arith.addf %418, %419 : vector<16x32xf32>
    %c0_180 = arith.constant 0 : index
    %c1_181 = arith.constant 1 : index
    %c0_182 = arith.constant 0 : index
    %c0_183 = arith.constant 0 : index
    %421 = vector.load %arg12[%c0_180, %c1_181, %c0_182, %c0_183] : memref<1x2x32x64xf32, #tpu.memory_space<vmem>>, vector<1x1x32x64xf32>
    %422 = vector.shape_cast %421 : vector<1x1x32x64xf32> to vector<32x64xf32>
    %cst_184 = arith.constant dense<0.000000e+00> : vector<16x64xf32>
    %423 = tpu.matmul %420, %422, %cst_184 {dimension_numbers = #tpu.dot_dimension_numbers<[1], [0], [0], [1], [0, 0, 1, 1], [], []>} : vector<16x32xf32>, vector<32x64xf32>, vector<16x64xf32> -> vector<16x64xf32>
    %c0_185 = arith.constant 0 : index
    %c1_186 = arith.constant 1 : index
    %c0_187 = arith.constant 0 : index
    %c0_188 = arith.constant 0 : index
    %424 = vector.load %arg13[%c0_185, %c1_186, %c0_187, %c0_188] : memref<1x2x1x64xf32, #tpu.memory_space<vmem>>, vector<1x1x1x64xf32>
    %425 = vector.shape_cast %424 : vector<1x1x1x64xf32> to vector<1x64xf32>
    %426 = vector.broadcast %425 : vector<1x64xf32> to vector<16x64xf32>
    %427 = arith.addf %423, %426 : vector<16x64xf32>
    %428 = arith.mulf %427, %427 : vector<16x64xf32>
    %429 = arith.mulf %427, %428 : vector<16x64xf32>
    %cst_189 = arith.constant 4.471500e-02 : f32
    %430 = vector.broadcast %cst_189 : f32 to vector<16x64xf32>
    %431 = arith.mulf %430, %429 : vector<16x64xf32>
    %432 = arith.addf %427, %431 : vector<16x64xf32>
    %cst_190 = arith.constant 0.797884583 : f32
    %433 = vector.broadcast %cst_190 : f32 to vector<16x64xf32>
    %434 = arith.mulf %433, %432 : vector<16x64xf32>
    %435 = math.tanh %434 : vector<16x64xf32>
    %cst_191 = arith.constant 1.000000e+00 : f32
    %436 = vector.broadcast %cst_191 : f32 to vector<16x64xf32>
    %437 = arith.addf %436, %435 : vector<16x64xf32>
    %cst_192 = arith.constant 5.000000e-01 : f32
    %438 = vector.broadcast %cst_192 : f32 to vector<16x64xf32>
    %439 = arith.mulf %438, %437 : vector<16x64xf32>
    %440 = arith.mulf %427, %439 : vector<16x64xf32>
    %c0_193 = arith.constant 0 : index
    %c1_194 = arith.constant 1 : index
    %c0_195 = arith.constant 0 : index
    %c0_196 = arith.constant 0 : index
    %441 = vector.load %arg14[%c0_193, %c1_194, %c0_195, %c0_196] : memref<1x2x64x32xf32, #tpu.memory_space<vmem>>, vector<1x1x64x32xf32>
    %442 = vector.shape_cast %441 : vector<1x1x64x32xf32> to vector<64x32xf32>
    %cst_197 = arith.constant dense<0.000000e+00> : vector<16x32xf32>
    %443 = tpu.matmul %440, %442, %cst_197 {dimension_numbers = #tpu.dot_dimension_numbers<[1], [0], [0], [1], [0, 0, 1, 1], [], []>} : vector<16x64xf32>, vector<64x32xf32>, vector<16x32xf32> -> vector<16x32xf32>
    %444 = arith.addf %394, %443 : vector<16x32xf32>
    %c0_198 = arith.constant 0 : index
    %c1_199 = arith.constant 1 : index
    %c0_200 = arith.constant 0 : index
    %c0_201 = arith.constant 0 : index
    %445 = vector.load %arg15[%c0_198, %c1_199, %c0_200, %c0_201] : memref<1x2x1x32xf32, #tpu.memory_space<vmem>>, vector<1x1x1x32xf32>
    %446 = vector.shape_cast %445 : vector<1x1x1x32xf32> to vector<1x32xf32>
    %447 = vector.broadcast %446 : vector<1x32xf32> to vector<16x32xf32>
    %448 = arith.addf %444, %447 : vector<16x32xf32>
    %449 = vector.extract_strided_slice %448 {offsets = [0, 0], sizes = [8, 32], strides = [1, 1]} : vector<16x32xf32> to vector<8x32xf32>
    %cst_202 = arith.constant dense<0.000000e+00> : vector<32xf32>
    %450 = vector.multi_reduction <add>, %449, %cst_202 [0] : vector<8x32xf32> to vector<32xf32>
    %451 = vector.shape_cast %450 : vector<32xf32> to vector<1x32xf32>
    %cst_203 = arith.constant 8.000000e+00 : f32
    %452 = vector.broadcast %cst_203 : f32 to vector<1x32xf32>
    %453 = arith.divf %451, %452 : vector<1x32xf32>
    %454 = vector.extract_strided_slice %448 {offsets = [8, 0], sizes = [8, 32], strides = [1, 1]} : vector<16x32xf32> to vector<8x32xf32>
    %cst_204 = arith.constant dense<0.000000e+00> : vector<32xf32>
    %455 = vector.multi_reduction <add>, %454, %cst_204 [0] : vector<8x32xf32> to vector<32xf32>
    %456 = vector.shape_cast %455 : vector<32xf32> to vector<1x32xf32>
    %cst_205 = arith.constant 8.000000e+00 : f32
    %457 = vector.broadcast %cst_205 : f32 to vector<1x32xf32>
    %458 = arith.divf %456, %457 : vector<1x32xf32>
    %459 = tpu.concatenate %453, %458 in 0 : vector<1x32xf32>, vector<1x32xf32> -> vector<2x32xf32>
    %c0_206 = arith.constant 0 : index
    %c0_207 = arith.constant 0 : index
    %c0_208 = arith.constant 0 : index
    %460 = vector.load %arg16[%c0_206, %c0_207, %c0_208] : memref<1x1x32xf32, #tpu.memory_space<vmem>>, vector<1x1x32xf32>
    %461 = vector.shape_cast %460 : vector<1x1x32xf32> to vector<1x32xf32>
    %c0_209 = arith.constant 0 : index
    %c0_210 = arith.constant 0 : index
    %c0_211 = arith.constant 0 : index
    %462 = vector.load %arg17[%c0_209, %c0_210, %c0_211] : memref<1x1x32xf32, #tpu.memory_space<vmem>>, vector<1x1x32xf32>
    %463 = vector.shape_cast %462 : vector<1x1x32xf32> to vector<1x32xf32>
    %cst_212 = arith.constant dense<0.000000e+00> : vector<2xf32>
    %464 = vector.multi_reduction <add>, %459, %cst_212 [1] : vector<2x32xf32> to vector<2xf32>
    %465 = vector.shape_cast %464 : vector<2xf32> to vector<2x1xf32>
    %cst_213 = arith.constant 3.200000e+01 : f32
    %466 = vector.broadcast %cst_213 : f32 to vector<2x1xf32>
    %467 = arith.divf %465, %466 : vector<2x1xf32>
    %468 = vector.broadcast %467 : vector<2x1xf32> to vector<2x32xf32>
    %469 = arith.subf %459, %468 : vector<2x32xf32>
    %470 = arith.mulf %469, %469 : vector<2x32xf32>
    %cst_214 = arith.constant dense<0.000000e+00> : vector<2xf32>
    %471 = vector.multi_reduction <add>, %470, %cst_214 [1] : vector<2x32xf32> to vector<2xf32>
    %472 = vector.shape_cast %471 : vector<2xf32> to vector<2x1xf32>
    %cst_215 = arith.constant 3.200000e+01 : f32
    %473 = vector.broadcast %cst_215 : f32 to vector<2x1xf32>
    %474 = arith.divf %472, %473 : vector<2x1xf32>
    %475 = vector.broadcast %467 : vector<2x1xf32> to vector<2x32xf32>
    %476 = arith.subf %459, %475 : vector<2x32xf32>
    %cst_216 = arith.constant 9.99999997E-7 : f32
    %477 = vector.broadcast %cst_216 : f32 to vector<2x1xf32>
    %478 = arith.addf %474, %477 : vector<2x1xf32>
    %479 = math.rsqrt %478 : vector<2x1xf32>
    %480 = vector.broadcast %479 : vector<2x1xf32> to vector<2x32xf32>
    %481 = arith.mulf %476, %480 : vector<2x32xf32>
    %482 = vector.broadcast %461 : vector<1x32xf32> to vector<2x32xf32>
    %483 = arith.mulf %481, %482 : vector<2x32xf32>
    %484 = vector.broadcast %463 : vector<1x32xf32> to vector<2x32xf32>
    %485 = arith.addf %483, %484 : vector<2x32xf32>
    %c0_217 = arith.constant 0 : index
    %c0_218 = arith.constant 0 : index
    %c0_219 = arith.constant 0 : index
    %486 = vector.load %arg18[%c0_217, %c0_218, %c0_219] : memref<1x32x128xf32, #tpu.memory_space<vmem>>, vector<1x32x128xf32>
    %487 = vector.shape_cast %486 : vector<1x32x128xf32> to vector<32x128xf32>
    %cst_220 = arith.constant dense<0.000000e+00> : vector<2x128xf32>
    %488 = tpu.matmul %485, %487, %cst_220 {dimension_numbers = #tpu.dot_dimension_numbers<[1], [0], [0], [1], [0, 0, 1, 1], [], []>} : vector<2x32xf32>, vector<32x128xf32>, vector<2x128xf32> -> vector<2x128xf32>
    %c0_221 = arith.constant 0 : index
    %c0_222 = arith.constant 0 : index
    %c0_223 = arith.constant 0 : index
    %489 = vector.load %arg19[%c0_221, %c0_222, %c0_223] : memref<1x1x128xf32, #tpu.memory_space<vmem>>, vector<1x1x128xf32>
    %490 = vector.shape_cast %489 : vector<1x1x128xf32> to vector<1x128xf32>
    %491 = vector.broadcast %490 : vector<1x128xf32> to vector<2x128xf32>
    %492 = arith.addf %488, %491 : vector<2x128xf32>
    %c0_224 = arith.constant 0 : index
    %c0_225 = arith.constant 0 : index
    %c0_226 = arith.constant 0 : index
    %493 = vector.load %arg20[%c0_224, %c0_225, %c0_226] : memref<1x2x128xf32, #tpu.memory_space<vmem>>, vector<1x2x128xf32>
    %494 = vector.shape_cast %493 : vector<1x2x128xf32> to vector<2x128xf32>
    %495 = vector.shape_cast %492 : vector<2x128xf32> to vector<1x2x128xf32>
    tpu.vector_store %arg20[%c0_224, %c0_225, %c0_226], %495 {strides = array<i32>} : memref<1x2x128xf32, #tpu.memory_space<vmem>>, vector<1x2x128xf32>,
    return
  }
  func.func @transform_0(%arg0: i32) -> (i32, i32) {
    %c0_i32 = arith.constant 0 : i32
    %c0_i32_0 = arith.constant 0 : i32
    %c0_i32_1 = arith.constant 0 : i32
    return %c0_i32, %c0_i32_0 : i32, i32
  }
  func.func @transform_1(%arg0: i32) -> (i32, i32, i32) {
    %c0_i32 = arith.constant 0 : i32
    %c0_i32_0 = arith.constant 0 : i32
    %c0_i32_1 = arith.constant 0 : i32
    return %arg0, %c0_i32, %c0_i32_0 : i32, i32, i32
  }
  func.func @transform_2(%arg0: i32) -> (i32, i32, i32) {
    %c0_i32 = arith.constant 0 : i32
    %c0_i32_0 = arith.constant 0 : i32
    %c0_i32_1 = arith.constant 0 : i32
    return %arg0, %c0_i32, %c0_i32_0 : i32, i32, i32
  }
  func.func @transform_3(%arg0: i32) -> (i32, i32, i32, i32) {
    %c0_i32 = arith.constant 0 : i32
    %c0_i32_0 = arith.constant 0 : i32
    %c0_i32_1 = arith.constant 0 : i32
    %c0_i32_2 = arith.constant 0 : i32
    return %arg0, %c0_i32, %c0_i32_0, %c0_i32_1 : i32, i32, i32, i32
  }
  func.func @transform_4(%arg0: i32) -> (i32, i32, i32, i32) {
    %c0_i32 = arith.constant 0 : i32
    %c0_i32_0 = arith.constant 0 : i32
    %c0_i32_1 = arith.constant 0 : i32
    %c0_i32_2 = arith.constant 0 : i32
    return %arg0, %c0_i32, %c0_i32_0, %c0_i32_1 : i32, i32, i32, i32
  }
  func.func @transform_5(%arg0: i32) -> (i32, i32, i32, i32) {
    %c0_i32 = arith.constant 0 : i32
    %c0_i32_0 = arith.constant 0 : i32
    %c0_i32_1 = arith.constant 0 : i32
    %c0_i32_2 = arith.constant 0 : i32
    return %arg0, %c0_i32, %c0_i32_0, %c0_i32_1 : i32, i32, i32, i32
  }
  func.func @transform_6(%arg0: i32) -> (i32, i32, i32, i32) {
    %c0_i32 = arith.constant 0 : i32
    %c0_i32_0 = arith.constant 0 : i32
    %c0_i32_1 = arith.constant 0 : i32
    %c0_i32_2 = arith.constant 0 : i32
    return %arg0, %c0_i32, %c0_i32_0, %c0_i32_1 : i32, i32, i32, i32
  }
  func.func @transform_7(%arg0: i32) -> (i32, i32, i32, i32) {
    %c0_i32 = arith.constant 0 : i32
    %c0_i32_0 = arith.constant 0 : i32
    %c0_i32_1 = arith.constant 0 : i32
    %c0_i32_2 = arith.constant 0 : i32
    return %arg0, %c0_i32, %c0_i32_0, %c0_i32_1 : i32, i32, i32, i32
  }
  func.func @transform_8(%arg0: i32) -> (i32, i32, i32, i32) {
    %c0_i32 = arith.constant 0 : i32
    %c0_i32_0 = arith.constant 0 : i32
    %c0_i32_1 = arith.constant 0 : i32
    %c0_i32_2 = arith.constant 0 : i32
    return %arg0, %c0_i32, %c0_i32_0, %c0_i32_1 : i32, i32, i32, i32
  }
  func.func @transform_9(%arg0: i32) -> (i32, i32, i32, i32) {
    %c0_i32 = arith.constant 0 : i32
    %c0_i32_0 = arith.constant 0 : i32
    %c0_i32_1 = arith.constant 0 : i32
    %c0_i32_2 = arith.constant 0 : i32
    return %arg0, %c0_i32, %c0_i32_0, %c0_i32_1 : i32, i32, i32, i32
  }
  func.func @transform_10(%arg0: i32) -> (i32, i32, i32, i32) {
    %c0_i32 = arith.constant 0 : i32
    %c0_i32_0 = arith.constant 0 : i32
    %c0_i32_1 = arith.constant 0 : i32
    %c0_i32_2 = arith.constant 0 : i32
    return %arg0, %c0_i32, %c0_i32_0, %c0_i32_1 : i32, i32, i32, i32
  }
  func.func @transform_11(%arg0: i32) -> (i32, i32, i32, i32) {
    %c0_i32 = arith.constant 0 : i32
    %c0_i32_0 = arith.constant 0 : i32
    %c0_i32_1 = arith.constant 0 : i32
    %c0_i32_2 = arith.constant 0 : i32
    return %arg0, %c0_i32, %c0_i32_0, %c0_i32_1 : i32, i32, i32, i32
  }
  func.func @transform_12(%arg0: i32) -> (i32, i32, i32, i32) {
    %c0_i32 = arith.constant 0 : i32
    %c0_i32_0 = arith.constant 0 : i32
    %c0_i32_1 = arith.constant 0 : i32
    %c0_i32_2 = arith.constant 0 : i32
    return %arg0, %c0_i32, %c0_i32_0, %c0_i32_1 : i32, i32, i32, i32
  }
  func.func @transform_13(%arg0: i32) -> (i32, i32, i32, i32) {
    %c0_i32 = arith.constant 0 : i32
    %c0_i32_0 = arith.constant 0 : i32
    %c0_i32_1 = arith.constant 0 : i32
    %c0_i32_2 = arith.constant 0 : i32
    return %arg0, %c0_i32, %c0_i32_0, %c0_i32_1 : i32, i32, i32, i32
  }
  func.func @transform_14(%arg0: i32) -> (i32, i32, i32, i32) {
    %c0_i32 = arith.constant 0 : i32
    %c0_i32_0 = arith.constant 0 : i32
    %c0_i32_1 = arith.constant 0 : i32
    %c0_i32_2 = arith.constant 0 : i32
    return %arg0, %c0_i32, %c0_i32_0, %c0_i32_1 : i32, i32, i32, i32
  }
  func.func @transform_15(%arg0: i32) -> (i32, i32, i32) {
    %c0_i32 = arith.constant 0 : i32
    %c0_i32_0 = arith.constant 0 : i32
    %c0_i32_1 = arith.constant 0 : i32
    return %arg0, %c0_i32, %c0_i32_0 : i32, i32, i32
  }
  func.func @transform_16(%arg0: i32) -> (i32, i32, i32) {
    %c0_i32 = arith.constant 0 : i32
    %c0_i32_0 = arith.constant 0 : i32
    %c0_i32_1 = arith.constant 0 : i32
    return %arg0, %c0_i32, %c0_i32_0 : i32, i32, i32
  }
  func.func @transform_17(%arg0: i32) -> (i32, i32, i32) {
    %c0_i32 = arith.constant 0 : i32
    %c0_i32_0 = arith.constant 0 : i32
    %c0_i32_1 = arith.constant 0 : i32
    return %arg0, %c0_i32, %c0_i32_0 : i32, i32, i32
  }
  func.func @transform_18(%arg0: i32) -> (i32, i32, i32) {
    %c0_i32 = arith.constant 0 : i32
    %c0_i32_0 = arith.constant 0 : i32
    %c0_i32_1 = arith.constant 0 : i32
    return %arg0, %c0_i32, %c0_i32_0 : i32, i32, i32
  }
  func.func @transform_19(%arg0: i32) -> (i32, i32, i32) {
    %c0_i32 = arith.constant 0 : i32
    %c0_i32_0 = arith.constant 0 : i32
    %c0_i32_1 = arith.constant 0 : i32
    return %arg0, %c0_i32, %c0_i32_0 : i32, i32, i32
  }
}

</mosaic_0001>

<llo_original>
// kernel: verb_noun_forward.1
$region0: #{verb_noun_forward.1}
  #allocation0 [shape = 'u32[]', space=smem, size = 0x4, offset = 0x4, fixed_abs, tag = 'smem constant byte address 0x4 - core index']
  #allocation1 [shape = 'u32[144,128]{1,0:T(1,128)}', space=vmem, size = 0x12000, scoped, tag = 'internal scratch']
  %s0 = inlined_call_operand.vmem [shape: f32[16,384], index: 0, kind: input, shape index: {}]
  %s1 = inlined_call_operand.vmem [shape: f32[2,384,32], index: 1, kind: input, shape index: {}]
  %s2 = inlined_call_operand.vmem [shape: f32[2,16,32], index: 2, kind: input, shape index: {}]
  %s3 = inlined_call_operand.vmem [shape: f32[2,2,1,32], index: 3, kind: input, shape index: {}]
  %s4 = inlined_call_operand.vmem [shape: f32[2,2,1,32], index: 4, kind: input, shape index: {}]
  %s5 = inlined_call_operand.vmem [shape: f32[2,2,32,96], index: 5, kind: input, shape index: {}]
  %s6 = inlined_call_operand.vmem [shape: f32[2,2,1,96], index: 6, kind: input, shape index: {}]
  %s7 = inlined_call_operand.vmem [shape: f32[2,2,32,32], index: 7, kind: input, shape index: {}]
  %s8 = inlined_call_operand.vmem [shape: f32[2,2,1,32], index: 8, kind: input, shape index: {}]
  %s9 = inlined_call_operand.vmem [shape: f32[2,2,1,32], index: 9, kind: input, shape index: {}]
  %s10 = inlined_call_operand.vmem [shape: f32[2,2,1,32], index: 10, kind: input, shape index: {}]
  %s11 = inlined_call_operand.vmem [shape: f32[2,2,32,64], index: 11, kind: input, shape index: {}]
  %s12 = inlined_call_operand.vmem [shape: f32[2,2,1,64], index: 12, kind: input, shape index: {}]
  %s13 = inlined_call_operand.vmem [shape: f32[2,2,64,32], index: 13, kind: input, shape index: {}]
  %s14 = inlined_call_operand.vmem [shape: f32[2,2,1,32], index: 14, kind: input, shape index: {}]
  %s15 = inlined_call_operand.vmem [shape: f32[2,1,32], index: 15, kind: input, shape index: {}]
  %s16 = inlined_call_operand.vmem [shape: f32[2,1,32], index: 16, kind: input, shape index: {}]
  %s17 = inlined_call_operand.vmem [shape: f32[2,32,128], index: 17, kind: input, shape index: {}]
  %s18 = inlined_call_operand.vmem [shape: f32[2,1,128], index: 18, kind: input, shape index: {}]
  %s19 = inlined_call_operand.vmem [shape: f32[2,2,128], index: 19, kind: output, shape index: {}]
  %s20 = sld [smem:[#allocation0]]
  $region109: #{verb_noun_forward.1} parent=0
    _
  %s22 = ssub.s32 1, %s20
  %s23 = scalar_select 0, %s22, %s20
  loop: start=0, step=1, limit=4
  $region2: #{verb_noun_forward.1} parent=0 // loop_pre_header
    _
  $region3: #{verb_noun_forward.1} parent=0 // loop_header
    %s25 = sphi 0, %s29
    %p26 = scmp.ge.s32.totalorder %s25, 4
    %s33 = sphi 0, %s33
    %s35 = sphi 0, %s33
    %s36 = sphi 0, %s35
    %s50 = sphi 0, %s36
    %s56 = sphi 0, %s58
    %s59 = sphi 0, %s56
    %s60 = sphi 0, %s59
    %s76 = sphi 0, %s60
    %s82 = sphi 0, %s84
    %s85 = sphi 0, %s82
    %s86 = sphi 0, %s85
    %s102 = sphi 0, %s86
    %s108 = sphi 0, %s110
    %s111 = sphi 0, %s108
    %s112 = sphi 0, %s111
    %s128 = sphi 0, %s112
    %s134 = sphi 0, %s136
    %s137 = sphi 0, %s134
    %s138 = sphi 0, %s137
    %s154 = sphi 0, %s138
    %s160 = sphi 0, %s162
    %s163 = sphi 0, %s160
    %s164 = sphi 0, %s163
    %s180 = sphi 0, %s164
    %s186 = sphi 0, %s188
    %s189 = sphi 0, %s186
    %s190 = sphi 0, %s189
    %s206 = sphi 0, %s190
    %s212 = sphi 0, %s214
    %s215 = sphi 0, %s212
    %s216 = sphi 0, %s215
    %s232 = sphi 0, %s216
    %s238 = sphi 0, %s240
    %s241 = sphi 0, %s238
    %s242 = sphi 0, %s241
    %s258 = sphi 0, %s242
    %s264 = sphi 0, %s266
    %s267 = sphi 0, %s264
    %s268 = sphi 0, %s267
    %s284 = sphi 0, %s268
    %s290 = sphi 0, %s292
    %s293 = sphi 0, %s290
    %s294 = sphi 0, %s293
    %s310 = sphi 0, %s294
    %s316 = sphi 0, %s318
    %s319 = sphi 0, %s316
    %s320 = sphi 0, %s319
    %s336 = sphi 0, %s320
    %s342 = sphi 0, %s344
    %s345 = sphi 0, %s342
    %s346 = sphi 0, %s345
    %s362 = sphi 0, %s346
    %s368 = sphi 0, %s370
    %s371 = sphi 0, %s368
    %s372 = sphi 0, %s371
    %s388 = sphi 0, %s372
    %s394 = sphi 0, %s396
    %s397 = sphi 0, %s394
    %s398 = sphi 0, %s397
    %s414 = sphi 0, %s398
    %s420 = sphi 0, %s422
    %s423 = sphi 0, %s420
    %s424 = sphi 0, %s423
    %s440 = sphi 0, %s424
    %s446 = sphi 0, %s448
    %s449 = sphi 0, %s446
    %s450 = sphi 0, %s449
    %s466 = sphi 0, %s450
    %s472 = sphi 0, %s474
    %s475 = sphi 0, %s472
    %s476 = sphi 0, %s475
    %s492 = sphi 0, %s476
    %s498 = sphi 0, %s500
    %s501 = sphi 0, %s498
    %s502 = sphi 0, %s501
    %s518 = sphi 0, %s502
    %s524 = sphi 0, %s526
    %s527 = sphi 0, %s524
    %s528 = sphi 0, %s527
    %s544 = sphi 0, %s528
  $region4: #{verb_noun_forward.1} parent=0 // loop_header_branch
    %28 = sbr.rel (%p26) target = $region8
  $region5: #{verb_noun_forward.1} parent=0 // loop_body
    %s30 = ssub.s32 %s25, 1
    %s31 = ssub.s32 %s25, 2
    %s32 = sadd.s32 %s25, 1
    %s34 = sadd.s32 %s33, 1
    %p37 = scmp.eq.s32.totalorder %s25, 1
    %p38 = scmp.ne.s32.totalorder %s33, %s35
    %p39 = scmp.eq.s32.totalorder %s25, 0
    %p40 = por %p38, %p39
    %p41 = scmp.ne.s32.totalorder %s33, %s35
    %p42 = scmp.eq.s32.totalorder %s30, 1
    %p43 = por %p41, %p42
    %p44 = scmp.ne.s32.totalorder %s35, %s36
    %p45 = scmp.eq.s32.totalorder %s30, 0
    %p46 = por %p44, %p45
    %p47 = scmp.ne.s32.totalorder %s35, %s36
    %p48 = scmp.eq.s32.totalorder %s31, 1
    %p49 = por %p47, %p48
    %p51 = scmp.ne.s32.totalorder %s36, %s50
    %p52 = scmp.eq.s32.totalorder %s31, 0
    %p53 = por %p51, %p52
    %s54 = ssub.s32 %s25, %s32
    %p55 = scmp.eq.s32.totalorder %s54, 0
    %s57 = sadd.s32 %s56, 1
    %s58 = scalar_select %p55, %s56, %s57
    %p61 = pneg %p55
    %p62 = scmp.eq.s32.totalorder %s25, 1
    %p63 = por %p61, %p62
    %p64 = scmp.ne.s32.totalorder %s56, %s59
    %p65 = scmp.eq.s32.totalorder %s25, 0
    %p66 = por %p64, %p65
    %p67 = scmp.ne.s32.totalorder %s56, %s59
    %p68 = scmp.eq.s32.totalorder %s30, 1
    %p69 = por %p67, %p68
    %p70 = scmp.ne.s32.totalorder %s59, %s60
    %p71 = scmp.eq.s32.totalorder %s30, 0
    %p72 = por %p70, %p71
    %p73 = scmp.ne.s32.totalorder %s59, %s60
    %p74 = scmp.eq.s32.totalorder %s31, 1
    %p75 = por %p73, %p74
    %p77 = scmp.ne.s32.totalorder %s60, %s76
    %p78 = scmp.eq.s32.totalorder %s31, 0
    %p79 = por %p77, %p78
    %s80 = ssub.s32 %s25, %s32
    %p81 = scmp.eq.s32.totalorder %s80, 0
    %s83 = sadd.s32 %s82, 1
    %s84 = scalar_select %p81, %s82, %s83
    %p87 = pneg %p81
    %p88 = scmp.eq.s32.totalorder %s25, 1
    %p89 = por %p87, %p88
    %p90 = scmp.ne.s32.totalorder %s82, %s85
    %p91 = scmp.eq.s32.totalorder %s25, 0
    %p92 = por %p90, %p91
    %p93 = scmp.ne.s32.totalorder %s82, %s85
    %p94 = scmp.eq.s32.totalorder %s30, 1
    %p95 = por %p93, %p94
    %p96 = scmp.ne.s32.totalorder %s85, %s86
    %p97 = scmp.eq.s32.totalorder %s30, 0
    %p98 = por %p96, %p97
    %p99 = scmp.ne.s32.totalorder %s85, %s86
    %p100 = scmp.eq.s32.totalorder %s31, 1
    %p101 = por %p99, %p100
    %p103 = scmp.ne.s32.totalorder %s86, %s102
    %p104 = scmp.eq.s32.totalorder %s31, 0
    %p105 = por %p103, %p104
    %s106 = ssub.s32 %s25, %s32
    %p107 = scmp.eq.s32.totalorder %s106, 0
    %s109 = sadd.s32 %s108, 1
    %s110 = scalar_select %p107, %s108, %s109
    %p113 = pneg %p107
    %p114 = scmp.eq.s32.totalorder %s25, 1
    %p115 = por %p113, %p114
    %p116 = scmp.ne.s32.totalorder %s108, %s111
    %p117 = scmp.eq.s32.totalorder %s25, 0
    %p118 = por %p116, %p117
    %p119 = scmp.ne.s32.totalorder %s108, %s111
    %p120 = scmp.eq.s32.totalorder %s30, 1
    %p121 = por %p119, %p120
    %p122 = scmp.ne.s32.totalorder %s111, %s112
    %p123 = scmp.eq.s32.totalorder %s30, 0
    %p124 = por %p122, %p123
    %p125 = scmp.ne.s32.totalorder %s111, %s112
    %p126 = scmp.eq.s32.totalorder %s31, 1
    %p127 = por %p125, %p126
    %p129 = scmp.ne.s32.totalorder %s112, %s128
    %p130 = scmp.eq.s32.totalorder %s31, 0
    %p131 = por %p129, %p130
    %s132 = ssub.s32 %s25, %s32
    %p133 = scmp.eq.s32.totalorder %s132, 0
    %s135 = sadd.s32 %s134, 1
    %s136 = scalar_select %p133, %s134, %s135
    %p139 = pneg %p133
    %p140 = scmp.eq.s32.totalorder %s25, 1
    %p141 = por %p139, %p140
    %p142 = scmp.ne.s32.totalorder %s134, %s137
    %p143 = scmp.eq.s32.totalorder %s25, 0
    %p144 = por %p142, %p143
    %p145 = scmp.ne.s32.totalorder %s134, %s137
    %p146 = scmp.eq.s32.totalorder %s30, 1
    %p147 = por %p145, %p146
    %p148 = scmp.ne.s32.totalorder %s137, %s138
    %p149 = scmp.eq.s32.totalorder %s30, 0
    %p150 = por %p148, %p149
    %p151 = scmp.ne.s32.totalorder %s137, %s138
    %p152 = scmp.eq.s32.totalorder %s31, 1
    %p153 = por %p151, %p152
    %p155 = scmp.ne.s32.totalorder %s138, %s154
    %p156 = scmp.eq.s32.totalorder %s31, 0
    %p157 = por %p155, %p156
    %s158 = ssub.s32 %s25, %s32
    %p159 = scmp.eq.s32.totalorder %s158, 0
    %s161 = sadd.s32 %s160, 1
    %s162 = scalar_select %p159, %s160, %s161
    %p165 = pneg %p159
    %p166 = scmp.eq.s32.totalorder %s25, 1
    %p167 = por %p165, %p166
    %p168 = scmp.ne.s32.totalorder %s160, %s163
    %p169 = scmp.eq.s32.totalorder %s25, 0
    %p170 = por %p168, %p169
    %p171 = scmp.ne.s32.totalorder %s160, %s163
    %p172 = scmp.eq.s32.totalorder %s30, 1
    %p173 = por %p171, %p172
    %p174 = scmp.ne.s32.totalorder %s163, %s164
    %p175 = scmp.eq.s32.totalorder %s30, 0
    %p176 = por %p174, %p175
    %p177 = scmp.ne.s32.totalorder %s163, %s164
    %p178 = scmp.eq.s32.totalorder %s31, 1
    %p179 = por %p177, %p178
    %p181 = scmp.ne.s32.totalorder %s164, %s180
    %p182 = scmp.eq.s32.totalorder %s31, 0
    %p183 = por %p181, %p182
    %s184 = ssub.s32 %s25, %s32
    %p185 = scmp.eq.s32.totalorder %s184, 0
    %s187 = sadd.s32 %s186, 1
    %s188 = scalar_select %p185, %s186, %s187
    %p191 = pneg %p185
    %p192 = scmp.eq.s32.totalorder %s25, 1
    %p193 = por %p191, %p192
    %p194 = scmp.ne.s32.totalorder %s186, %s189
    %p195 = scmp.eq.s32.totalorder %s25, 0
    %p196 = por %p194, %p195
    %p197 = scmp.ne.s32.totalorder %s186, %s189
    %p198 = scmp.eq.s32.totalorder %s30, 1
    %p199 = por %p197, %p198
    %p200 = scmp.ne.s32.totalorder %s189, %s190
    %p201 = scmp.eq.s32.totalorder %s30, 0
    %p202 = por %p200, %p201
    %p203 = scmp.ne.s32.totalorder %s189, %s190
    %p204 = scmp.eq.s32.totalorder %s31, 1
    %p205 = por %p203, %p204
    %p207 = scmp.ne.s32.totalorder %s190, %s206
    %p208 = scmp.eq.s32.totalorder %s31, 0
    %p209 = por %p207, %p208
    %s210 = ssub.s32 %s25, %s32
    %p211 = scmp.eq.s32.totalorder %s210, 0
    %s213 = sadd.s32 %s212, 1
    %s214 = scalar_select %p211, %s212, %s213
    %p217 = pneg %p211
    %p218 = scmp.eq.s32.totalorder %s25, 1
    %p219 = por %p217, %p218
    %p220 = scmp.ne.s32.totalorder %s212, %s215
    %p221 = scmp.eq.s32.totalorder %s25, 0
    %p222 = por %p220, %p221
    %p223 = scmp.ne.s32.totalorder %s212, %s215
    %p224 = scmp.eq.s32.totalorder %s30, 1
    %p225 = por %p223, %p224
    %p226 = scmp.ne.s32.totalorder %s215, %s216
    %p227 = scmp.eq.s32.totalorder %s30, 0
    %p228 = por %p226, %p227
    %p229 = scmp.ne.s32.totalorder %s215, %s216
    %p230 = scmp.eq.s32.totalorder %s31, 1
    %p231 = por %p229, %p230
    %p233 = scmp.ne.s32.totalorder %s216, %s232
    %p234 = scmp.eq.s32.totalorder %s31, 0
    %p235 = por %p233, %p234
    %s236 = ssub.s32 %s25, %s32
    %p237 = scmp.eq.s32.totalorder %s236, 0
    %s239 = sadd.s32 %s238, 1
    %s240 = scalar_select %p237, %s238, %s239
    %p243 = pneg %p237
    %p244 = scmp.eq.s32.totalorder %s25, 1
    %p245 = por %p243, %p244
    %p246 = scmp.ne.s32.totalorder %s238, %s241
    %p247 = scmp.eq.s32.totalorder %s25, 0
    %p248 = por %p246, %p247
    %p249 = scmp.ne.s32.totalorder %s238, %s241
    %p250 = scmp.eq.s32.totalorder %s30, 1
    %p251 = por %p249, %p250
    %p252 = scmp.ne.s32.totalorder %s241, %s242
    %p253 = scmp.eq.s32.totalorder %s30, 0
    %p254 = por %p252, %p253
    %p255 = scmp.ne.s32.totalorder %s241, %s242
    %p256 = scmp.eq.s32.totalorder %s31, 1
    %p257 = por %p255, %p256
    %p259 = scmp.ne.s32.totalorder %s242, %s258
    %p260 = scmp.eq.s32.totalorder %s31, 0
    %p261 = por %p259, %p260
    %s262 = ssub.s32 %s25, %s32
    %p263 = scmp.eq.s32.totalorder %s262, 0
    %s265 = sadd.s32 %s264, 1
    %s266 = scalar_select %p263, %s264, %s265
    %p269 = pneg %p263
    %p270 = scmp.eq.s32.totalorder %s25, 1
    %p271 = por %p269, %p270
    %p272 = scmp.ne.s32.totalorder %s264, %s267
    %p273 = scmp.eq.s32.totalorder %s25, 0
    %p274 = por %p272, %p273
    %p275 = scmp.ne.s32.totalorder %s264, %s267
    %p276 = scmp.eq.s32.totalorder %s30, 1
    %p277 = por %p275, %p276
    %p278 = scmp.ne.s32.totalorder %s267, %s268
    %p279 = scmp.eq.s32.totalorder %s30, 0
    %p280 = por %p278, %p279
    %p281 = scmp.ne.s32.totalorder %s267, %s268
    %p282 = scmp.eq.s32.totalorder %s31, 1
    %p283 = por %p281, %p282
    %p285 = scmp.ne.s32.totalorder %s268, %s284
    %p286 = scmp.eq.s32.totalorder %s31, 0
    %p287 = por %p285, %p286
    %s288 = ssub.s32 %s25, %s32
    %p289 = scmp.eq.s32.totalorder %s288, 0
    %s291 = sadd.s32 %s290, 1
    %s292 = scalar_select %p289, %s290, %s291
    %p295 = pneg %p289
    %p296 = scmp.eq.s32.totalorder %s25, 1
    %p297 = por %p295, %p296
    %p298 = scmp.ne.s32.totalorder %s290, %s293
    %p299 = scmp.eq.s32.totalorder %s25, 0
    %p300 = por %p298, %p299
    %p301 = scmp.ne.s32.totalorder %s290, %s293
    %p302 = scmp.eq.s32.totalorder %s30, 1
    %p303 = por %p301, %p302
    %p304 = scmp.ne.s32.totalorder %s293, %s294
    %p305 = scmp.eq.s32.totalorder %s30, 0
    %p306 = por %p304, %p305
    %p307 = scmp.ne.s32.totalorder %s293, %s294
    %p308 = scmp.eq.s32.totalorder %s31, 1
    %p309 = por %p307, %p308
    %p311 = scmp.ne.s32.totalorder %s294, %s310
    %p312 = scmp.eq.s32.totalorder %s31, 0
    %p313 = por %p311, %p312
    %s314 = ssub.s32 %s25, %s32
    %p315 = scmp.eq.s32.totalorder %s314, 0
    %s317 = sadd.s32 %s316, 1
    %s318 = scalar_select %p315, %s316, %s317
    %p321 = pneg %p315
    %p322 = scmp.eq.s32.totalorder %s25, 1
    %p323 = por %p321, %p322
    %p324 = scmp.ne.s32.totalorder %s316, %s319
    %p325 = scmp.eq.s32.totalorder %s25, 0
    %p326 = por %p324, %p325
    %p327 = scmp.ne.s32.totalorder %s316, %s319
    %p328 = scmp.eq.s32.totalorder %s30, 1
    %p329 = por %p327, %p328
    %p330 = scmp.ne.s32.totalorder %s319, %s320
    %p331 = scmp.eq.s32.totalorder %s30, 0
    %p332 = por %p330, %p331
    %p333 = scmp.ne.s32.totalorder %s319, %s320
    %p334 = scmp.eq.s32.totalorder %s31, 1
    %p335 = por %p333, %p334
    %p337 = scmp.ne.s32.totalorder %s320, %s336
    %p338 = scmp.eq.s32.totalorder %s31, 0
    %p339 = por %p337, %p338
    %s340 = ssub.s32 %s25, %s32
    %p341 = scmp.eq.s32.totalorder %s340, 0
    %s343 = sadd.s32 %s342, 1
    %s344 = scalar_select %p341, %s342, %s343
    %p347 = pneg %p341
    %p348 = scmp.eq.s32.totalorder %s25, 1
    %p349 = por %p347, %p348
    %p350 = scmp.ne.s32.totalorder %s342, %s345
    %p351 = scmp.eq.s32.totalorder %s25, 0
    %p352 = por %p350, %p351
    %p353 = scmp.ne.s32.totalorder %s342, %s345
    %p354 = scmp.eq.s32.totalorder %s30, 1
    %p355 = por %p353, %p354
    %p356 = scmp.ne.s32.totalorder %s345, %s346
    %p357 = scmp.eq.s32.totalorder %s30, 0
    %p358 = por %p356, %p357
    %p359 = scmp.ne.s32.totalorder %s345, %s346
    %p360 = scmp.eq.s32.totalorder %s31, 1
    %p361 = por %p359, %p360
    %p363 = scmp.ne.s32.totalorder %s346, %s362
    %p364 = scmp.eq.s32.totalorder %s31, 0
    %p365 = por %p363, %p364
    %s366 = ssub.s32 %s25, %s32
    %p367 = scmp.eq.s32.totalorder %s366, 0
    %s369 = sadd.s32 %s368, 1
    %s370 = scalar_select %p367, %s368, %s369
    %p373 = pneg %p367
    %p374 = scmp.eq.s32.totalorder %s25, 1
    %p375 = por %p373, %p374
    %p376 = scmp.ne.s32.totalorder %s368, %s371
    %p377 = scmp.eq.s32.totalorder %s25, 0
    %p378 = por %p376, %p377
    %p379 = scmp.ne.s32.totalorder %s368, %s371
    %p380 = scmp.eq.s32.totalorder %s30, 1
    %p381 = por %p379, %p380
    %p382 = scmp.ne.s32.totalorder %s371, %s372
    %p383 = scmp.eq.s32.totalorder %s30, 0
    %p384 = por %p382, %p383
    %p385 = scmp.ne.s32.totalorder %s371, %s372
    %p386 = scmp.eq.s32.totalorder %s31, 1
    %p387 = por %p385, %p386
    %p389 = scmp.ne.s32.totalorder %s372, %s388
    %p390 = scmp.eq.s32.totalorder %s31, 0
    %p391 = por %p389, %p390
    %s392 = ssub.s32 %s25, %s32
    %p393 = scmp.eq.s32.totalorder %s392, 0
    %s395 = sadd.s32 %s394, 1
    %s396 = scalar_select %p393, %s394, %s395
    %p399 = pneg %p393
    %p400 = scmp.eq.s32.totalorder %s25, 1
    %p401 = por %p399, %p400
    %p402 = scmp.ne.s32.totalorder %s394, %s397
    %p403 = scmp.eq.s32.totalorder %s25, 0
    %p404 = por %p402, %p403
    %p405 = scmp.ne.s32.totalorder %s394, %s397
    %p406 = scmp.eq.s32.totalorder %s30, 1
    %p407 = por %p405, %p406
    %p408 = scmp.ne.s32.totalorder %s397, %s398
    %p409 = scmp.eq.s32.totalorder %s30, 0
    %p410 = por %p408, %p409
    %p411 = scmp.ne.s32.totalorder %s397, %s398
    %p412 = scmp.eq.s32.totalorder %s31, 1
    %p413 = por %p411, %p412
    %p415 = scmp.ne.s32.totalorder %s398, %s414
    %p416 = scmp.eq.s32.totalorder %s31, 0
    %p417 = por %p415, %p416
    %s418 = ssub.s32 %s25, %s32
    %p419 = scmp.eq.s32.totalorder %s418, 0
    %s421 = sadd.s32 %s420, 1
    %s422 = scalar_select %p419, %s420, %s421
    %p425 = pneg %p419
    %p426 = scmp.eq.s32.totalorder %s25, 1
    %p427 = por %p425, %p426
    %p428 = scmp.ne.s32.totalorder %s420, %s423
    %p429 = scmp.eq.s32.totalorder %s25, 0
    %p430 = por %p428, %p429
    %p431 = scmp.ne.s32.totalorder %s420, %s423
    %p432 = scmp.eq.s32.totalorder %s30, 1
    %p433 = por %p431, %p432
    %p434 = scmp.ne.s32.totalorder %s423, %s424
    %p435 = scmp.eq.s32.totalorder %s30, 0
    %p436 = por %p434, %p435
    %p437 = scmp.ne.s32.totalorder %s423, %s424
    %p438 = scmp.eq.s32.totalorder %s31, 1
    %p439 = por %p437, %p438
    %p441 = scmp.ne.s32.totalorder %s424, %s440
    %p442 = scmp.eq.s32.totalorder %s31, 0
    %p443 = por %p441, %p442
    %s444 = ssub.s32 %s25, %s32
    %p445 = scmp.eq.s32.totalorder %s444, 0
    %s447 = sadd.s32 %s446, 1
    %s448 = scalar_select %p445, %s446, %s447
    %p451 = pneg %p445
    %p452 = scmp.eq.s32.totalorder %s25, 1
    %p453 = por %p451, %p452
    %p454 = scmp.ne.s32.totalorder %s446, %s449
    %p455 = scmp.eq.s32.totalorder %s25, 0
    %p456 = por %p454, %p455
    %p457 = scmp.ne.s32.totalorder %s446, %s449
    %p458 = scmp.eq.s32.totalorder %s30, 1
    %p459 = por %p457, %p458
    %p460 = scmp.ne.s32.totalorder %s449, %s450
    %p461 = scmp.eq.s32.totalorder %s30, 0
    %p462 = por %p460, %p461
    %p463 = scmp.ne.s32.totalorder %s449, %s450
    %p464 = scmp.eq.s32.totalorder %s31, 1
    %p465 = por %p463, %p464
    %p467 = scmp.ne.s32.totalorder %s450, %s466
    %p468 = scmp.eq.s32.totalorder %s31, 0
    %p469 = por %p467, %p468
    %s470 = ssub.s32 %s25, %s32
    %p471 = scmp.eq.s32.totalorder %s470, 0
    %s473 = sadd.s32 %s472, 1
    %s474 = scalar_select %p471, %s472, %s473
    %p477 = pneg %p471
    %p478 = scmp.eq.s32.totalorder %s25, 1
    %p479 = por %p477, %p478
    %p480 = scmp.ne.s32.totalorder %s472, %s475
    %p481 = scmp.eq.s32.totalorder %s25, 0
    %p482 = por %p480, %p481
    %p483 = scmp.ne.s32.totalorder %s472, %s475
    %p484 = scmp.eq.s32.totalorder %s30, 1
    %p485 = por %p483, %p484
    %p486 = scmp.ne.s32.totalorder %s475, %s476
    %p487 = scmp.eq.s32.totalorder %s30, 0
    %p488 = por %p486, %p487
    %p489 = scmp.ne.s32.totalorder %s475, %s476
    %p490 = scmp.eq.s32.totalorder %s31, 1
    %p491 = por %p489, %p490
    %p493 = scmp.ne.s32.totalorder %s476, %s492
    %p494 = scmp.eq.s32.totalorder %s31, 0
    %p495 = por %p493, %p494
    %s496 = ssub.s32 %s25, %s32
    %p497 = scmp.eq.s32.totalorder %s496, 0
    %s499 = sadd.s32 %s498, 1
    %s500 = scalar_select %p497, %s498, %s499
    %p503 = pneg %p497
    %p504 = scmp.eq.s32.totalorder %s25, 1
    %p505 = por %p503, %p504
    %p506 = scmp.ne.s32.totalorder %s498, %s501
    %p507 = scmp.eq.s32.totalorder %s25, 0
    %p508 = por %p506, %p507
    %p509 = scmp.ne.s32.totalorder %s498, %s501
    %p510 = scmp.eq.s32.totalorder %s30, 1
    %p511 = por %p509, %p510
    %p512 = scmp.ne.s32.totalorder %s501, %s502
    %p513 = scmp.eq.s32.totalorder %s30, 0
    %p514 = por %p512, %p513
    %p515 = scmp.ne.s32.totalorder %s501, %s502
    %p516 = scmp.eq.s32.totalorder %s31, 1
    %p517 = por %p515, %p516
    %p519 = scmp.ne.s32.totalorder %s502, %s518
    %p520 = scmp.eq.s32.totalorder %s31, 0
    %p521 = por %p519, %p520
    %s522 = ssub.s32 %s25, %s32
    %p523 = scmp.eq.s32.totalorder %s522, 0
    %s525 = sadd.s32 %s524, 1
    %s526 = scalar_select %p523, %s524, %s525
    %p529 = pneg %p523
    %p530 = scmp.eq.s32.totalorder %s25, 1
    %p531 = por %p529, %p530
    %p532 = scmp.ne.s32.totalorder %s524, %s527
    %p533 = scmp.eq.s32.totalorder %s25, 0
    %p534 = por %p532, %p533
    %p535 = scmp.ne.s32.totalorder %s524, %s527
    %p536 = scmp.eq.s32.totalorder %s30, 1
    %p537 = por %p535, %p536
    %p538 = scmp.ne.s32.totalorder %s527, %s528
    %p539 = scmp.eq.s32.totalorder %s30, 0
    %p540 = por %p538, %p539
    %p541 = scmp.ne.s32.totalorder %s527, %s528
    %p542 = scmp.eq.s32.totalorder %s31, 1
    %p543 = por %p541, %p542
    %p545 = scmp.ne.s32.totalorder %s528, %s544
    %p546 = scmp.eq.s32.totalorder %s31, 0
    %p547 = por %p545, %p546
    %p548 = scmp.le.s32.totalorder 1, %s25
    %p549 = scmp.lt.s32.totalorder %s25, 3
    %p550 = pnand %p548, %p549
    %p551 = pneg %p550
    // Predicated region
    $region9: #{verb_noun_forward.1} parent=5 // pred_check
      _
    $region10: #{verb_noun_forward.1} parent=5 // pred_check_branch
      %553 = sbr.rel (%p550) target = $region12
    $region11: #{verb_noun_forward.1} parent=5 // pred_region
      %s554 = ssub.s32 %s25, 1
      // Predicated region
      $region13: #{verb_noun_forward.1} parent=11 // pred_check
        %p555 = pneg %p46
      $region14: #{verb_noun_forward.1} parent=11 // pred_check_branch
        %557 = sbr.rel (%p555) target = $region16
      $region15: #{verb_noun_forward.1} parent=11 // pred_region
        _
      $region16: #{verb_noun_forward.1} parent=11 // pred_fallthru
        _
    $region12: #{verb_noun_forward.1} parent=5 // pred_fallthru
      _
    %p558 = scmp.lt.s32.totalorder %s25, 2
    // Predicated region
    $region17: #{verb_noun_forward.1} parent=5 // pred_check
      %p559 = pneg %p558
    $region18: #{verb_noun_forward.1} parent=5 // pred_check_branch
      %561 = sbr.rel (%p559) target = $region20
    $region19: #{verb_noun_forward.1} parent=5 // pred_region
      // Predicated region
      $region21: #{verb_noun_forward.1} parent=19 // pred_check
        %p562 = pneg %p66
      $region22: #{verb_noun_forward.1} parent=19 // pred_check_branch
        %564 = sbr.rel (%p562) target = $region24
      $region23: #{verb_noun_forward.1} parent=19 // pred_region
        %p565 = scmp.lt.s32.totalorder %s25, 1
        %s566 = scalar_select %p565, %s25, 1
        %s567 = smul.addr %s566, 48
        %s568 = smul.addr %s567, 8
        %s569 = scalar_lea.vmem %s1, %s568
      $region24: #{verb_noun_forward.1} parent=19 // pred_fallthru
        _
      // Predicated region
      $region25: #{verb_noun_forward.1} parent=19 // pred_check
        %p570 = pneg %p92
      $region26: #{verb_noun_forward.1} parent=19 // pred_check_branch
        %572 = sbr.rel (%p570) target = $region28
      $region27: #{verb_noun_forward.1} parent=19 // pred_region
        %p573 = scmp.lt.s32.totalorder %s25, 1
        %s574 = scalar_select %p573, %s25, 1
        %s575 = smul.addr %s574, 2
        %s576 = smul.addr %s575, 8
        %s577 = scalar_lea.vmem %s2, %s576
      $region28: #{verb_noun_forward.1} parent=19 // pred_fallthru
        _
      // Predicated region
      $region29: #{verb_noun_forward.1} parent=19 // pred_check
        %p578 = pneg %p118
      $region30: #{verb_noun_forward.1} parent=19 // pred_check_branch
        %580 = sbr.rel (%p578) target = $region32
      $region31: #{verb_noun_forward.1} parent=19 // pred_region
        %p581 = scmp.lt.s32.totalorder %s25, 1
        %s582 = scalar_select %p581, %s25, 1
        %s583 = smul.addr %s582, 2
        %s584 = scalar_lea.vmem %s3, %s583
      $region32: #{verb_noun_forward.1} parent=19 // pred_fallthru
        _
      // Predicated region
      $region33: #{verb_noun_forward.1} parent=19 // pred_check
        %p585 = pneg %p144
      $region34: #{verb_noun_forward.1} parent=19 // pred_check_branch
        %587 = sbr.rel (%p585) target = $region36
      $region35: #{verb_noun_forward.1} parent=19 // pred_region
        %p588 = scmp.lt.s32.totalorder %s25, 1
        %s589 = scalar_select %p588, %s25, 1
        %s590 = smul.addr %s589, 2
        %s591 = scalar_lea.vmem %s4, %s590
      $region36: #{verb_noun_forward.1} parent=19 // pred_fallthru
        _
      // Predicated region
      $region37: #{verb_noun_forward.1} parent=19 // pred_check
        %p592 = pneg %p170
      $region38: #{verb_noun_forward.1} parent=19 // pred_check_branch
        %594 = sbr.rel (%p592) target = $region40
      $region39: #{verb_noun_forward.1} parent=19 // pred_region
        %p595 = scmp.lt.s32.totalorder %s25, 1
        %s596 = scalar_select %p595, %s25, 1
        %s597 = smul.addr %s596, 8
        %s598 = smul.addr %s597, 8
        %s599 = scalar_lea.vmem %s5, %s598
      $region40: #{verb_noun_forward.1} parent=19 // pred_fallthru
        _
      // Predicated region
      $region41: #{verb_noun_forward.1} parent=19 // pred_check
        %p600 = pneg %p196
      $region42: #{verb_noun_forward.1} parent=19 // pred_check_branch
        %602 = sbr.rel (%p600) target = $region44
      $region43: #{verb_noun_forward.1} parent=19 // pred_region
        %p603 = scmp.lt.s32.totalorder %s25, 1
        %s604 = scalar_select %p603, %s25, 1
        %s605 = smul.addr %s604, 2
        %s606 = scalar_lea.vmem %s6, %s605
      $region44: #{verb_noun_forward.1} parent=19 // pred_fallthru
        _
      // Predicated region
      $region45: #{verb_noun_forward.1} parent=19 // pred_check
        %p607 = pneg %p222
      $region46: #{verb_noun_forward.1} parent=19 // pred_check_branch
        %609 = sbr.rel (%p607) target = $region48
      $region47: #{verb_noun_forward.1} parent=19 // pred_region
        %p610 = scmp.lt.s32.totalorder %s25, 1
        %s611 = scalar_select %p610, %s25, 1
        %s612 = smul.addr %s611, 8
        %s613 = smul.addr %s612, 8
        %s614 = scalar_lea.vmem %s7, %s613
      $region48: #{verb_noun_forward.1} parent=19 // pred_fallthru
        _
      // Predicated region
      $region49: #{verb_noun_forward.1} parent=19 // pred_check
        %p615 = pneg %p248
      $region50: #{verb_noun_forward.1} parent=19 // pred_check_branch
        %617 = sbr.rel (%p615) target = $region52
      $region51: #{verb_noun_forward.1} parent=19 // pred_region
        %p618 = scmp.lt.s32.totalorder %s25, 1
        %s619 = scalar_select %p618, %s25, 1
        %s620 = smul.addr %s619, 2
        %s621 = scalar_lea.vmem %s8, %s620
      $region52: #{verb_noun_forward.1} parent=19 // pred_fallthru
        _
      // Predicated region
      $region53: #{verb_noun_forward.1} parent=19 // pred_check
        %p622 = pneg %p274
      $region54: #{verb_noun_forward.1} parent=19 // pred_check_branch
        %624 = sbr.rel (%p622) target = $region56
      $region55: #{verb_noun_forward.1} parent=19 // pred_region
        %p625 = scmp.lt.s32.totalorder %s25, 1
        %s626 = scalar_select %p625, %s25, 1
        %s627 = smul.addr %s626, 2
        %s628 = scalar_lea.vmem %s9, %s627
      $region56: #{verb_noun_forward.1} parent=19 // pred_fallthru
        _
      // Predicated region
      $region57: #{verb_noun_forward.1} parent=19 // pred_check
        %p629 = pneg %p300
      $region58: #{verb_noun_forward.1} parent=19 // pred_check_branch
        %631 = sbr.rel (%p629) target = $region60
      $region59: #{verb_noun_forward.1} parent=19 // pred_region
        %p632 = scmp.lt.s32.totalorder %s25, 1
        %s633 = scalar_select %p632, %s25, 1
        %s634 = smul.addr %s633, 2
        %s635 = scalar_lea.vmem %s10, %s634
      $region60: #{verb_noun_forward.1} parent=19 // pred_fallthru
        _
      // Predicated region
      $region61: #{verb_noun_forward.1} parent=19 // pred_check
        %p636 = pneg %p326
      $region62: #{verb_noun_forward.1} parent=19 // pred_check_branch
        %638 = sbr.rel (%p636) target = $region64
      $region63: #{verb_noun_forward.1} parent=19 // pred_region
        %p639 = scmp.lt.s32.totalorder %s25, 1
        %s640 = scalar_select %p639, %s25, 1
        %s641 = smul.addr %s640, 8
        %s642 = smul.addr %s641, 8
        %s643 = scalar_lea.vmem %s11, %s642
      $region64: #{verb_noun_forward.1} parent=19 // pred_fallthru
        _
      // Predicated region
      $region65: #{verb_noun_forward.1} parent=19 // pred_check
        %p644 = pneg %p352
      $region66: #{verb_noun_forward.1} parent=19 // pred_check_branch
        %646 = sbr.rel (%p644) target = $region68
      $region67: #{verb_noun_forward.1} parent=19 // pred_region
        %p647 = scmp.lt.s32.totalorder %s25, 1
        %s648 = scalar_select %p647, %s25, 1
        %s649 = smul.addr %s648, 2
        %s650 = scalar_lea.vmem %s12, %s649
      $region68: #{verb_noun_forward.1} parent=19 // pred_fallthru
        _
      // Predicated region
      $region69: #{verb_noun_forward.1} parent=19 // pred_check
        %p651 = pneg %p378
      $region70: #{verb_noun_forward.1} parent=19 // pred_check_branch
        %653 = sbr.rel (%p651) target = $region72
      $region71: #{verb_noun_forward.1} parent=19 // pred_region
        %p654 = scmp.lt.s32.totalorder %s25, 1
        %s655 = scalar_select %p654, %s25, 1
        %s656 = smul.addr %s655, 16
        %s657 = smul.addr %s656, 8
        %s658 = scalar_lea.vmem %s13, %s657
      $region72: #{verb_noun_forward.1} parent=19 // pred_fallthru
        _
      // Predicated region
      $region73: #{verb_noun_forward.1} parent=19 // pred_check
        %p659 = pneg %p404
      $region74: #{verb_noun_forward.1} parent=19 // pred_check_branch
        %661 = sbr.rel (%p659) target = $region76
      $region75: #{verb_noun_forward.1} parent=19 // pred_region
        %p662 = scmp.lt.s32.totalorder %s25, 1
        %s663 = scalar_select %p662, %s25, 1
        %s664 = smul.addr %s663, 2
        %s665 = scalar_lea.vmem %s14, %s664
      $region76: #{verb_noun_forward.1} parent=19 // pred_fallthru
        _
      // Predicated region
      $region77: #{verb_noun_forward.1} parent=19 // pred_check
        %p666 = pneg %p430
      $region78: #{verb_noun_forward.1} parent=19 // pred_check_branch
        %668 = sbr.rel (%p666) target = $region80
      $region79: #{verb_noun_forward.1} parent=19 // pred_region
        %p669 = scmp.lt.s32.totalorder %s25, 1
        %s670 = scalar_select %p669, %s25, 1
        %s671 = scalar_lea.vmem %s15, %s670
      $region80: #{verb_noun_forward.1} parent=19 // pred_fallthru
        _
      // Predicated region
      $region81: #{verb_noun_forward.1} parent=19 // pred_check
        %p672 = pneg %p456
      $region82: #{verb_noun_forward.1} parent=19 // pred_check_branch
        %674 = sbr.rel (%p672) target = $region84
      $region83: #{verb_noun_forward.1} parent=19 // pred_region
        %p675 = scmp.lt.s32.totalorder %s25, 1
        %s676 = scalar_select %p675, %s25, 1
        %s677 = scalar_lea.vmem %s16, %s676
      $region84: #{verb_noun_forward.1} parent=19 // pred_fallthru
        _
      // Predicated region
      $region85: #{verb_noun_forward.1} parent=19 // pred_check
        %p678 = pneg %p482
      $region86: #{verb_noun_forward.1} parent=19 // pred_check_branch
        %680 = sbr.rel (%p678) target = $region88
      $region87: #{verb_noun_forward.1} parent=19 // pred_region
        %p681 = scmp.lt.s32.totalorder %s25, 1
        %s682 = scalar_select %p681, %s25, 1
        %s683 = smul.addr %s682, 4
        %s684 = smul.addr %s683, 8
        %s685 = scalar_lea.vmem %s17, %s684
      $region88: #{verb_noun_forward.1} parent=19 // pred_fallthru
        _
      // Predicated region
      $region89: #{verb_noun_forward.1} parent=19 // pred_check
        %p686 = pneg %p508
      $region90: #{verb_noun_forward.1} parent=19 // pred_check_branch
        %688 = sbr.rel (%p686) target = $region92
      $region91: #{verb_noun_forward.1} parent=19 // pred_region
        %p689 = scmp.lt.s32.totalorder %s25, 1
        %s690 = scalar_select %p689, %s25, 1
        %s691 = scalar_lea.vmem %s18, %s690
      $region92: #{verb_noun_forward.1} parent=19 // pred_fallthru
        _
    $region20: #{verb_noun_forward.1} parent=5 // pred_fallthru
      _
    %p692 = scmp.le.s32.totalorder 1, %s25
    %p693 = scmp.lt.s32.totalorder %s25, 3
    %p694 = pnand %p692, %p693
    %p695 = pneg %p694
    // Predicated region
    $region93: #{verb_noun_forward.1} parent=5 // pred_check
      _
    $region94: #{verb_noun_forward.1} parent=5 // pred_check_branch
      %697 = sbr.rel (%p694) target = $region96
    $region95: #{verb_noun_forward.1} parent=5 // pred_region
      %s698 = ssub.s32 %s25, 1
      %p699 = pneg %p46
      %p700 = pneg %p43
      %p701 = scmp.lt.s32.totalorder %s30, 1
      %s702 = scalar_select %p701, %s30, 1
      %s703 = smul.addr %s702, 48
      %s704 = smul.addr %s703, 8
      %s705 = scalar_lea.vmem %s1, %s704
      %p706 = pneg %p72
      %p707 = pneg %p69
      %p708 = scmp.lt.s32.totalorder %s30, 1
      %s709 = scalar_select %p708, %s30, 1
      %s710 = smul.addr %s709, 2
      %s711 = smul.addr %s710, 8
      %s712 = scalar_lea.vmem %s2, %s711
      %p713 = pneg %p98
      %p714 = pneg %p95
      %p715 = scmp.lt.s32.totalorder %s30, 1
      %s716 = scalar_select %p715, %s30, 1
      %s717 = smul.addr %s716, 2
      %s718 = scalar_lea.vmem %s3, %s717
      %p719 = pneg %p124
      %p720 = pneg %p121
      %p721 = scmp.lt.s32.totalorder %s30, 1
      %s722 = scalar_select %p721, %s30, 1
      %s723 = smul.addr %s722, 2
      %s724 = scalar_lea.vmem %s4, %s723
      %p725 = pneg %p150
      %p726 = pneg %p147
      %p727 = scmp.lt.s32.totalorder %s30, 1
      %s728 = scalar_select %p727, %s30, 1
      %s729 = smul.addr %s728, 8
      %s730 = smul.addr %s729, 8
      %s731 = scalar_lea.vmem %s5, %s730
      %p732 = pneg %p176
      %p733 = pneg %p173
      %p734 = scmp.lt.s32.totalorder %s30, 1
      %s735 = scalar_select %p734, %s30, 1
      %s736 = smul.addr %s735, 2
      %s737 = scalar_lea.vmem %s6, %s736
      %p738 = pneg %p202
      %p739 = pneg %p199
      %p740 = scmp.lt.s32.totalorder %s30, 1
      %s741 = scalar_select %p740, %s30, 1
      %s742 = smul.addr %s741, 8
      %s743 = smul.addr %s742, 8
      %s744 = scalar_lea.vmem %s7, %s743
      %p745 = pneg %p228
      %p746 = pneg %p225
      %p747 = scmp.lt.s32.totalorder %s30, 1
      %s748 = scalar_select %p747, %s30, 1
      %s749 = smul.addr %s748, 2
      %s750 = scalar_lea.vmem %s8, %s749
      %p751 = pneg %p254
      %p752 = pneg %p251
      %p753 = scmp.lt.s32.totalorder %s30, 1
      %s754 = scalar_select %p753, %s30, 1
      %s755 = smul.addr %s754, 2
      %s756 = scalar_lea.vmem %s9, %s755
      %p757 = pneg %p280
      %p758 = pneg %p277
      %p759 = scmp.lt.s32.totalorder %s30, 1
      %s760 = scalar_select %p759, %s30, 1
      %s761 = smul.addr %s760, 2
      %s762 = scalar_lea.vmem %s10, %s761
      %p763 = pneg %p306
      %p764 = pneg %p303
      %p765 = scmp.lt.s32.totalorder %s30, 1
      %s766 = scalar_select %p765, %s30, 1
      %s767 = smul.addr %s766, 8
      %s768 = smul.addr %s767, 8
      %s769 = scalar_lea.vmem %s11, %s768
      %p770 = pneg %p332
      %p771 = pneg %p329
      %p772 = scmp.lt.s32.totalorder %s30, 1
      %s773 = scalar_select %p772, %s30, 1
      %s774 = smul.addr %s773, 2
      %s775 = scalar_lea.vmem %s12, %s774
      %p776 = pneg %p358
      %p777 = pneg %p355
      %p778 = scmp.lt.s32.totalorder %s30, 1
      %s779 = scalar_select %p778, %s30, 1
      %s780 = smul.addr %s779, 16
      %s781 = smul.addr %s780, 8
      %s782 = scalar_lea.vmem %s13, %s781
      %p783 = pneg %p384
      %p784 = pneg %p381
      %p785 = scmp.lt.s32.totalorder %s30, 1
      %s786 = scalar_select %p785, %s30, 1
      %s787 = smul.addr %s786, 2
      %s788 = scalar_lea.vmem %s14, %s787
      %p789 = pneg %p410
      %p790 = pneg %p407
      %p791 = scmp.lt.s32.totalorder %s30, 1
      %s792 = scalar_select %p791, %s30, 1
      %s793 = scalar_lea.vmem %s15, %s792
      %p794 = pneg %p436
      %p795 = pneg %p433
      %p796 = scmp.lt.s32.totalorder %s30, 1
      %s797 = scalar_select %p796, %s30, 1
      %s798 = scalar_lea.vmem %s16, %s797
      %p799 = pneg %p462
      %p800 = pneg %p459
      %p801 = scmp.lt.s32.totalorder %s30, 1
      %s802 = scalar_select %p801, %s30, 1
      %s803 = smul.addr %s802, 4
      %s804 = smul.addr %s803, 8
      %s805 = scalar_lea.vmem %s17, %s804
      %p806 = pneg %p488
      %p807 = pneg %p485
      %p808 = scmp.lt.s32.totalorder %s30, 1
      %s809 = scalar_select %p808, %s30, 1
      %s810 = scalar_lea.vmem %s18, %s809
      %p811 = pneg %p514
      %p812 = pneg %p511
      %p813 = pneg %p540
      %p814 = pneg %p537
      %p815 = scmp.lt.s32.totalorder %s30, 1
      %s816 = scalar_select %p815, %s30, 1
      %s817 = smul.addr %s816, 2
      %s818 = scalar_lea.vmem %s19, %s817
      %p819 = scmp.lt.s32.totalorder %s30, 1
      %s820 = scalar_select %p819, %s30, 1
      %s821 = smul.addr %s820, 48
      %s822 = smul.addr %s821, 8
      %s823 = scalar_lea.vmem %s1, %s822
      %p824 = scmp.lt.s32.totalorder %s30, 1
      %s825 = scalar_select %p824, %s30, 1
      %s826 = smul.addr %s825, 2
      %s827 = smul.addr %s826, 8
      %s828 = scalar_lea.vmem %s2, %s827
      %p829 = scmp.lt.s32.totalorder %s30, 1
      %s830 = scalar_select %p829, %s30, 1
      %s831 = smul.addr %s830, 2
      %s832 = scalar_lea.vmem %s3, %s831
      %p833 = scmp.lt.s32.totalorder %s30, 1
      %s834 = scalar_select %p833, %s30, 1
      %s835 = smul.addr %s834, 2
      %s836 = scalar_lea.vmem %s4, %s835
      %p837 = scmp.lt.s32.totalorder %s30, 1
      %s838 = scalar_select %p837, %s30, 1
      %s839 = smul.addr %s838, 8
      %s840 = smul.addr %s839, 8
      %s841 = scalar_lea.vmem %s5, %s840
      %p842 = scmp.lt.s32.totalorder %s30, 1
      %s843 = scalar_select %p842, %s30, 1
      %s844 = smul.addr %s843, 2
      %s845 = scalar_lea.vmem %s6, %s844
      %p846 = scmp.lt.s32.totalorder %s30, 1
      %s847 = scalar_select %p846, %s30, 1
      %s848 = smul.addr %s847, 8
      %s849 = smul.addr %s848, 8
      %s850 = scalar_lea.vmem %s7, %s849
      %p851 = scmp.lt.s32.totalorder %s30, 1
      %s852 = scalar_select %p851, %s30, 1
      %s853 = smul.addr %s852, 2
      %s854 = scalar_lea.vmem %s8, %s853
      %p855 = scmp.lt.s32.totalorder %s30, 1
      %s856 = scalar_select %p855, %s30, 1
      %s857 = smul.addr %s856, 2
      %s858 = scalar_lea.vmem %s9, %s857
      %p859 = scmp.lt.s32.totalorder %s30, 1
      %s860 = scalar_select %p859, %s30, 1
      %s861 = smul.addr %s860, 2
      %s862 = scalar_lea.vmem %s10, %s861
      %p863 = scmp.lt.s32.totalorder %s30, 1
      %s864 = scalar_select %p863, %s30, 1
      %s865 = smul.addr %s864, 8
      %s866 = smul.addr %s865, 8
      %s867 = scalar_lea.vmem %s11, %s866
      %p868 = scmp.lt.s32.totalorder %s30, 1
      %s869 = scalar_select %p868, %s30, 1
      %s870 = smul.addr %s869, 2
      %s871 = scalar_lea.vmem %s12, %s870
      %p872 = scmp.lt.s32.totalorder %s30, 1
      %s873 = scalar_select %p872, %s30, 1
      %s874 = smul.addr %s873, 16
      %s875 = smul.addr %s874, 8
      %s876 = scalar_lea.vmem %s13, %s875
      %p877 = scmp.lt.s32.totalorder %s30, 1
      %s878 = scalar_select %p877, %s30, 1
      %s879 = smul.addr %s878, 2
      %s880 = scalar_lea.vmem %s14, %s879
      %p881 = scmp.lt.s32.totalorder %s30, 1
      %s882 = scalar_select %p881, %s30, 1
      %s883 = scalar_lea.vmem %s15, %s882
      %p884 = scmp.lt.s32.totalorder %s30, 1
      %s885 = scalar_select %p884, %s30, 1
      %s886 = scalar_lea.vmem %s16, %s885
      %p887 = scmp.lt.s32.totalorder %s30, 1
      %s888 = scalar_select %p887, %s30, 1
      %s889 = smul.addr %s888, 4
      %s890 = smul.addr %s889, 8
      %s891 = scalar_lea.vmem %s17, %s890
      %p892 = scmp.lt.s32.totalorder %s30, 1
      %s893 = scalar_select %p892, %s30, 1
      %s894 = scalar_lea.vmem %s18, %s893
      %p895 = scmp.lt.s32.totalorder %s30, 1
      %s896 = scalar_select %p895, %s30, 1
      %s897 = smul.addr %s896, 2
      %s898 = scalar_lea.vmem %s19, %s897
      %v899 = vld [vmem:[%s0] sm:$0xff]
      %v900 = vld [vmem:[%s0 + $0x8] sm:$0xff]
      %v901 = vld [vmem:[%s0 + $0x10] sm:$0xff]
      %v902 = vld [vmem:[%s0 + $0x18] sm:$0xff]
      %v903 = vld [vmem:[%s0 + $0x20] sm:$0xff]
      %v904 = vld [vmem:[%s0 + $0x28] sm:$0xff]
      %v905 = vld [vmem:[%s823] sm:$0xff]
      %v906 = vld [vmem:[%s823 + $0x8] sm:$0xff]
      %v907 = vld [vmem:[%s823 + $0x10] sm:$0xff]
      %v908 = vld [vmem:[%s823 + $0x18] sm:$0xff]
      %v909 = vld [vmem:[%s823 + $0x20] sm:$0xff]
      %v910 = vld [vmem:[%s823 + $0x28] sm:$0xff]
      %v911 = vld [vmem:[%s823 + $0x30] sm:$0xff]
      %v912 = vld [vmem:[%s823 + $0x38] sm:$0xff]
      %v913 = vld [vmem:[%s823 + $0x40] sm:$0xff]
      %v914 = vld [vmem:[%s823 + $0x48] sm:$0xff]
      %v915 = vld [vmem:[%s823 + $0x50] sm:$0xff]
      %v916 = vld [vmem:[%s823 + $0x58] sm:$0xff]
      %v917 = vld [vmem:[%s823 + $0x60] sm:$0xff]
      %v918 = vld [vmem:[%s823 + $0x68] sm:$0xff]
      %v919 = vld [vmem:[%s823 + $0x70] sm:$0xff]
      %v920 = vld [vmem:[%s823 + $0x78] sm:$0xff]
      %v921 = vld [vmem:[%s823 + $0x80] sm:$0xff]
      %v922 = vld [vmem:[%s823 + $0x88] sm:$0xff]
      %v923 = vld [vmem:[%s823 + $0x90] sm:$0xff]
      %v924 = vld [vmem:[%s823 + $0x98] sm:$0xff]
      %v925 = vld [vmem:[%s823 + $0xa0] sm:$0xff]
      %v926 = vld [vmem:[%s823 + $0xa8] sm:$0xff]
      %v927 = vld [vmem:[%s823 + $0xb0] sm:$0xff]
      %v928 = vld [vmem:[%s823 + $0xb8] sm:$0xff]
      %v929 = vld [vmem:[%s823 + $0xc0] sm:$0xff]
      %v930 = vld [vmem:[%s823 + $0xc8] sm:$0xff]
      %v931 = vld [vmem:[%s823 + $0xd0] sm:$0xff]
      %v932 = vld [vmem:[%s823 + $0xd8] sm:$0xff]
      %v933 = vld [vmem:[%s823 + $0xe0] sm:$0xff]
      %v934 = vld [vmem:[%s823 + $0xe8] sm:$0xff]
      %v935 = vld [vmem:[%s823 + $0xf0] sm:$0xff]
      %v936 = vld [vmem:[%s823 + $0xf8] sm:$0xff]
      %v937 = vld [vmem:[%s823 + $0x100] sm:$0xff]
      %v938 = vld [vmem:[%s823 + $0x108] sm:$0xff]
      %v939 = vld [vmem:[%s823 + $0x110] sm:$0xff]
      %v940 = vld [vmem:[%s823 + $0x118] sm:$0xff]
      %v941 = vld [vmem:[%s823 + $0x120] sm:$0xff]
      %v942 = vld [vmem:[%s823 + $0x128] sm:$0xff]
      %v943 = vld [vmem:[%s823 + $0x130] sm:$0xff]
      %v944 = vld [vmem:[%s823 + $0x138] sm:$0xff]
      %v945 = vld [vmem:[%s823 + $0x140] sm:$0xff]
      %v946 = vld [vmem:[%s823 + $0x148] sm:$0xff]
      %v947 = vld [vmem:[%s823 + $0x150] sm:$0xff]
      %v948 = vld [vmem:[%s823 + $0x158] sm:$0xff]
      %v949 = vld [vmem:[%s823 + $0x160] sm:$0xff]
      %v950 = vld [vmem:[%s823 + $0x168] sm:$0xff]
      %v951 = vld [vmem:[%s823 + $0x170] sm:$0xff]
      %v952 = vld [vmem:[%s823 + $0x178] sm:$0xff]
      %v953 = vld [vmem:[%s828] sm:$0xff]
      %v954 = vld [vmem:[%s828 + $0x8] sm:$0xff]
      %955 = vmatprep.subr.mxu0 0.0
      %956 = vmatpush1.msra.mxu0 %v905
      %957 = vmatprep.subr.mxu0 0.0
      %958 = vmatpush1.msra.mxu0 %v906
      %959 = vmatprep.subr.mxu0 0.0
      %960 = vmatpush1.msra.mxu0 %v907
      %961 = vmatprep.subr.mxu0 0.0
      %962 = vmatpush1.msra.mxu0 %v908
      %963 = vmatprep.subr.mxu0 0.0
      %964 = vmatpush1.msra.mxu0 %v909
      %965 = vmatprep.subr.mxu0 0.0
      %966 = vmatpush1.msra.mxu0 %v910
      %967 = vmatprep.subr.mxu0 0.0
      %968 = vmatpush1.msra.mxu0 %v911
      %969 = vmatprep.subr.mxu0 0.0
      %970 = vmatpush1.msra.mxu0 %v912
      %971 = vmatprep.subr.mxu0 0.0
      %972 = vmatpush1.msra.mxu0 %v913
      %973 = vmatprep.subr.mxu0 0.0
      %974 = vmatpush1.msra.mxu0 %v914
      %975 = vmatprep.subr.mxu0 0.0
      %976 = vmatpush1.msra.mxu0 %v915
      %977 = vmatprep.subr.mxu0 0.0
      %978 = vmatpush1.msra.mxu0 %v916
      %979 = vmatprep.subr.mxu0 0.0
      %980 = vmatpush1.msra.mxu0 %v917
      %981 = vmatprep.subr.mxu0 0.0
      %982 = vmatpush1.msra.mxu0 %v918
      %983 = vmatprep.subr.mxu0 0.0
      %984 = vmatpush1.msra.mxu0 %v919
      %985 = vmatprep.subr.mxu0 0.0
      %986 = vmatpush1.msra.mxu0 %v920
      %987 = vmatprep.subr.mxu0 0.0
      %988 = vmatpush1.msra.mxu0 %v921
      %989 = vmatprep.subr.mxu0 0.0
      %990 = vmatpush1.msra.mxu0 %v922
      %991 = vmatprep.subr.mxu0 0.0
      %992 = vmatpush1.msra.mxu0 %v923
      %993 = vmatprep.subr.mxu0 0.0
      %994 = vmatpush1.msra.mxu0 %v924
      %995 = vmatprep.subr.mxu0 0.0
      %996 = vmatpush1.msra.mxu0 %v925
      %997 = vmatprep.subr.mxu0 0.0
      %998 = vmatpush1.msra.mxu0 %v926
      %999 = vmatprep.subr.mxu0 0.0
      %1000 = vmatpush1.msra.mxu0 %v927
      %1001 = vmatprep.subr.mxu0 0.0
      %1002 = vmatpush1.msra.mxu0 %v928
      %1003 = vmatprep.subr.mxu0 0.0
      %1004 = vmatpush1.msra.mxu0 %v929
      %1005 = vmatprep.subr.mxu0 0.0
      %1006 = vmatpush1.msra.mxu0 %v930
      %1007 = vmatprep.subr.mxu0 0.0
      %1008 = vmatpush1.msra.mxu0 %v931
      %1009 = vmatprep.subr.mxu0 0.0
      %1010 = vmatpush1.msra.mxu0 %v932
      %1011 = vmatprep.subr.mxu0 0.0
      %1012 = vmatpush1.msra.mxu0 %v933
      %1013 = vmatprep.subr.mxu0 0.0
      %1014 = vmatpush1.msra.mxu0 %v934
      %1015 = vmatprep.subr.mxu0 0.0
      %1016 = vmatpush1.msra.mxu0 %v935
      %1017 = vmatprep.subr.mxu0 0.0
      %1018 = vmatpush1.msra.mxu0 %v936
      %1019 = vmatprep.mubr.f32.mxu0 %v900
      %1020 = vmatmul.mubr.f32.gmra.mrb[0].mxu0 %v899
      %v1021 = vpop.f32.mrb[0].mxu0
      %v1022 = vadd.f32 %v953, %v1021
      %v1023 = vpop.f32.mrb[0].mxu0
      %1024 = vmatprep.mubr.f32.mxu0 %v903
      %1025 = vmatmul.mubr.f32.gmra.mrb[0].mxu0 %v902
      %v1026 = vpop.f32.mrb[0].mxu0
      %v1027 = vadd.f32 %v954, %v1026
      %v1028 = vpop.f32.mrb[0].mxu0
      %1029 = vdwg.mxu0
      %1030 = vmatprep.subr.mxu0 0.0
      %1031 = vmatpush1.msra.mxu0 %v937
      %1032 = vmatprep.subr.mxu0 0.0
      %1033 = vmatpush1.msra.mxu0 %v938
      %1034 = vmatprep.subr.mxu0 0.0
      %1035 = vmatpush1.msra.mxu0 %v939
      %1036 = vmatprep.subr.mxu0 0.0
      %1037 = vmatpush1.msra.mxu0 %v940
      %1038 = vmatprep.subr.mxu0 0.0
      %1039 = vmatpush1.msra.mxu0 %v941
      %1040 = vmatprep.subr.mxu0 0.0
      %1041 = vmatpush1.msra.mxu0 %v942
      %1042 = vmatprep.subr.mxu0 0.0
      %1043 = vmatpush1.msra.mxu0 %v943
      %1044 = vmatprep.subr.mxu0 0.0
      %1045 = vmatpush1.msra.mxu0 %v944
      %1046 = vmatprep.subr.mxu0 0.0
      %1047 = vmatpush1.msra.mxu0 %v945
      %1048 = vmatprep.subr.mxu0 0.0
      %1049 = vmatpush1.msra.mxu0 %v946
      %1050 = vmatprep.subr.mxu0 0.0
      %1051 = vmatpush1.msra.mxu0 %v947
      %1052 = vmatprep.subr.mxu0 0.0
      %1053 = vmatpush1.msra.mxu0 %v948
      %1054 = vmatprep.subr.mxu0 0.0
      %1055 = vmatpush1.msra.mxu0 %v949
      %1056 = vmatprep.subr.mxu0 0.0
      %1057 = vmatpush1.msra.mxu0 %v950
      %1058 = vmatprep.subr.mxu0 0.0
      %1059 = vmatpush1.msra.mxu0 %v951
      %1060 = vmatprep.subr.mxu0 0.0
      %1061 = vmatpush1.msra.mxu0 %v952
      %1062 = vmatprep.subr.mxu0 0.0
      %1063 = vmatpush1.msra.mxu0 0.0
      %1064 = vmatprep.subr.mxu0 0.0
      %1065 = vmatpush1.msra.mxu0 0.0
      %1066 = vmatprep.subr.mxu0 0.0
      %1067 = vmatpush1.msra.mxu0 0.0
      %1068 = vmatprep.subr.mxu0 0.0
      %1069 = vmatpush1.msra.mxu0 0.0
      %1070 = vmatprep.subr.mxu0 0.0
      %1071 = vmatpush1.msra.mxu0 0.0
      %1072 = vmatprep.subr.mxu0 0.0
      %1073 = vmatpush1.msra.mxu0 0.0
      %1074 = vmatprep.subr.mxu0 0.0
      %1075 = vmatpush1.msra.mxu0 0.0
      %1076 = vmatprep.subr.mxu0 0.0
      %1077 = vmatpush1.msra.mxu0 0.0
      %1078 = vmatprep.subr.mxu0 0.0
      %1079 = vmatpush1.msra.mxu0 0.0
      %1080 = vmatprep.subr.mxu0 0.0
      %1081 = vmatpush1.msra.mxu0 0.0
      %1082 = vmatprep.subr.mxu0 0.0
      %1083 = vmatpush1.msra.mxu0 0.0
      %1084 = vmatprep.subr.mxu0 0.0
      %1085 = vmatpush1.msra.mxu0 0.0
      %1086 = vmatprep.subr.mxu0 0.0
      %1087 = vmatpush1.msra.mxu0 0.0
      %1088 = vmatprep.subr.mxu0 0.0
      %1089 = vmatpush1.msra.mxu0 0.0
      %1090 = vmatprep.subr.mxu0 0.0
      %1091 = vmatpush1.msra.mxu0 0.0
      %1092 = vmatprep.subr.mxu0 0.0
      %1093 = vmatpush1.msra.mxu0 0.0
      %1094 = vmatprep.mubr.f32.mxu0 0.0
      %1095 = vmatmul.mubr.f32.gmra.mrb[0].mxu0 %v901
      %v1096 = vpop.f32.mrb[0].mxu0
      %v1097 = vadd.f32 %v1022, %v1096
      %v1098 = vpop.f32.mrb[0].mxu0
      %1099 = vmatprep.mubr.f32.mxu0 0.0
      %1100 = vmatmul.mubr.f32.gmra.mrb[0].mxu0 %v904
      %v1101 = vpop.f32.mrb[0].mxu0
      %v1102 = vadd.f32 %v1027, %v1101
      %v1103 = vpop.f32.mrb[0].mxu0
      %1104 = vdwg.mxu0
      %v1105 = vld [vmem:[%s832] sm:$0x1]
      %v1106 = vld [vmem:[%s836] sm:$0x1]
      %vm1107 = vcmask 261120
      %v1108 = vsel %vm1107, %v1097, 0.0
      %1109 = vadd.xlane.f32.xlu0 %v1108
      %v1110 = vpop.xlane.xlu0 %1109
      %v1111 = vsel %vm1107, %v1102, 0.0
      %1112 = vadd.xlane.f32.xlu0 %v1111
      %v1113 = vpop.xlane.xlu0 %1112
      %v1114 = vrcp.pop 32.0
      %v1115 = vmul.f32 %v1110, %v1114
      %v1116 = vmul.f32 %v1113, %v1114
      %v1117 = vsub.f32 %v1097, %v1115
      %v1118 = vsub.f32 %v1102, %v1116
      %v1119 = vmul.f32 %v1117, %v1117
      %v1120 = vmul.f32 %v1118, %v1118
      %v1121 = vsel %vm1107, %v1119, 0.0
      %1122 = vadd.xlane.f32.xlu0 %v1121
      %v1123 = vpop.xlane.xlu0 %1122
      %v1124 = vsel %vm1107, %v1120, 0.0
      %1125 = vadd.xlane.f32.xlu0 %v1124
      %v1126 = vpop.xlane.xlu0 %1125
      %v1127 = vmul.f32 %v1123, %v1114
      %v1128 = vmul.f32 %v1126, %v1114
      %v1129 = vadd.f32 %v1127, 1e-06
      %v1130 = vadd.f32 %v1128, 1e-06
      %v1131 = vrsqrt.pop %v1129
      %v1132 = vrsqrt.pop %v1130
      %v1133 = vmul.f32 %v1117, %v1131
      %v1134 = vmul.f32 %v1118, %v1132
      %v1136 = vlaneseq
      %v1137 = vshrl.u32 %v1136, 7
      %v1138 = vsub.s32 0, %v1137
      %v1139 = vrot.slane %v1105, %v1138
      %v1141 = vmul.f32 %v1133, %v1139
      %v1142 = vmul.f32 %v1134, %v1139
      %v1144 = vlaneseq
      %v1145 = vshrl.u32 %v1144, 7
      %v1146 = vsub.s32 0, %v1145
      %v1147 = vrot.slane %v1106, %v1146
      %v1149 = vadd.f32 %v1141, %v1147
      %v1150 = vadd.f32 %v1142, %v1147
      %v1151 = vld [vmem:[%s841] sm:$0xff]
      %v1152 = vld [vmem:[%s841 + $0x8] sm:$0xff]
      %v1153 = vld [vmem:[%s841 + $0x10] sm:$0xff]
      %v1154 = vld [vmem:[%s841 + $0x18] sm:$0xff]
      %v1155 = vld [vmem:[%s845] sm:$0x1]
      %v1157 = vlaneseq
      %v1158 = vshrl.u32 %v1157, 7
      %v1159 = vsub.s32 0, %v1158
      %v1160 = vrot.slane %v1155, %v1159
      %v1163 = vsel %vm1107, %v1149, 0
      %v1166 = vsel %vm1107, %v1150, 0
      %1168 = vmatprep.subr.mxu0 0.0
      %1169 = vmatpush1.msra.mxu0 %v1151
      %1170 = vmatprep.subr.mxu0 0.0
      %1171 = vmatpush1.msra.mxu0 %v1152
      %1172 = vmatprep.subr.mxu0 0.0
      %1173 = vmatpush1.msra.mxu0 %v1153
      %1174 = vmatprep.subr.mxu0 0.0
      %1175 = vmatpush1.msra.mxu0 %v1154
      %1176 = vmatprep.subr.mxu0 0.0
      %1177 = vmatpush1.msra.mxu0 0.0
      %1178 = vmatprep.subr.mxu0 0.0
      %1179 = vmatpush1.msra.mxu0 0.0
      %1180 = vmatprep.subr.mxu0 0.0
      %1181 = vmatpush1.msra.mxu0 0.0
      %1182 = vmatprep.subr.mxu0 0.0
      %1183 = vmatpush1.msra.mxu0 0.0
      %1184 = vmatprep.subr.mxu0 0.0
      %1185 = vmatpush1.msra.mxu0 0.0
      %1186 = vmatprep.subr.mxu0 0.0
      %1187 = vmatpush1.msra.mxu0 0.0
      %1188 = vmatprep.subr.mxu0 0.0
      %1189 = vmatpush1.msra.mxu0 0.0
      %1190 = vmatprep.subr.mxu0 0.0
      %1191 = vmatpush1.msra.mxu0 0.0
      %1192 = vmatprep.subr.mxu0 0.0
      %1193 = vmatpush1.msra.mxu0 0.0
      %1194 = vmatprep.subr.mxu0 0.0
      %1195 = vmatpush1.msra.mxu0 0.0
      %1196 = vmatprep.subr.mxu0 0.0
      %1197 = vmatpush1.msra.mxu0 0.0
      %1198 = vmatprep.subr.mxu0 0.0
      %1199 = vmatpush1.msra.mxu0 0.0
      %1200 = vmatprep.subr.mxu0 0.0
      %1201 = vmatpush1.msra.mxu0 0.0
      %1202 = vmatprep.subr.mxu0 0.0
      %1203 = vmatpush1.msra.mxu0 0.0
      %1204 = vmatprep.subr.mxu0 0.0
      %1205 = vmatpush1.msra.mxu0 0.0
      %1206 = vmatprep.subr.mxu0 0.0
      %1207 = vmatpush1.msra.mxu0 0.0
      %1208 = vmatprep.subr.mxu0 0.0
      %1209 = vmatpush1.msra.mxu0 0.0
      %1210 = vmatprep.subr.mxu0 0.0
      %1211 = vmatpush1.msra.mxu0 0.0
      %1212 = vmatprep.subr.mxu0 0.0
      %1213 = vmatpush1.msra.mxu0 0.0
      %1214 = vmatprep.subr.mxu0 0.0
      %1215 = vmatpush1.msra.mxu0 0.0
      %1216 = vmatprep.subr.mxu0 0.0
      %1217 = vmatpush1.msra.mxu0 0.0
      %1218 = vmatprep.subr.mxu0 0.0
      %1219 = vmatpush1.msra.mxu0 0.0
      %1220 = vmatprep.subr.mxu0 0.0
      %1221 = vmatpush1.msra.mxu0 0.0
      %1222 = vmatprep.subr.mxu0 0.0
      %1223 = vmatpush1.msra.mxu0 0.0
      %1224 = vmatprep.subr.mxu0 0.0
      %1225 = vmatpush1.msra.mxu0 0.0
      %1226 = vmatprep.subr.mxu0 0.0
      %1227 = vmatpush1.msra.mxu0 0.0
      %1228 = vmatprep.subr.mxu0 0.0
      %1229 = vmatpush1.msra.mxu0 0.0
      %1230 = vmatprep.subr.mxu0 0.0
      %1231 = vmatpush1.msra.mxu0 0.0
      %1232 = vmatprep.mubr.f32.mxu0 0.0
      %1233 = vmatmul.mubr.f32.gmra.mrb[0].mxu0 %v1163
      %v1234 = vpop.f32.mrb[0].mxu0
      %v1235 = vadd.f32 %v1160, %v1234
      %v1236 = vpop.f32.mrb[0].mxu0
      %1237 = vmatprep.mubr.f32.mxu0 0.0
      %1238 = vmatmul.mubr.f32.gmra.mrb[0].mxu0 %v1166
      %v1239 = vpop.f32.mrb[0].mxu0
      %v1240 = vadd.f32 %v1160, %v1239
      %v1241 = vpop.f32.mrb[0].mxu0
      %1242 = vdwg.mxu0
      %1244 = vrot.lane.b32.xlu0 %v1235, 96
      %v1245 = vpop.permute.xlu0 %1244
      %vm1246 = vcmask 64512
      %v1247 = vsel %vm1246, %v1235, 0
      %v1249 = vsel %vm1246, %v1245, 0
      %1251 = vmatprep.subr.mxu0 0.0
      %1252 = vmatpush1.xpose.msra.mxu0 %v1249
      %1253 = vmatprep.subr.mxu0 0.0
      %1254 = vmatpush1.xpose.msra.mxu0 0.0
      %1255 = vmatprep.subr.mxu0 0.0
      %1256 = vmatpush1.xpose.msra.mxu0 0.0
      %1257 = vmatprep.subr.mxu0 0.0
      %1258 = vmatpush1.xpose.msra.mxu0 0.0
      %1259 = vmatprep.subr.mxu0 0.0
      %1260 = vmatpush1.xpose.msra.mxu0 0.0
      %1261 = vmatprep.subr.mxu0 0.0
      %1262 = vmatpush1.xpose.msra.mxu0 0.0
      %1263 = vmatprep.subr.mxu0 0.0
      %1264 = vmatpush1.xpose.msra.mxu0 0.0
      %1265 = vmatprep.subr.mxu0 0.0
      %1266 = vmatpush1.xpose.msra.mxu0 0.0
      %1267 = vmatprep.subr.mxu0 0.0
      %1268 = vmatpush1.xpose.msra.mxu0 0.0
      %1269 = vmatprep.subr.mxu0 0.0
      %1270 = vmatpush1.xpose.msra.mxu0 0.0
      %1271 = vmatprep.subr.mxu0 0.0
      %1272 = vmatpush1.xpose.msra.mxu0 0.0
      %1273 = vmatprep.subr.mxu0 0.0
      %1274 = vmatpush1.xpose.msra.mxu0 0.0
      %1275 = vmatprep.subr.mxu0 0.0
      %1276 = vmatpush1.xpose.msra.mxu0 0.0
      %1277 = vmatprep.subr.mxu0 0.0
      %1278 = vmatpush1.xpose.msra.mxu0 0.0
      %1279 = vmatprep.subr.mxu0 0.0
      %1280 = vmatpush1.xpose.msra.mxu0 0.0
      %1281 = vmatprep.subr.mxu0 0.0
      %1282 = vmatpush1.xpose.msra.mxu0 0.0
      %1283 = vmatprep.subr.mxu0 0.0
      %1284 = vmatpush1.xpose.msra.mxu0 0.0
      %1285 = vmatprep.subr.mxu0 0.0
      %1286 = vmatpush1.xpose.msra.mxu0 0.0
      %1287 = vmatprep.subr.mxu0 0.0
      %1288 = vmatpush1.xpose.msra.mxu0 0.0
      %1289 = vmatprep.subr.mxu0 0.0
      %1290 = vmatpush1.xpose.msra.mxu0 0.0
      %1291 = vmatprep.subr.mxu0 0.0
      %1292 = vmatpush1.xpose.msra.mxu0 0.0
      %1293 = vmatprep.subr.mxu0 0.0
      %1294 = vmatpush1.xpose.msra.mxu0 0.0
      %1295 = vmatprep.subr.mxu0 0.0
      %1296 = vmatpush1.xpose.msra.mxu0 0.0
      %1297 = vmatprep.subr.mxu0 0.0
      %1298 = vmatpush1.xpose.msra.mxu0 0.0
      %1299 = vmatprep.subr.mxu0 0.0
      %1300 = vmatpush1.xpose.msra.mxu0 0.0
      %1301 = vmatprep.subr.mxu0 0.0
      %1302 = vmatpush1.xpose.msra.mxu0 0.0
      %1303 = vmatprep.subr.mxu0 0.0
      %1304 = vmatpush1.xpose.msra.mxu0 0.0
      %1305 = vmatprep.subr.mxu0 0.0
      %1306 = vmatpush1.xpose.msra.mxu0 0.0
      %1307 = vmatprep.subr.mxu0 0.0
      %1308 = vmatpush1.xpose.msra.mxu0 0.0
      %1309 = vmatprep.subr.mxu0 0.0
      %1310 = vmatpush1.xpose.msra.mxu0 0.0
      %1311 = vmatprep.subr.mxu0 0.0
      %1312 = vmatpush1.xpose.msra.mxu0 0.0
      %1313 = vmatprep.subr.mxu0 0.0
      %1314 = vmatpush1.xpose.msra.mxu0 0.0
      %1315 = vmatprep.mubr.f32.mxu0 0.0
      %1316 = vmatmul.mubr.f32.gmra.mrb[0].mxu0 %v1247
      %v1317 = vpop.f32.mrb[0].mxu0
      %v1318 = vadd.f32 0.0, %v1317
      %v1319 = vpop.f32.mrb[0].mxu0
      %1320 = vdwg.mxu0
      %v1321 = vsel %vm1246, %v1318, -inf
      %1322 = vmax.xlane.f32.xlu0 %v1321
      %v1323 = vpop.xlane.xlu0 %1322
      %v1324 = vsub.f32 %v1318, %v1323
      %v1325 = vmul.f32 %v1324, 1.442695
      %v1326 = vpow.pop %v1325
      %v1327 = vsel %vm1246, %v1326, 0.0
      %1328 = vadd.xlane.f32.xlu0 %v1327
      %v1329 = vpop.xlane.xlu0 %1328
      %v1330 = vrcp.pop %v1329
      %v1331 = vmul.f32 %v1326, %v1330
      %1332 = vrot.lane.b32.xlu0 %v1235, 64
      %v1333 = vpop.permute.xlu0 %1332
      %v1336 = vsel %vm1246, %v1331, 0
      %1338 = vmatprep.subr.mxu0 0.0
      %1339 = vmatpush1.msra.mxu0 %v1333
      %1340 = vmatprep.subr.mxu0 0.0
      %1341 = vmatpush1.msra.mxu0 0.0
      %1342 = vmatprep.subr.mxu0 0.0
      %1343 = vmatpush1.msra.mxu0 0.0
      %1344 = vmatprep.subr.mxu0 0.0
      %1345 = vmatpush1.msra.mxu0 0.0
      %1346 = vmatprep.subr.mxu0 0.0
      %1347 = vmatpush1.msra.mxu0 0.0
      %1348 = vmatprep.subr.mxu0 0.0
      %1349 = vmatpush1.msra.mxu0 0.0
      %1350 = vmatprep.subr.mxu0 0.0
      %1351 = vmatpush1.msra.mxu0 0.0
      %1352 = vmatprep.subr.mxu0 0.0
      %1353 = vmatpush1.msra.mxu0 0.0
      %1354 = vmatprep.subr.mxu0 0.0
      %1355 = vmatpush1.msra.mxu0 0.0
      %1356 = vmatprep.subr.mxu0 0.0
      %1357 = vmatpush1.msra.mxu0 0.0
      %1358 = vmatprep.subr.mxu0 0.0
      %1359 = vmatpush1.msra.mxu0 0.0
      %1360 = vmatprep.subr.mxu0 0.0
      %1361 = vmatpush1.msra.mxu0 0.0
      %1362 = vmatprep.subr.mxu0 0.0
      %1363 = vmatpush1.msra.mxu0 0.0
      %1364 = vmatprep.subr.mxu0 0.0
      %1365 = vmatpush1.msra.mxu0 0.0
      %1366 = vmatprep.subr.mxu0 0.0
      %1367 = vmatpush1.msra.mxu0 0.0
      %1368 = vmatprep.subr.mxu0 0.0
      %1369 = vmatpush1.msra.mxu0 0.0
      %1370 = vmatprep.subr.mxu0 0.0
      %1371 = vmatpush1.msra.mxu0 0.0
      %1372 = vmatprep.subr.mxu0 0.0
      %1373 = vmatpush1.msra.mxu0 0.0
      %1374 = vmatprep.subr.mxu0 0.0
      %1375 = vmatpush1.msra.mxu0 0.0
      %1376 = vmatprep.subr.mxu0 0.0
      %1377 = vmatpush1.msra.mxu0 0.0
      %1378 = vmatprep.subr.mxu0 0.0
      %1379 = vmatpush1.msra.mxu0 0.0
      %1380 = vmatprep.subr.mxu0 0.0
      %1381 = vmatpush1.msra.mxu0 0.0
      %1382 = vmatprep.subr.mxu0 0.0
      %1383 = vmatpush1.msra.mxu0 0.0
      %1384 = vmatprep.subr.mxu0 0.0
      %1385 = vmatpush1.msra.mxu0 0.0
      %1386 = vmatprep.subr.mxu0 0.0
      %1387 = vmatpush1.msra.mxu0 0.0
      %1388 = vmatprep.subr.mxu0 0.0
      %1389 = vmatpush1.msra.mxu0 0.0
      %1390 = vmatprep.subr.mxu0 0.0
      %1391 = vmatpush1.msra.mxu0 0.0
      %1392 = vmatprep.subr.mxu0 0.0
      %1393 = vmatpush1.msra.mxu0 0.0
      %1394 = vmatprep.subr.mxu0 0.0
      %1395 = vmatpush1.msra.mxu0 0.0
      %1396 = vmatprep.subr.mxu0 0.0
      %1397 = vmatpush1.msra.mxu0 0.0
      %1398 = vmatprep.subr.mxu0 0.0
      %1399 = vmatpush1.msra.mxu0 0.0
      %1400 = vmatprep.subr.mxu0 0.0
      %1401 = vmatpush1.msra.mxu0 0.0
      %1402 = vmatprep.mubr.f32.mxu0 0.0
      %1403 = vmatmul.mubr.f32.gmra.mrb[0].mxu0 %v1336
      %v1404 = vpop.f32.mrb[0].mxu0
      %v1405 = vadd.f32 0.0, %v1404
      %v1406 = vpop.f32.mrb[0].mxu0
      %1407 = vdwg.mxu0
      %1408 = vrot.lane.b32.xlu0 %v1235, 120
      %v1409 = vpop.permute.xlu0 %1408
      %1410 = vrot.lane.b32.xlu0 %v1235, 88
      %v1411 = vpop.permute.xlu0 %1410
      %v1412 = vsel %vm1246, %v1409, 0
      %v1414 = vsel %vm1246, %v1411, 0
      %1416 = vmatprep.subr.mxu0 0.0
      %1417 = vmatpush1.xpose.msra.mxu0 %v1414
      %1418 = vmatprep.subr.mxu0 0.0
      %1419 = vmatpush1.xpose.msra.mxu0 0.0
      %1420 = vmatprep.subr.mxu0 0.0
      %1421 = vmatpush1.xpose.msra.mxu0 0.0
      %1422 = vmatprep.subr.mxu0 0.0
      %1423 = vmatpush1.xpose.msra.mxu0 0.0
      %1424 = vmatprep.subr.mxu0 0.0
      %1425 = vmatpush1.xpose.msra.mxu0 0.0
      %1426 = vmatprep.subr.mxu0 0.0
      %1427 = vmatpush1.xpose.msra.mxu0 0.0
      %1428 = vmatprep.subr.mxu0 0.0
      %1429 = vmatpush1.xpose.msra.mxu0 0.0
      %1430 = vmatprep.subr.mxu0 0.0
      %1431 = vmatpush1.xpose.msra.mxu0 0.0
      %1432 = vmatprep.subr.mxu0 0.0
      %1433 = vmatpush1.xpose.msra.mxu0 0.0
      %1434 = vmatprep.subr.mxu0 0.0
      %1435 = vmatpush1.xpose.msra.mxu0 0.0
      %1436 = vmatprep.subr.mxu0 0.0
      %1437 = vmatpush1.xpose.msra.mxu0 0.0
      %1438 = vmatprep.subr.mxu0 0.0
      %1439 = vmatpush1.xpose.msra.mxu0 0.0
      %1440 = vmatprep.subr.mxu0 0.0
      %1441 = vmatpush1.xpose.msra.mxu0 0.0
      %1442 = vmatprep.subr.mxu0 0.0
      %1443 = vmatpush1.xpose.msra.mxu0 0.0
      %1444 = vmatprep.subr.mxu0 0.0
      %1445 = vmatpush1.xpose.msra.mxu0 0.0
      %1446 = vmatprep.subr.mxu0 0.0
      %1447 = vmatpush1.xpose.msra.mxu0 0.0
      %1448 = vmatprep.subr.mxu0 0.0
      %1449 = vmatpush1.xpose.msra.mxu0 0.0
      %1450 = vmatprep.subr.mxu0 0.0
      %1451 = vmatpush1.xpose.msra.mxu0 0.0
      %1452 = vmatprep.subr.mxu0 0.0
      %1453 = vmatpush1.xpose.msra.mxu0 0.0
      %1454 = vmatprep.subr.mxu0 0.0
      %1455 = vmatpush1.xpose.msra.mxu0 0.0
      %1456 = vmatprep.subr.mxu0 0.0
      %1457 = vmatpush1.xpose.msra.mxu0 0.0
      %1458 = vmatprep.subr.mxu0 0.0
      %1459 = vmatpush1.xpose.msra.mxu0 0.0
      %1460 = vmatprep.subr.mxu0 0.0
      %1461 = vmatpush1.xpose.msra.mxu0 0.0
      %1462 = vmatprep.subr.mxu0 0.0
      %1463 = vmatpush1.xpose.msra.mxu0 0.0
      %1464 = vmatprep.subr.mxu0 0.0
      %1465 = vmatpush1.xpose.msra.mxu0 0.0
      %1466 = vmatprep.subr.mxu0 0.0
      %1467 = vmatpush1.xpose.msra.mxu0 0.0
      %1468 = vmatprep.subr.mxu0 0.0
      %1469 = vmatpush1.xpose.msra.mxu0 0.0
      %1470 = vmatprep.subr.mxu0 0.0
      %1471 = vmatpush1.xpose.msra.mxu0 0.0
      %1472 = vmatprep.subr.mxu0 0.0
      %1473 = vmatpush1.xpose.msra.mxu0 0.0
      %1474 = vmatprep.subr.mxu0 0.0
      %1475 = vmatpush1.xpose.msra.mxu0 0.0
      %1476 = vmatprep.subr.mxu0 0.0
      %1477 = vmatpush1.xpose.msra.mxu0 0.0
      %1478 = vmatprep.subr.mxu0 0.0
      %1479 = vmatpush1.xpose.msra.mxu0 0.0
      %1480 = vmatprep.mubr.f32.mxu0 0.0
      %1481 = vmatmul.mubr.f32.gmra.mrb[0].mxu0 %v1412
      %v1482 = vpop.f32.mrb[0].mxu0
      %v1483 = vadd.f32 0.0, %v1482
      %v1484 = vpop.f32.mrb[0].mxu0
      %1485 = vdwg.mxu0
      %v1486 = vsel %vm1246, %v1483, -inf
      %1487 = vmax.xlane.f32.xlu0 %v1486
      %v1488 = vpop.xlane.xlu0 %1487
      %v1489 = vsub.f32 %v1483, %v1488
      %v1490 = vmul.f32 %v1489, 1.442695
      %v1491 = vpow.pop %v1490
      %v1492 = vsel %vm1246, %v1491, 0.0
      %1493 = vadd.xlane.f32.xlu0 %v1492
      %v1494 = vpop.xlane.xlu0 %1493
      %v1495 = vrcp.pop %v1494
      %v1496 = vmul.f32 %v1491, %v1495
      %1497 = vrot.lane.b32.xlu0 %v1235, 56
      %v1498 = vpop.permute.xlu0 %1497
      %v1501 = vsel %vm1246, %v1496, 0
      %1503 = vmatprep.subr.mxu0 0.0
      %1504 = vmatpush1.msra.mxu0 %v1498
      %1505 = vmatprep.subr.mxu0 0.0
      %1506 = vmatpush1.msra.mxu0 0.0
      %1507 = vmatprep.subr.mxu0 0.0
      %1508 = vmatpush1.msra.mxu0 0.0
      %1509 = vmatprep.subr.mxu0 0.0
      %1510 = vmatpush1.msra.mxu0 0.0
      %1511 = vmatprep.subr.mxu0 0.0
      %1512 = vmatpush1.msra.mxu0 0.0
      %1513 = vmatprep.subr.mxu0 0.0
      %1514 = vmatpush1.msra.mxu0 0.0
      %1515 = vmatprep.subr.mxu0 0.0
      %1516 = vmatpush1.msra.mxu0 0.0
      %1517 = vmatprep.subr.mxu0 0.0
      %1518 = vmatpush1.msra.mxu0 0.0
      %1519 = vmatprep.subr.mxu0 0.0
      %1520 = vmatpush1.msra.mxu0 0.0
      %1521 = vmatprep.subr.mxu0 0.0
      %1522 = vmatpush1.msra.mxu0 0.0
      %1523 = vmatprep.subr.mxu0 0.0
      %1524 = vmatpush1.msra.mxu0 0.0
      %1525 = vmatprep.subr.mxu0 0.0
      %1526 = vmatpush1.msra.mxu0 0.0
      %1527 = vmatprep.subr.mxu0 0.0
      %1528 = vmatpush1.msra.mxu0 0.0
      %1529 = vmatprep.subr.mxu0 0.0
      %1530 = vmatpush1.msra.mxu0 0.0
      %1531 = vmatprep.subr.mxu0 0.0
      %1532 = vmatpush1.msra.mxu0 0.0
      %1533 = vmatprep.subr.mxu0 0.0
      %1534 = vmatpush1.msra.mxu0 0.0
      %1535 = vmatprep.subr.mxu0 0.0
      %1536 = vmatpush1.msra.mxu0 0.0
      %1537 = vmatprep.subr.mxu0 0.0
      %1538 = vmatpush1.msra.mxu0 0.0
      %1539 = vmatprep.subr.mxu0 0.0
      %1540 = vmatpush1.msra.mxu0 0.0
      %1541 = vmatprep.subr.mxu0 0.0
      %1542 = vmatpush1.msra.mxu0 0.0
      %1543 = vmatprep.subr.mxu0 0.0
      %1544 = vmatpush1.msra.mxu0 0.0
      %1545 = vmatprep.subr.mxu0 0.0
      %1546 = vmatpush1.msra.mxu0 0.0
      %1547 = vmatprep.subr.mxu0 0.0
      %1548 = vmatpush1.msra.mxu0 0.0
      %1549 = vmatprep.subr.mxu0 0.0
      %1550 = vmatpush1.msra.mxu0 0.0
      %1551 = vmatprep.subr.mxu0 0.0
      %1552 = vmatpush1.msra.mxu0 0.0
      %1553 = vmatprep.subr.mxu0 0.0
      %1554 = vmatpush1.msra.mxu0 0.0
      %1555 = vmatprep.subr.mxu0 0.0
      %1556 = vmatpush1.msra.mxu0 0.0
      %1557 = vmatprep.subr.mxu0 0.0
      %1558 = vmatpush1.msra.mxu0 0.0
      %1559 = vmatprep.subr.mxu0 0.0
      %1560 = vmatpush1.msra.mxu0 0.0
      %1561 = vmatprep.subr.mxu0 0.0
      %1562 = vmatpush1.msra.mxu0 0.0
      %1563 = vmatprep.subr.mxu0 0.0
      %1564 = vmatpush1.msra.mxu0 0.0
      %1565 = vmatprep.subr.mxu0 0.0
      %1566 = vmatpush1.msra.mxu0 0.0
      %1567 = vmatprep.mubr.f32.mxu0 0.0
      %1568 = vmatmul.mubr.f32.gmra.mrb[0].mxu0 %v1501
      %v1569 = vpop.f32.mrb[0].mxu0
      %v1570 = vadd.f32 0.0, %v1569
      %v1571 = vpop.f32.mrb[0].mxu0
      %1572 = vdwg.mxu0
      %1573 = vrot.lane.b32.xlu0 %v1235, 112
      %v1574 = vpop.permute.xlu0 %1573
      %1575 = vrot.lane.b32.xlu0 %v1235, 80
      %v1576 = vpop.permute.xlu0 %1575
      %v1577 = vsel %vm1246, %v1574, 0
      %v1579 = vsel %vm1246, %v1576, 0
      %1581 = vmatprep.subr.mxu0 0.0
      %1582 = vmatpush1.xpose.msra.mxu0 %v1579
      %1583 = vmatprep.subr.mxu0 0.0
      %1584 = vmatpush1.xpose.msra.mxu0 0.0
      %1585 = vmatprep.subr.mxu0 0.0
      %1586 = vmatpush1.xpose.msra.mxu0 0.0
      %1587 = vmatprep.subr.mxu0 0.0
      %1588 = vmatpush1.xpose.msra.mxu0 0.0
      %1589 = vmatprep.subr.mxu0 0.0
      %1590 = vmatpush1.xpose.msra.mxu0 0.0
      %1591 = vmatprep.subr.mxu0 0.0
      %1592 = vmatpush1.xpose.msra.mxu0 0.0
      %1593 = vmatprep.subr.mxu0 0.0
      %1594 = vmatpush1.xpose.msra.mxu0 0.0
      %1595 = vmatprep.subr.mxu0 0.0
      %1596 = vmatpush1.xpose.msra.mxu0 0.0
      %1597 = vmatprep.subr.mxu0 0.0
      %1598 = vmatpush1.xpose.msra.mxu0 0.0
      %1599 = vmatprep.subr.mxu0 0.0
      %1600 = vmatpush1.xpose.msra.mxu0 0.0
      %1601 = vmatprep.subr.mxu0 0.0
      %1602 = vmatpush1.xpose.msra.mxu0 0.0
      %1603 = vmatprep.subr.mxu0 0.0
      %1604 = vmatpush1.xpose.msra.mxu0 0.0
      %1605 = vmatprep.subr.mxu0 0.0
      %1606 = vmatpush1.xpose.msra.mxu0 0.0
      %1607 = vmatprep.subr.mxu0 0.0
      %1608 = vmatpush1.xpose.msra.mxu0 0.0
      %1609 = vmatprep.subr.mxu0 0.0
      %1610 = vmatpush1.xpose.msra.mxu0 0.0
      %1611 = vmatprep.subr.mxu0 0.0
      %1612 = vmatpush1.xpose.msra.mxu0 0.0
      %1613 = vmatprep.subr.mxu0 0.0
      %1614 = vmatpush1.xpose.msra.mxu0 0.0
      %1615 = vmatprep.subr.mxu0 0.0
      %1616 = vmatpush1.xpose.msra.mxu0 0.0
      %1617 = vmatprep.subr.mxu0 0.0
      %1618 = vmatpush1.xpose.msra.mxu0 0.0
      %1619 = vmatprep.subr.mxu0 0.0
      %1620 = vmatpush1.xpose.msra.mxu0 0.0
      %1621 = vmatprep.subr.mxu0 0.0
      %1622 = vmatpush1.xpose.msra.mxu0 0.0
      %1623 = vmatprep.subr.mxu0 0.0
      %1624 = vmatpush1.xpose.msra.mxu0 0.0
      %1625 = vmatprep.subr.mxu0 0.0
      %1626 = vmatpush1.xpose.msra.mxu0 0.0
      %1627 = vmatprep.subr.mxu0 0.0
      %1628 = vmatpush1.xpose.msra.mxu0 0.0
      %1629 = vmatprep.subr.mxu0 0.0
      %1630 = vmatpush1.xpose.msra.mxu0 0.0
      %1631 = vmatprep.subr.mxu0 0.0
      %1632 = vmatpush1.xpose.msra.mxu0 0.0
      %1633 = vmatprep.subr.mxu0 0.0
      %1634 = vmatpush1.xpose.msra.mxu0 0.0
      %1635 = vmatprep.subr.mxu0 0.0
      %1636 = vmatpush1.xpose.msra.mxu0 0.0
      %1637 = vmatprep.subr.mxu0 0.0
      %1638 = vmatpush1.xpose.msra.mxu0 0.0
      %1639 = vmatprep.subr.mxu0 0.0
      %1640 = vmatpush1.xpose.msra.mxu0 0.0
      %1641 = vmatprep.subr.mxu0 0.0
      %1642 = vmatpush1.xpose.msra.mxu0 0.0
      %1643 = vmatprep.subr.mxu0 0.0
      %1644 = vmatpush1.xpose.msra.mxu0 0.0
      %1645 = vmatprep.mubr.f32.mxu0 0.0
      %1646 = vmatmul.mubr.f32.gmra.mrb[0].mxu0 %v1577
      %v1647 = vpop.f32.mrb[0].mxu0
      %v1648 = vadd.f32 0.0, %v1647
      %v1649 = vpop.f32.mrb[0].mxu0
      %1650 = vdwg.mxu0
      %v1651 = vsel %vm1246, %v1648, -inf
      %1652 = vmax.xlane.f32.xlu0 %v1651
      %v1653 = vpop.xlane.xlu0 %1652
      %v1654 = vsub.f32 %v1648, %v1653
      %v1655 = vmul.f32 %v1654, 1.442695
      %v1656 = vpow.pop %v1655
      %v1657 = vsel %vm1246, %v1656, 0.0
      %1658 = vadd.xlane.f32.xlu0 %v1657
      %v1659 = vpop.xlane.xlu0 %1658
      %v1660 = vrcp.pop %v1659
      %v1661 = vmul.f32 %v1656, %v1660
      %1662 = vrot.lane.b32.xlu0 %v1235, 48
      %v1663 = vpop.permute.xlu0 %1662
      %v1666 = vsel %vm1246, %v1661, 0
      %1668 = vmatprep.subr.mxu0 0.0
      %1669 = vmatpush1.msra.mxu0 %v1663
      %1670 = vmatprep.subr.mxu0 0.0
      %1671 = vmatpush1.msra.mxu0 0.0
      %1672 = vmatprep.subr.mxu0 0.0
      %1673 = vmatpush1.msra.mxu0 0.0
      %1674 = vmatprep.subr.mxu0 0.0
      %1675 = vmatpush1.msra.mxu0 0.0
      %1676 = vmatprep.subr.mxu0 0.0
      %1677 = vmatpush1.msra.mxu0 0.0
      %1678 = vmatprep.subr.mxu0 0.0
      %1679 = vmatpush1.msra.mxu0 0.0
      %1680 = vmatprep.subr.mxu0 0.0
      %1681 = vmatpush1.msra.mxu0 0.0
      %1682 = vmatprep.subr.mxu0 0.0
      %1683 = vmatpush1.msra.mxu0 0.0
      %1684 = vmatprep.subr.mxu0 0.0
      %1685 = vmatpush1.msra.mxu0 0.0
      %1686 = vmatprep.subr.mxu0 0.0
      %1687 = vmatpush1.msra.mxu0 0.0
      %1688 = vmatprep.subr.mxu0 0.0
      %1689 = vmatpush1.msra.mxu0 0.0
      %1690 = vmatprep.subr.mxu0 0.0
      %1691 = vmatpush1.msra.mxu0 0.0
      %1692 = vmatprep.subr.mxu0 0.0
      %1693 = vmatpush1.msra.mxu0 0.0
      %1694 = vmatprep.subr.mxu0 0.0
      %1695 = vmatpush1.msra.mxu0 0.0
      %1696 = vmatprep.subr.mxu0 0.0
      %1697 = vmatpush1.msra.mxu0 0.0
      %1698 = vmatprep.subr.mxu0 0.0
      %1699 = vmatpush1.msra.mxu0 0.0
      %1700 = vmatprep.subr.mxu0 0.0
      %1701 = vmatpush1.msra.mxu0 0.0
      %1702 = vmatprep.subr.mxu0 0.0
      %1703 = vmatpush1.msra.mxu0 0.0
      %1704 = vmatprep.subr.mxu0 0.0
      %1705 = vmatpush1.msra.mxu0 0.0
      %1706 = vmatprep.subr.mxu0 0.0
      %1707 = vmatpush1.msra.mxu0 0.0
      %1708 = vmatprep.subr.mxu0 0.0
      %1709 = vmatpush1.msra.mxu0 0.0
      %1710 = vmatprep.subr.mxu0 0.0
      %1711 = vmatpush1.msra.mxu0 0.0
      %1712 = vmatprep.subr.mxu0 0.0
      %1713 = vmatpush1.msra.mxu0 0.0
      %1714 = vmatprep.subr.mxu0 0.0
      %1715 = vmatpush1.msra.mxu0 0.0
      %1716 = vmatprep.subr.mxu0 0.0
      %1717 = vmatpush1.msra.mxu0 0.0
      %1718 = vmatprep.subr.mxu0 0.0
      %1719 = vmatpush1.msra.mxu0 0.0
      %1720 = vmatprep.subr.mxu0 0.0
      %1721 = vmatpush1.msra.mxu0 0.0
      %1722 = vmatprep.subr.mxu0 0.0
      %1723 = vmatpush1.msra.mxu0 0.0
      %1724 = vmatprep.subr.mxu0 0.0
      %1725 = vmatpush1.msra.mxu0 0.0
      %1726 = vmatprep.subr.mxu0 0.0
      %1727 = vmatpush1.msra.mxu0 0.0
      %1728 = vmatprep.subr.mxu0 0.0
      %1729 = vmatpush1.msra.mxu0 0.0
      %1730 = vmatprep.subr.mxu0 0.0
      %1731 = vmatpush1.msra.mxu0 0.0
      %1732 = vmatprep.mubr.f32.mxu0 0.0
      %1733 = vmatmul.mubr.f32.gmra.mrb[0].mxu0 %v1666
      %v1734 = vpop.f32.mrb[0].mxu0
      %v1735 = vadd.f32 0.0, %v1734
      %v1736 = vpop.f32.mrb[0].mxu0
      %1737 = vdwg.mxu0
      %1738 = vrot.lane.b32.xlu0 %v1235, 104
      %v1739 = vpop.permute.xlu0 %1738
      %1740 = vrot.lane.b32.xlu0 %v1235, 72
      %v1741 = vpop.permute.xlu0 %1740
      %v1742 = vsel %vm1246, %v1739, 0
      %v1744 = vsel %vm1246, %v1741, 0
      %1746 = vmatprep.subr.mxu0 0.0
      %1747 = vmatpush1.xpose.msra.mxu0 %v1744
      %1748 = vmatprep.subr.mxu0 0.0
      %1749 = vmatpush1.xpose.msra.mxu0 0.0
      %1750 = vmatprep.subr.mxu0 0.0
      %1751 = vmatpush1.xpose.msra.mxu0 0.0
      %1752 = vmatprep.subr.mxu0 0.0
      %1753 = vmatpush1.xpose.msra.mxu0 0.0
      %1754 = vmatprep.subr.mxu0 0.0
      %1755 = vmatpush1.xpose.msra.mxu0 0.0
      %1756 = vmatprep.subr.mxu0 0.0
      %1757 = vmatpush1.xpose.msra.mxu0 0.0
      %1758 = vmatprep.subr.mxu0 0.0
      %1759 = vmatpush1.xpose.msra.mxu0 0.0
      %1760 = vmatprep.subr.mxu0 0.0
      %1761 = vmatpush1.xpose.msra.mxu0 0.0
      %1762 = vmatprep.subr.mxu0 0.0
      %1763 = vmatpush1.xpose.msra.mxu0 0.0
      %1764 = vmatprep.subr.mxu0 0.0
      %1765 = vmatpush1.xpose.msra.mxu0 0.0
      %1766 = vmatprep.subr.mxu0 0.0
      %1767 = vmatpush1.xpose.msra.mxu0 0.0
      %1768 = vmatprep.subr.mxu0 0.0
      %1769 = vmatpush1.xpose.msra.mxu0 0.0
      %1770 = vmatprep.subr.mxu0 0.0
      %1771 = vmatpush1.xpose.msra.mxu0 0.0
      %1772 = vmatprep.subr.mxu0 0.0
      %1773 = vmatpush1.xpose.msra.mxu0 0.0
      %1774 = vmatprep.subr.mxu0 0.0
      %1775 = vmatpush1.xpose.msra.mxu0 0.0
      %1776 = vmatprep.subr.mxu0 0.0
      %1777 = vmatpush1.xpose.msra.mxu0 0.0
      %1778 = vmatprep.subr.mxu0 0.0
      %1779 = vmatpush1.xpose.msra.mxu0 0.0
      %1780 = vmatprep.subr.mxu0 0.0
      %1781 = vmatpush1.xpose.msra.mxu0 0.0
      %1782 = vmatprep.subr.mxu0 0.0
      %1783 = vmatpush1.xpose.msra.mxu0 0.0
      %1784 = vmatprep.subr.mxu0 0.0
      %1785 = vmatpush1.xpose.msra.mxu0 0.0
      %1786 = vmatprep.subr.mxu0 0.0
      %1787 = vmatpush1.xpose.msra.mxu0 0.0
      %1788 = vmatprep.subr.mxu0 0.0
      %1789 = vmatpush1.xpose.msra.mxu0 0.0
      %1790 = vmatprep.subr.mxu0 0.0
      %1791 = vmatpush1.xpose.msra.mxu0 0.0
      %1792 = vmatprep.subr.mxu0 0.0
      %1793 = vmatpush1.xpose.msra.mxu0 0.0
      %1794 = vmatprep.subr.mxu0 0.0
      %1795 = vmatpush1.xpose.msra.mxu0 0.0
      %1796 = vmatprep.subr.mxu0 0.0
      %1797 = vmatpush1.xpose.msra.mxu0 0.0
      %1798 = vmatprep.subr.mxu0 0.0
      %1799 = vmatpush1.xpose.msra.mxu0 0.0
      %1800 = vmatprep.subr.mxu0 0.0
      %1801 = vmatpush1.xpose.msra.mxu0 0.0
      %1802 = vmatprep.subr.mxu0 0.0
      %1803 = vmatpush1.xpose.msra.mxu0 0.0
      %1804 = vmatprep.subr.mxu0 0.0
      %1805 = vmatpush1.xpose.msra.mxu0 0.0
      %1806 = vmatprep.subr.mxu0 0.0
      %1807 = vmatpush1.xpose.msra.mxu0 0.0
      %1808 = vmatprep.subr.mxu0 0.0
      %1809 = vmatpush1.xpose.msra.mxu0 0.0
      %1810 = vmatprep.mubr.f32.mxu0 0.0
      %1811 = vmatmul.mubr.f32.gmra.mrb[0].mxu0 %v1742
      %v1812 = vpop.f32.mrb[0].mxu0
      %v1813 = vadd.f32 0.0, %v1812
      %v1814 = vpop.f32.mrb[0].mxu0
      %1815 = vdwg.mxu0
      %v1816 = vsel %vm1246, %v1813, -inf
      %1817 = vmax.xlane.f32.xlu0 %v1816
      %v1818 = vpop.xlane.xlu0 %1817
      %v1819 = vsub.f32 %v1813, %v1818
      %v1820 = vmul.f32 %v1819, 1.442695
      %v1821 = vpow.pop %v1820
      %v1822 = vsel %vm1246, %v1821, 0.0
      %1823 = vadd.xlane.f32.xlu0 %v1822
      %v1824 = vpop.xlane.xlu0 %1823
      %v1825 = vrcp.pop %v1824
      %v1826 = vmul.f32 %v1821, %v1825
      %1827 = vrot.lane.b32.xlu0 %v1235, 40
      %v1828 = vpop.permute.xlu0 %1827
      %v1831 = vsel %vm1246, %v1826, 0
      %1833 = vmatprep.subr.mxu0 0.0
      %1834 = vmatpush1.msra.mxu0 %v1828
      %1835 = vmatprep.subr.mxu0 0.0
      %1836 = vmatpush1.msra.mxu0 0.0
      %1837 = vmatprep.subr.mxu0 0.0
      %1838 = vmatpush1.msra.mxu0 0.0
      %1839 = vmatprep.subr.mxu0 0.0
      %1840 = vmatpush1.msra.mxu0 0.0
      %1841 = vmatprep.subr.mxu0 0.0
      %1842 = vmatpush1.msra.mxu0 0.0
      %1843 = vmatprep.subr.mxu0 0.0
      %1844 = vmatpush1.msra.mxu0 0.0
      %1845 = vmatprep.subr.mxu0 0.0
      %1846 = vmatpush1.msra.mxu0 0.0
      %1847 = vmatprep.subr.mxu0 0.0
      %1848 = vmatpush1.msra.mxu0 0.0
      %1849 = vmatprep.subr.mxu0 0.0
      %1850 = vmatpush1.msra.mxu0 0.0
      %1851 = vmatprep.subr.mxu0 0.0
      %1852 = vmatpush1.msra.mxu0 0.0
      %1853 = vmatprep.subr.mxu0 0.0
      %1854 = vmatpush1.msra.mxu0 0.0
      %1855 = vmatprep.subr.mxu0 0.0
      %1856 = vmatpush1.msra.mxu0 0.0
      %1857 = vmatprep.subr.mxu0 0.0
      %1858 = vmatpush1.msra.mxu0 0.0
      %1859 = vmatprep.subr.mxu0 0.0
      %1860 = vmatpush1.msra.mxu0 0.0
      %1861 = vmatprep.subr.mxu0 0.0
      %1862 = vmatpush1.msra.mxu0 0.0
      %1863 = vmatprep.subr.mxu0 0.0
      %1864 = vmatpush1.msra.mxu0 0.0
      %1865 = vmatprep.subr.mxu0 0.0
      %1866 = vmatpush1.msra.mxu0 0.0
      %1867 = vmatprep.subr.mxu0 0.0
      %1868 = vmatpush1.msra.mxu0 0.0
      %1869 = vmatprep.subr.mxu0 0.0
      %1870 = vmatpush1.msra.mxu0 0.0
      %1871 = vmatprep.subr.mxu0 0.0
      %1872 = vmatpush1.msra.mxu0 0.0
      %1873 = vmatprep.subr.mxu0 0.0
      %1874 = vmatpush1.msra.mxu0 0.0
      %1875 = vmatprep.subr.mxu0 0.0
      %1876 = vmatpush1.msra.mxu0 0.0
      %1877 = vmatprep.subr.mxu0 0.0
      %1878 = vmatpush1.msra.mxu0 0.0
      %1879 = vmatprep.subr.mxu0 0.0
      %1880 = vmatpush1.msra.mxu0 0.0
      %1881 = vmatprep.subr.mxu0 0.0
      %1882 = vmatpush1.msra.mxu0 0.0
      %1883 = vmatprep.subr.mxu0 0.0
      %1884 = vmatpush1.msra.mxu0 0.0
      %1885 = vmatprep.subr.mxu0 0.0
      %1886 = vmatpush1.msra.mxu0 0.0
      %1887 = vmatprep.subr.mxu0 0.0
      %1888 = vmatpush1.msra.mxu0 0.0
      %1889 = vmatprep.subr.mxu0 0.0
      %1890 = vmatpush1.msra.mxu0 0.0
      %1891 = vmatprep.subr.mxu0 0.0
      %1892 = vmatpush1.msra.mxu0 0.0
      %1893 = vmatprep.subr.mxu0 0.0
      %1894 = vmatpush1.msra.mxu0 0.0
      %1895 = vmatprep.subr.mxu0 0.0
      %1896 = vmatpush1.msra.mxu0 0.0
      %1897 = vmatprep.mubr.f32.mxu0 0.0
      %1898 = vmatmul.mubr.f32.gmra.mrb[0].mxu0 %v1831
      %v1899 = vpop.f32.mrb[0].mxu0
      %v1900 = vadd.f32 0.0, %v1899
      %v1901 = vpop.f32.mrb[0].mxu0
      %1902 = vdwg.mxu0
      %1904 = vrot.lane.b32.xlu0 %v1570, 8
      %v1905 = vpop.permute.xlu0 %1904
      %1908 = vrot.lane.b32.xlu0 %v1735, 16
      %v1909 = vpop.permute.xlu0 %1908
      %1912 = vrot.lane.b32.xlu0 %v1900, 24
      %v1913 = vpop.permute.xlu0 %1912
      %v1915 = vsel %vm1246, %v1405, %v1905
      %vm1916 = vcmask 130048
      %v1917 = vsel %vm1916, %v1915, %v1909
      %vm1918 = vcmask 195584
      %v1919 = vsel %vm1918, %v1917, %v1913
      %1921 = vrot.lane.b32.xlu0 %v1240, 96
      %v1922 = vpop.permute.xlu0 %1921
      %v1923 = vsel %vm1246, %v1240, 0
      %v1925 = vsel %vm1246, %v1922, 0
      %1927 = vmatprep.subr.mxu0 0.0
      %1928 = vmatpush1.xpose.msra.mxu0 %v1925
      %1929 = vmatprep.subr.mxu0 0.0
      %1930 = vmatpush1.xpose.msra.mxu0 0.0
      %1931 = vmatprep.subr.mxu0 0.0
      %1932 = vmatpush1.xpose.msra.mxu0 0.0
      %1933 = vmatprep.subr.mxu0 0.0
      %1934 = vmatpush1.xpose.msra.mxu0 0.0
      %1935 = vmatprep.subr.mxu0 0.0
      %1936 = vmatpush1.xpose.msra.mxu0 0.0
      %1937 = vmatprep.subr.mxu0 0.0
      %1938 = vmatpush1.xpose.msra.mxu0 0.0
      %1939 = vmatprep.subr.mxu0 0.0
      %1940 = vmatpush1.xpose.msra.mxu0 0.0
      %1941 = vmatprep.subr.mxu0 0.0
      %1942 = vmatpush1.xpose.msra.mxu0 0.0
      %1943 = vmatprep.subr.mxu0 0.0
      %1944 = vmatpush1.xpose.msra.mxu0 0.0
      %1945 = vmatprep.subr.mxu0 0.0
      %1946 = vmatpush1.xpose.msra.mxu0 0.0
      %1947 = vmatprep.subr.mxu0 0.0
      %1948 = vmatpush1.xpose.msra.mxu0 0.0
      %1949 = vmatprep.subr.mxu0 0.0
      %1950 = vmatpush1.xpose.msra.mxu0 0.0
      %1951 = vmatprep.subr.mxu0 0.0
      %1952 = vmatpush1.xpose.msra.mxu0 0.0
      %1953 = vmatprep.subr.mxu0 0.0
      %1954 = vmatpush1.xpose.msra.mxu0 0.0
      %1955 = vmatprep.subr.mxu0 0.0
      %1956 = vmatpush1.xpose.msra.mxu0 0.0
      %1957 = vmatprep.subr.mxu0 0.0
      %1958 = vmatpush1.xpose.msra.mxu0 0.0
      %1959 = vmatprep.subr.mxu0 0.0
      %1960 = vmatpush1.xpose.msra.mxu0 0.0
      %1961 = vmatprep.subr.mxu0 0.0
      %1962 = vmatpush1.xpose.msra.mxu0 0.0
      %1963 = vmatprep.subr.mxu0 0.0
      %1964 = vmatpush1.xpose.msra.mxu0 0.0
      %1965 = vmatprep.subr.mxu0 0.0
      %1966 = vmatpush1.xpose.msra.mxu0 0.0
      %1967 = vmatprep.subr.mxu0 0.0
      %1968 = vmatpush1.xpose.msra.mxu0 0.0
      %1969 = vmatprep.subr.mxu0 0.0
      %1970 = vmatpush1.xpose.msra.mxu0 0.0
      %1971 = vmatprep.subr.mxu0 0.0
      %1972 = vmatpush1.xpose.msra.mxu0 0.0
      %1973 = vmatprep.subr.mxu0 0.0
      %1974 = vmatpush1.xpose.msra.mxu0 0.0
      %1975 = vmatprep.subr.mxu0 0.0
      %1976 = vmatpush1.xpose.msra.mxu0 0.0
      %1977 = vmatprep.subr.mxu0 0.0
      %1978 = vmatpush1.xpose.msra.mxu0 0.0
      %1979 = vmatprep.subr.mxu0 0.0
      %1980 = vmatpush1.xpose.msra.mxu0 0.0
      %1981 = vmatprep.subr.mxu0 0.0
      %1982 = vmatpush1.xpose.msra.mxu0 0.0
      %1983 = vmatprep.subr.mxu0 0.0
      %1984 = vmatpush1.xpose.msra.mxu0 0.0
      %1985 = vmatprep.subr.mxu0 0.0
      %1986 = vmatpush1.xpose.msra.mxu0 0.0
      %1987 = vmatprep.subr.mxu0 0.0
      %1988 = vmatpush1.xpose.msra.mxu0 0.0
      %1989 = vmatprep.subr.mxu0 0.0
      %1990 = vmatpush1.xpose.msra.mxu0 0.0
      %1991 = vmatprep.mubr.f32.mxu0 0.0
      %1992 = vmatmul.mubr.f32.gmra.mrb[0].mxu0 %v1923
      %v1993 = vpop.f32.mrb[0].mxu0
      %v1994 = vadd.f32 0.0, %v1993
      %v1995 = vpop.f32.mrb[0].mxu0
      %1996 = vdwg.mxu0
      %v1997 = vsel %vm1246, %v1994, -inf
      %1998 = vmax.xlane.f32.xlu0 %v1997
      %v1999 = vpop.xlane.xlu0 %1998
      %v2000 = vsub.f32 %v1994, %v1999
      %v2001 = vmul.f32 %v2000, 1.442695
      %v2002 = vpow.pop %v2001
      %v2003 = vsel %vm1246, %v2002, 0.0
      %2004 = vadd.xlane.f32.xlu0 %v2003
      %v2005 = vpop.xlane.xlu0 %2004
      %v2006 = vrcp.pop %v2005
      %v2007 = vmul.f32 %v2002, %v2006
      %2008 = vrot.lane.b32.xlu0 %v1240, 64
      %v2009 = vpop.permute.xlu0 %2008
      %v2012 = vsel %vm1246, %v2007, 0
      %2014 = vmatprep.subr.mxu0 0.0
      %2015 = vmatpush1.msra.mxu0 %v2009
      %2016 = vmatprep.subr.mxu0 0.0
      %2017 = vmatpush1.msra.mxu0 0.0
      %2018 = vmatprep.subr.mxu0 0.0
      %2019 = vmatpush1.msra.mxu0 0.0
      %2020 = vmatprep.subr.mxu0 0.0
      %2021 = vmatpush1.msra.mxu0 0.0
      %2022 = vmatprep.subr.mxu0 0.0
      %2023 = vmatpush1.msra.mxu0 0.0
      %2024 = vmatprep.subr.mxu0 0.0
      %2025 = vmatpush1.msra.mxu0 0.0
      %2026 = vmatprep.subr.mxu0 0.0
      %2027 = vmatpush1.msra.mxu0 0.0
      %2028 = vmatprep.subr.mxu0 0.0
      %2029 = vmatpush1.msra.mxu0 0.0
      %2030 = vmatprep.subr.mxu0 0.0
      %2031 = vmatpush1.msra.mxu0 0.0
      %2032 = vmatprep.subr.mxu0 0.0
      %2033 = vmatpush1.msra.mxu0 0.0
      %2034 = vmatprep.subr.mxu0 0.0
      %2035 = vmatpush1.msra.mxu0 0.0
      %2036 = vmatprep.subr.mxu0 0.0
      %2037 = vmatpush1.msra.mxu0 0.0
      %2038 = vmatprep.subr.mxu0 0.0
      %2039 = vmatpush1.msra.mxu0 0.0
      %2040 = vmatprep.subr.mxu0 0.0
      %2041 = vmatpush1.msra.mxu0 0.0
      %2042 = vmatprep.subr.mxu0 0.0
      %2043 = vmatpush1.msra.mxu0 0.0
      %2044 = vmatprep.subr.mxu0 0.0
      %2045 = vmatpush1.msra.mxu0 0.0
      %2046 = vmatprep.subr.mxu0 0.0
      %2047 = vmatpush1.msra.mxu0 0.0
      %2048 = vmatprep.subr.mxu0 0.0
      %2049 = vmatpush1.msra.mxu0 0.0
      %2050 = vmatprep.subr.mxu0 0.0
      %2051 = vmatpush1.msra.mxu0 0.0
      %2052 = vmatprep.subr.mxu0 0.0
      %2053 = vmatpush1.msra.mxu0 0.0
      %2054 = vmatprep.subr.mxu0 0.0
      %2055 = vmatpush1.msra.mxu0 0.0
      %2056 = vmatprep.subr.mxu0 0.0
      %2057 = vmatpush1.msra.mxu0 0.0
      %2058 = vmatprep.subr.mxu0 0.0
      %2059 = vmatpush1.msra.mxu0 0.0
      %2060 = vmatprep.subr.mxu0 0.0
      %2061 = vmatpush1.msra.mxu0 0.0
      %2062 = vmatprep.subr.mxu0 0.0
      %2063 = vmatpush1.msra.mxu0 0.0
      %2064 = vmatprep.subr.mxu0 0.0
      %2065 = vmatpush1.msra.mxu0 0.0
      %2066 = vmatprep.subr.mxu0 0.0
      %2067 = vmatpush1.msra.mxu0 0.0
      %2068 = vmatprep.subr.mxu0 0.0
      %2069 = vmatpush1.msra.mxu0 0.0
      %2070 = vmatprep.subr.mxu0 0.0
      %2071 = vmatpush1.msra.mxu0 0.0
      %2072 = vmatprep.subr.mxu0 0.0
      %2073 = vmatpush1.msra.mxu0 0.0
      %2074 = vmatprep.subr.mxu0 0.0
      %2075 = vmatpush1.msra.mxu0 0.0
      %2076 = vmatprep.subr.mxu0 0.0
      %2077 = vmatpush1.msra.mxu0 0.0
      %2078 = vmatprep.mubr.f32.mxu0 0.0
      %2079 = vmatmul.mubr.f32.gmra.mrb[0].mxu0 %v2012
      %v2080 = vpop.f32.mrb[0].mxu0
      %v2081 = vadd.f32 0.0, %v2080
      %v2082 = vpop.f32.mrb[0].mxu0
      %2083 = vdwg.mxu0
      %2084 = vrot.lane.b32.xlu0 %v1240, 120
      %v2085 = vpop.permute.xlu0 %2084
      %2086 = vrot.lane.b32.xlu0 %v1240, 88
      %v2087 = vpop.permute.xlu0 %2086
      %v2088 = vsel %vm1246, %v2085, 0
      %v2090 = vsel %vm1246, %v2087, 0
      %2092 = vmatprep.subr.mxu0 0.0
      %2093 = vmatpush1.xpose.msra.mxu0 %v2090
      %2094 = vmatprep.subr.mxu0 0.0
      %2095 = vmatpush1.xpose.msra.mxu0 0.0
      %2096 = vmatprep.subr.mxu0 0.0
      %2097 = vmatpush1.xpose.msra.mxu0 0.0
      %2098 = vmatprep.subr.mxu0 0.0
      %2099 = vmatpush1.xpose.msra.mxu0 0.0
      %2100 = vmatprep.subr.mxu0 0.0
      %2101 = vmatpush1.xpose.msra.mxu0 0.0
      %2102 = vmatprep.subr.mxu0 0.0
      %2103 = vmatpush1.xpose.msra.mxu0 0.0
      %2104 = vmatprep.subr.mxu0 0.0
      %2105 = vmatpush1.xpose.msra.mxu0 0.0
      %2106 = vmatprep.subr.mxu0 0.0
      %2107 = vmatpush1.xpose.msra.mxu0 0.0
      %2108 = vmatprep.subr.mxu0 0.0
      %2109 = vmatpush1.xpose.msra.mxu0 0.0
      %2110 = vmatprep.subr.mxu0 0.0
      %2111 = vmatpush1.xpose.msra.mxu0 0.0
      %2112 = vmatprep.subr.mxu0 0.0
      %2113 = vmatpush1.xpose.msra.mxu0 0.0
      %2114 = vmatprep.subr.mxu0 0.0
      %2115 = vmatpush1.xpose.msra.mxu0 0.0
      %2116 = vmatprep.subr.mxu0 0.0
      %2117 = vmatpush1.xpose.msra.mxu0 0.0
      %2118 = vmatprep.subr.mxu0 0.0
      %2119 = vmatpush1.xpose.msra.mxu0 0.0
      %2120 = vmatprep.subr.mxu0 0.0
      %2121 = vmatpush1.xpose.msra.mxu0 0.0
      %2122 = vmatprep.subr.mxu0 0.0
      %2123 = vmatpush1.xpose.msra.mxu0 0.0
      %2124 = vmatprep.subr.mxu0 0.0
      %2125 = vmatpush1.xpose.msra.mxu0 0.0
      %2126 = vmatprep.subr.mxu0 0.0
      %2127 = vmatpush1.xpose.msra.mxu0 0.0
      %2128 = vmatprep.subr.mxu0 0.0
      %2129 = vmatpush1.xpose.msra.mxu0 0.0
      %2130 = vmatprep.subr.mxu0 0.0
      %2131 = vmatpush1.xpose.msra.mxu0 0.0
      %2132 = vmatprep.subr.mxu0 0.0
      %2133 = vmatpush1.xpose.msra.mxu0 0.0
      %2134 = vmatprep.subr.mxu0 0.0
      %2135 = vmatpush1.xpose.msra.mxu0 0.0
      %2136 = vmatprep.subr.mxu0 0.0
      %2137 = vmatpush1.xpose.msra.mxu0 0.0
      %2138 = vmatprep.subr.mxu0 0.0
      %2139 = vmatpush1.xpose.msra.mxu0 0.0
      %2140 = vmatprep.subr.mxu0 0.0
      %2141 = vmatpush1.xpose.msra.mxu0 0.0
      %2142 = vmatprep.subr.mxu0 0.0
      %2143 = vmatpush1.xpose.msra.mxu0 0.0
      %2144 = vmatprep.subr.mxu0 0.0
      %2145 = vmatpush1.xpose.msra.mxu0 0.0
      %2146 = vmatprep.subr.mxu0 0.0
      %2147 = vmatpush1.xpose.msra.mxu0 0.0
      %2148 = vmatprep.subr.mxu0 0.0
      %2149 = vmatpush1.xpose.msra.mxu0 0.0
      %2150 = vmatprep.subr.mxu0 0.0
      %2151 = vmatpush1.xpose.msra.mxu0 0.0
      %2152 = vmatprep.subr.mxu0 0.0
      %2153 = vmatpush1.xpose.msra.mxu0 0.0
      %2154 = vmatprep.subr.mxu0 0.0
      %2155 = vmatpush1.xpose.msra.mxu0 0.0
      %2156 = vmatprep.mubr.f32.mxu0 0.0
      %2157 = vmatmul.mubr.f32.gmra.mrb[0].mxu0 %v2088
      %v2158 = vpop.f32.mrb[0].mxu0
      %v2159 = vadd.f32 0.0, %v2158
      %v2160 = vpop.f32.mrb[0].mxu0
      %2161 = vdwg.mxu0
      %v2162 = vsel %vm1246, %v2159, -inf
      %2163 = vmax.xlane.f32.xlu0 %v2162
      %v2164 = vpop.xlane.xlu0 %2163
      %v2165 = vsub.f32 %v2159, %v2164
      %v2166 = vmul.f32 %v2165, 1.442695
      %v2167 = vpow.pop %v2166
      %v2168 = vsel %vm1246, %v2167, 0.0
      %2169 = vadd.xlane.f32.xlu0 %v2168
      %v2170 = vpop.xlane.xlu0 %2169
      %v2171 = vrcp.pop %v2170
      %v2172 = vmul.f32 %v2167, %v2171
      %2173 = vrot.lane.b32.xlu0 %v1240, 56
      %v2174 = vpop.permute.xlu0 %2173
      %v2177 = vsel %vm1246, %v2172, 0
      %2179 = vmatprep.subr.mxu0 0.0
      %2180 = vmatpush1.msra.mxu0 %v2174
      %2181 = vmatprep.subr.mxu0 0.0
      %2182 = vmatpush1.msra.mxu0 0.0
      %2183 = vmatprep.subr.mxu0 0.0
      %2184 = vmatpush1.msra.mxu0 0.0
      %2185 = vmatprep.subr.mxu0 0.0
      %2186 = vmatpush1.msra.mxu0 0.0
      %2187 = vmatprep.subr.mxu0 0.0
      %2188 = vmatpush1.msra.mxu0 0.0
      %2189 = vmatprep.subr.mxu0 0.0
      %2190 = vmatpush1.msra.mxu0 0.0
      %2191 = vmatprep.subr.mxu0 0.0
      %2192 = vmatpush1.msra.mxu0 0.0
      %2193 = vmatprep.subr.mxu0 0.0
      %2194 = vmatpush1.msra.mxu0 0.0
      %2195 = vmatprep.subr.mxu0 0.0
      %2196 = vmatpush1.msra.mxu0 0.0
      %2197 = vmatprep.subr.mxu0 0.0
      %2198 = vmatpush1.msra.mxu0 0.0
      %2199 = vmatprep.subr.mxu0 0.0
      %2200 = vmatpush1.msra.mxu0 0.0
      %2201 = vmatprep.subr.mxu0 0.0
      %2202 = vmatpush1.msra.mxu0 0.0
      %2203 = vmatprep.subr.mxu0 0.0
      %2204 = vmatpush1.msra.mxu0 0.0
      %2205 = vmatprep.subr.mxu0 0.0
      %2206 = vmatpush1.msra.mxu0 0.0
      %2207 = vmatprep.subr.mxu0 0.0
      %2208 = vmatpush1.msra.mxu0 0.0
      %2209 = vmatprep.subr.mxu0 0.0
      %2210 = vmatpush1.msra.mxu0 0.0
      %2211 = vmatprep.subr.mxu0 0.0
      %2212 = vmatpush1.msra.mxu0 0.0
      %2213 = vmatprep.subr.mxu0 0.0
      %2214 = vmatpush1.msra.mxu0 0.0
      %2215 = vmatprep.subr.mxu0 0.0
      %2216 = vmatpush1.msra.mxu0 0.0
      %2217 = vmatprep.subr.mxu0 0.0
      %2218 = vmatpush1.msra.mxu0 0.0
      %2219 = vmatprep.subr.mxu0 0.0
      %2220 = vmatpush1.msra.mxu0 0.0
      %2221 = vmatprep.subr.mxu0 0.0
      %2222 = vmatpush1.msra.mxu0 0.0
      %2223 = vmatprep.subr.mxu0 0.0
      %2224 = vmatpush1.msra.mxu0 0.0
      %2225 = vmatprep.subr.mxu0 0.0
      %2226 = vmatpush1.msra.mxu0 0.0
      %2227 = vmatprep.subr.mxu0 0.0
      %2228 = vmatpush1.msra.mxu0 0.0
      %2229 = vmatprep.subr.mxu0 0.0
      %2230 = vmatpush1.msra.mxu0 0.0
      %2231 = vmatprep.subr.mxu0 0.0
      %2232 = vmatpush1.msra.mxu0 0.0
      %2233 = vmatprep.subr.mxu0 0.0
      %2234 = vmatpush1.msra.mxu0 0.0
      %2235 = vmatprep.subr.mxu0 0.0
      %2236 = vmatpush1.msra.mxu0 0.0
      %2237 = vmatprep.subr.mxu0 0.0
      %2238 = vmatpush1.msra.mxu0 0.0
      %2239 = vmatprep.subr.mxu0 0.0
      %2240 = vmatpush1.msra.mxu0 0.0
      %2241 = vmatprep.subr.mxu0 0.0
      %2242 = vmatpush1.msra.mxu0 0.0
      %2243 = vmatprep.mubr.f32.mxu0 0.0
      %2244 = vmatmul.mubr.f32.gmra.mrb[0].mxu0 %v2177
      %v2245 = vpop.f32.mrb[0].mxu0
      %v2246 = vadd.f32 0.0, %v2245
      %v2247 = vpop.f32.mrb[0].mxu0
      %2248 = vdwg.mxu0
      %2249 = vrot.lane.b32.xlu0 %v1240, 112
      %v2250 = vpop.permute.xlu0 %2249
      %2251 = vrot.lane.b32.xlu0 %v1240, 80
      %v2252 = vpop.permute.xlu0 %2251
      %v2253 = vsel %vm1246, %v2250, 0
      %v2255 = vsel %vm1246, %v2252, 0
      %2257 = vmatprep.subr.mxu0 0.0
      %2258 = vmatpush1.xpose.msra.mxu0 %v2255
      %2259 = vmatprep.subr.mxu0 0.0
      %2260 = vmatpush1.xpose.msra.mxu0 0.0
      %2261 = vmatprep.subr.mxu0 0.0
      %2262 = vmatpush1.xpose.msra.mxu0 0.0
      %2263 = vmatprep.subr.mxu0 0.0
      %2264 = vmatpush1.xpose.msra.mxu0 0.0
      %2265 = vmatprep.subr.mxu0 0.0
      %2266 = vmatpush1.xpose.msra.mxu0 0.0
      %2267 = vmatprep.subr.mxu0 0.0
      %2268 = vmatpush1.xpose.msra.mxu0 0.0
      %2269 = vmatprep.subr.mxu0 0.0
      %2270 = vmatpush1.xpose.msra.mxu0 0.0
      %2271 = vmatprep.subr.mxu0 0.0
      %2272 = vmatpush1.xpose.msra.mxu0 0.0
      %2273 = vmatprep.subr.mxu0 0.0
      %2274 = vmatpush1.xpose.msra.mxu0 0.0
      %2275 = vmatprep.subr.mxu0 0.0
      %2276 = vmatpush1.xpose.msra.mxu0 0.0
      %2277 = vmatprep.subr.mxu0 0.0
      %2278 = vmatpush1.xpose.msra.mxu0 0.0
      %2279 = vmatprep.subr.mxu0 0.0
      %2280 = vmatpush1.xpose.msra.mxu0 0.0
      %2281 = vmatprep.subr.mxu0 0.0
      %2282 = vmatpush1.xpose.msra.mxu0 0.0
      %2283 = vmatprep.subr.mxu0 0.0
      %2284 = vmatpush1.xpose.msra.mxu0 0.0
      %2285 = vmatprep.subr.mxu0 0.0
      %2286 = vmatpush1.xpose.msra.mxu0 0.0
      %2287 = vmatprep.subr.mxu0 0.0
      %2288 = vmatpush1.xpose.msra.mxu0 0.0
      %2289 = vmatprep.subr.mxu0 0.0
      %2290 = vmatpush1.xpose.msra.mxu0 0.0
      %2291 = vmatprep.subr.mxu0 0.0
      %2292 = vmatpush1.xpose.msra.mxu0 0.0
      %2293 = vmatprep.subr.mxu0 0.0
      %2294 = vmatpush1.xpose.msra.mxu0 0.0
      %2295 = vmatprep.subr.mxu0 0.0
      %2296 = vmatpush1.xpose.msra.mxu0 0.0
      %2297 = vmatprep.subr.mxu0 0.0
      %2298 = vmatpush1.xpose.msra.mxu0 0.0
      %2299 = vmatprep.subr.mxu0 0.0
      %2300 = vmatpush1.xpose.msra.mxu0 0.0
      %2301 = vmatprep.subr.mxu0 0.0
      %2302 = vmatpush1.xpose.msra.mxu0 0.0
      %2303 = vmatprep.subr.mxu0 0.0
      %2304 = vmatpush1.xpose.msra.mxu0 0.0
      %2305 = vmatprep.subr.mxu0 0.0
      %2306 = vmatpush1.xpose.msra.mxu0 0.0
      %2307 = vmatprep.subr.mxu0 0.0
      %2308 = vmatpush1.xpose.msra.mxu0 0.0
      %2309 = vmatprep.subr.mxu0 0.0
      %2310 = vmatpush1.xpose.msra.mxu0 0.0
      %2311 = vmatprep.subr.mxu0 0.0
      %2312 = vmatpush1.xpose.msra.mxu0 0.0
      %2313 = vmatprep.subr.mxu0 0.0
      %2314 = vmatpush1.xpose.msra.mxu0 0.0
      %2315 = vmatprep.subr.mxu0 0.0
      %2316 = vmatpush1.xpose.msra.mxu0 0.0
      %2317 = vmatprep.subr.mxu0 0.0
      %2318 = vmatpush1.xpose.msra.mxu0 0.0
      %2319 = vmatprep.subr.mxu0 0.0
      %2320 = vmatpush1.xpose.msra.mxu0 0.0
      %2321 = vmatprep.mubr.f32.mxu0 0.0
      %2322 = vmatmul.mubr.f32.gmra.mrb[0].mxu0 %v2253
      %v2323 = vpop.f32.mrb[0].mxu0
      %v2324 = vadd.f32 0.0, %v2323
      %v2325 = vpop.f32.mrb[0].mxu0
      %2326 = vdwg.mxu0
      %v2327 = vsel %vm1246, %v2324, -inf
      %2328 = vmax.xlane.f32.xlu0 %v2327
      %v2329 = vpop.xlane.xlu0 %2328
      %v2330 = vsub.f32 %v2324, %v2329
      %v2331 = vmul.f32 %v2330, 1.442695
      %v2332 = vpow.pop %v2331
      %v2333 = vsel %vm1246, %v2332, 0.0
      %2334 = vadd.xlane.f32.xlu0 %v2333
      %v2335 = vpop.xlane.xlu0 %2334
      %v2336 = vrcp.pop %v2335
      %v2337 = vmul.f32 %v2332, %v2336
      %2338 = vrot.lane.b32.xlu0 %v1240, 48
      %v2339 = vpop.permute.xlu0 %2338
      %v2342 = vsel %vm1246, %v2337, 0
      %2344 = vmatprep.subr.mxu0 0.0
      %2345 = vmatpush1.msra.mxu0 %v2339
      %2346 = vmatprep.subr.mxu0 0.0
      %2347 = vmatpush1.msra.mxu0 0.0
      %2348 = vmatprep.subr.mxu0 0.0
      %2349 = vmatpush1.msra.mxu0 0.0
      %2350 = vmatprep.subr.mxu0 0.0
      %2351 = vmatpush1.msra.mxu0 0.0
      %2352 = vmatprep.subr.mxu0 0.0
      %2353 = vmatpush1.msra.mxu0 0.0
      %2354 = vmatprep.subr.mxu0 0.0
      %2355 = vmatpush1.msra.mxu0 0.0
      %2356 = vmatprep.subr.mxu0 0.0
      %2357 = vmatpush1.msra.mxu0 0.0
      %2358 = vmatprep.subr.mxu0 0.0
      %2359 = vmatpush1.msra.mxu0 0.0
      %2360 = vmatprep.subr.mxu0 0.0
      %2361 = vmatpush1.msra.mxu0 0.0
      %2362 = vmatprep.subr.mxu0 0.0
      %2363 = vmatpush1.msra.mxu0 0.0
      %2364 = vmatprep.subr.mxu0 0.0
      %2365 = vmatpush1.msra.mxu0 0.0
      %2366 = vmatprep.subr.mxu0 0.0
      %2367 = vmatpush1.msra.mxu0 0.0
      %2368 = vmatprep.subr.mxu0 0.0
      %2369 = vmatpush1.msra.mxu0 0.0
      %2370 = vmatprep.subr.mxu0 0.0
      %2371 = vmatpush1.msra.mxu0 0.0
      %2372 = vmatprep.subr.mxu0 0.0
      %2373 = vmatpush1.msra.mxu0 0.0
      %2374 = vmatprep.subr.mxu0 0.0
      %2375 = vmatpush1.msra.mxu0 0.0
      %2376 = vmatprep.subr.mxu0 0.0
      %2377 = vmatpush1.msra.mxu0 0.0
      %2378 = vmatprep.subr.mxu0 0.0
      %2379 = vmatpush1.msra.mxu0 0.0
      %2380 = vmatprep.subr.mxu0 0.0
      %2381 = vmatpush1.msra.mxu0 0.0
      %2382 = vmatprep.subr.mxu0 0.0
      %2383 = vmatpush1.msra.mxu0 0.0
      %2384 = vmatprep.subr.mxu0 0.0
      %2385 = vmatpush1.msra.mxu0 0.0
      %2386 = vmatprep.subr.mxu0 0.0
      %2387 = vmatpush1.msra.mxu0 0.0
      %2388 = vmatprep.subr.mxu0 0.0
      %2389 = vmatpush1.msra.mxu0 0.0
      %2390 = vmatprep.subr.mxu0 0.0
      %2391 = vmatpush1.msra.mxu0 0.0
      %2392 = vmatprep.subr.mxu0 0.0
      %2393 = vmatpush1.msra.mxu0 0.0
      %2394 = vmatprep.subr.mxu0 0.0
      %2395 = vmatpush1.msra.mxu0 0.0
      %2396 = vmatprep.subr.mxu0 0.0
      %2397 = vmatpush1.msra.mxu0 0.0
      %2398 = vmatprep.subr.mxu0 0.0
      %2399 = vmatpush1.msra.mxu0 0.0
      %2400 = vmatprep.subr.mxu0 0.0
      %2401 = vmatpush1.msra.mxu0 0.0
      %2402 = vmatprep.subr.mxu0 0.0
      %2403 = vmatpush1.msra.mxu0 0.0
      %2404 = vmatprep.subr.mxu0 0.0
      %2405 = vmatpush1.msra.mxu0 0.0
      %2406 = vmatprep.subr.mxu0 0.0
      %2407 = vmatpush1.msra.mxu0 0.0
      %2408 = vmatprep.mubr.f32.mxu0 0.0
      %2409 = vmatmul.mubr.f32.gmra.mrb[0].mxu0 %v2342
      %v2410 = vpop.f32.mrb[0].mxu0
      %v2411 = vadd.f32 0.0, %v2410
      %v2412 = vpop.f32.mrb[0].mxu0
      %2413 = vdwg.mxu0
      %2414 = vrot.lane.b32.xlu0 %v1240, 104
      %v2415 = vpop.permute.xlu0 %2414
      %2416 = vrot.lane.b32.xlu0 %v1240, 72
      %v2417 = vpop.permute.xlu0 %2416
      %v2418 = vsel %vm1246, %v2415, 0
      %v2420 = vsel %vm1246, %v2417, 0
      %2422 = vmatprep.subr.mxu0 0.0
      %2423 = vmatpush1.xpose.msra.mxu0 %v2420
      %2424 = vmatprep.subr.mxu0 0.0
      %2425 = vmatpush1.xpose.msra.mxu0 0.0
      %2426 = vmatprep.subr.mxu0 0.0
      %2427 = vmatpush1.xpose.msra.mxu0 0.0
      %2428 = vmatprep.subr.mxu0 0.0
      %2429 = vmatpush1.xpose.msra.mxu0 0.0
      %2430 = vmatprep.subr.mxu0 0.0
      %2431 = vmatpush1.xpose.msra.mxu0 0.0
      %2432 = vmatprep.subr.mxu0 0.0
      %2433 = vmatpush1.xpose.msra.mxu0 0.0
      %2434 = vmatprep.subr.mxu0 0.0
      %2435 = vmatpush1.xpose.msra.mxu0 0.0
      %2436 = vmatprep.subr.mxu0 0.0
      %2437 = vmatpush1.xpose.msra.mxu0 0.0
      %2438 = vmatprep.subr.mxu0 0.0
      %2439 = vmatpush1.xpose.msra.mxu0 0.0
      %2440 = vmatprep.subr.mxu0 0.0
      %2441 = vmatpush1.xpose.msra.mxu0 0.0
      %2442 = vmatprep.subr.mxu0 0.0
      %2443 = vmatpush1.xpose.msra.mxu0 0.0
      %2444 = vmatprep.subr.mxu0 0.0
      %2445 = vmatpush1.xpose.msra.mxu0 0.0
      %2446 = vmatprep.subr.mxu0 0.0
      %2447 = vmatpush1.xpose.msra.mxu0 0.0
      %2448 = vmatprep.subr.mxu0 0.0
      %2449 = vmatpush1.xpose.msra.mxu0 0.0
      %2450 = vmatprep.subr.mxu0 0.0
      %2451 = vmatpush1.xpose.msra.mxu0 0.0
      %2452 = vmatprep.subr.mxu0 0.0
      %2453 = vmatpush1.xpose.msra.mxu0 0.0
      %2454 = vmatprep.subr.mxu0 0.0
      %2455 = vmatpush1.xpose.msra.mxu0 0.0
      %2456 = vmatprep.subr.mxu0 0.0
      %2457 = vmatpush1.xpose.msra.mxu0 0.0
      %2458 = vmatprep.subr.mxu0 0.0
      %2459 = vmatpush1.xpose.msra.mxu0 0.0
      %2460 = vmatprep.subr.mxu0 0.0
      %2461 = vmatpush1.xpose.msra.mxu0 0.0
      %2462 = vmatprep.subr.mxu0 0.0
      %2463 = vmatpush1.xpose.msra.mxu0 0.0
      %2464 = vmatprep.subr.mxu0 0.0
      %2465 = vmatpush1.xpose.msra.mxu0 0.0
      %2466 = vmatprep.subr.mxu0 0.0
      %2467 = vmatpush1.xpose.msra.mxu0 0.0
      %2468 = vmatprep.subr.mxu0 0.0
      %2469 = vmatpush1.xpose.msra.mxu0 0.0
      %2470 = vmatprep.subr.mxu0 0.0
      %2471 = vmatpush1.xpose.msra.mxu0 0.0
      %2472 = vmatprep.subr.mxu0 0.0
      %2473 = vmatpush1.xpose.msra.mxu0 0.0
      %2474 = vmatprep.subr.mxu0 0.0
      %2475 = vmatpush1.xpose.msra.mxu0 0.0
      %2476 = vmatprep.subr.mxu0 0.0
      %2477 = vmatpush1.xpose.msra.mxu0 0.0
      %2478 = vmatprep.subr.mxu0 0.0
      %2479 = vmatpush1.xpose.msra.mxu0 0.0
      %2480 = vmatprep.subr.mxu0 0.0
      %2481 = vmatpush1.xpose.msra.mxu0 0.0
      %2482 = vmatprep.subr.mxu0 0.0
      %2483 = vmatpush1.xpose.msra.mxu0 0.0
      %2484 = vmatprep.subr.mxu0 0.0
      %2485 = vmatpush1.xpose.msra.mxu0 0.0
      %2486 = vmatprep.mubr.f32.mxu0 0.0
      %2487 = vmatmul.mubr.f32.gmra.mrb[0].mxu0 %v2418
      %v2488 = vpop.f32.mrb[0].mxu0
      %v2489 = vadd.f32 0.0, %v2488
      %v2490 = vpop.f32.mrb[0].mxu0
      %2491 = vdwg.mxu0
      %v2492 = vsel %vm1246, %v2489, -inf
      %2493 = vmax.xlane.f32.xlu0 %v2492
      %v2494 = vpop.xlane.xlu0 %2493
      %v2495 = vsub.f32 %v2489, %v2494
      %v2496 = vmul.f32 %v2495, 1.442695
      %v2497 = vpow.pop %v2496
      %v2498 = vsel %vm1246, %v2497, 0.0
      %2499 = vadd.xlane.f32.xlu0 %v2498
      %v2500 = vpop.xlane.xlu0 %2499
      %v2501 = vrcp.pop %v2500
      %v2502 = vmul.f32 %v2497, %v2501
      %2503 = vrot.lane.b32.xlu0 %v1240, 40
      %v2504 = vpop.permute.xlu0 %2503
      %v2507 = vsel %vm1246, %v2502, 0
      %2509 = vmatprep.subr.mxu0 0.0
      %2510 = vmatpush1.msra.mxu0 %v2504
      %2511 = vmatprep.subr.mxu0 0.0
      %2512 = vmatpush1.msra.mxu0 0.0
      %2513 = vmatprep.subr.mxu0 0.0
      %2514 = vmatpush1.msra.mxu0 0.0
      %2515 = vmatprep.subr.mxu0 0.0
      %2516 = vmatpush1.msra.mxu0 0.0
      %2517 = vmatprep.subr.mxu0 0.0
      %2518 = vmatpush1.msra.mxu0 0.0
      %2519 = vmatprep.subr.mxu0 0.0
      %2520 = vmatpush1.msra.mxu0 0.0
      %2521 = vmatprep.subr.mxu0 0.0
      %2522 = vmatpush1.msra.mxu0 0.0
      %2523 = vmatprep.subr.mxu0 0.0
      %2524 = vmatpush1.msra.mxu0 0.0
      %2525 = vmatprep.subr.mxu0 0.0
      %2526 = vmatpush1.msra.mxu0 0.0
      %2527 = vmatprep.subr.mxu0 0.0
      %2528 = vmatpush1.msra.mxu0 0.0
      %2529 = vmatprep.subr.mxu0 0.0
      %2530 = vmatpush1.msra.mxu0 0.0
      %2531 = vmatprep.subr.mxu0 0.0
      %2532 = vmatpush1.msra.mxu0 0.0
      %2533 = vmatprep.subr.mxu0 0.0
      %2534 = vmatpush1.msra.mxu0 0.0
      %2535 = vmatprep.subr.mxu0 0.0
      %2536 = vmatpush1.msra.mxu0 0.0
      %2537 = vmatprep.subr.mxu0 0.0
      %2538 = vmatpush1.msra.mxu0 0.0
      %2539 = vmatprep.subr.mxu0 0.0
      %2540 = vmatpush1.msra.mxu0 0.0
      %2541 = vmatprep.subr.mxu0 0.0
      %2542 = vmatpush1.msra.mxu0 0.0
      %2543 = vmatprep.subr.mxu0 0.0
      %2544 = vmatpush1.msra.mxu0 0.0
      %2545 = vmatprep.subr.mxu0 0.0
      %2546 = vmatpush1.msra.mxu0 0.0
      %2547 = vmatprep.subr.mxu0 0.0
      %2548 = vmatpush1.msra.mxu0 0.0
      %2549 = vmatprep.subr.mxu0 0.0
      %2550 = vmatpush1.msra.mxu0 0.0
      %2551 = vmatprep.subr.mxu0 0.0
      %2552 = vmatpush1.msra.mxu0 0.0
      %2553 = vmatprep.subr.mxu0 0.0
      %2554 = vmatpush1.msra.mxu0 0.0
      %2555 = vmatprep.subr.mxu0 0.0
      %2556 = vmatpush1.msra.mxu0 0.0
      %2557 = vmatprep.subr.mxu0 0.0
      %2558 = vmatpush1.msra.mxu0 0.0
      %2559 = vmatprep.subr.mxu0 0.0
      %2560 = vmatpush1.msra.mxu0 0.0
      %2561 = vmatprep.subr.mxu0 0.0
      %2562 = vmatpush1.msra.mxu0 0.0
      %2563 = vmatprep.subr.mxu0 0.0
      %2564 = vmatpush1.msra.mxu0 0.0
      %2565 = vmatprep.subr.mxu0 0.0
      %2566 = vmatpush1.msra.mxu0 0.0
      %2567 = vmatprep.subr.mxu0 0.0
      %2568 = vmatpush1.msra.mxu0 0.0
      %2569 = vmatprep.subr.mxu0 0.0
      %2570 = vmatpush1.msra.mxu0 0.0
      %2571 = vmatprep.subr.mxu0 0.0
      %2572 = vmatpush1.msra.mxu0 0.0
      %2573 = vmatprep.mubr.f32.mxu0 0.0
      %2574 = vmatmul.mubr.f32.gmra.mrb[0].mxu0 %v2507
      %v2575 = vpop.f32.mrb[0].mxu0
      %v2576 = vadd.f32 0.0, %v2575
      %v2577 = vpop.f32.mrb[0].mxu0
      %2578 = vdwg.mxu0
      %2580 = vrot.lane.b32.xlu0 %v2246, 8
      %v2581 = vpop.permute.xlu0 %2580
      %2584 = vrot.lane.b32.xlu0 %v2411, 16
      %v2585 = vpop.permute.xlu0 %2584
      %2588 = vrot.lane.b32.xlu0 %v2576, 24
      %v2589 = vpop.permute.xlu0 %2588
      %v2591 = vsel %vm1246, %v2081, %v2581
      %v2592 = vsel %vm1916, %v2591, %v2585
      %v2593 = vsel %vm1918, %v2592, %v2589
      %v2594 = vld [vmem:[%s850] sm:$0xff]
      %v2595 = vld [vmem:[%s850 + $0x8] sm:$0xff]
      %v2596 = vld [vmem:[%s850 + $0x10] sm:$0xff]
      %v2597 = vld [vmem:[%s850 + $0x18] sm:$0xff]
      %v2599 = vsel %vm1107, %v1919, 0
      %v2602 = vsel %vm1107, %v2593, 0
      %2604 = vmatprep.subr.mxu0 0.0
      %2605 = vmatpush1.msra.mxu0 %v2594
      %2606 = vmatprep.subr.mxu0 0.0
      %2607 = vmatpush1.msra.mxu0 %v2595
      %2608 = vmatprep.subr.mxu0 0.0
      %2609 = vmatpush1.msra.mxu0 %v2596
      %2610 = vmatprep.subr.mxu0 0.0
      %2611 = vmatpush1.msra.mxu0 %v2597
      %2612 = vmatprep.subr.mxu0 0.0
      %2613 = vmatpush1.msra.mxu0 0.0
      %2614 = vmatprep.subr.mxu0 0.0
      %2615 = vmatpush1.msra.mxu0 0.0
      %2616 = vmatprep.subr.mxu0 0.0
      %2617 = vmatpush1.msra.mxu0 0.0
      %2618 = vmatprep.subr.mxu0 0.0
      %2619 = vmatpush1.msra.mxu0 0.0
      %2620 = vmatprep.subr.mxu0 0.0
      %2621 = vmatpush1.msra.mxu0 0.0
      %2622 = vmatprep.subr.mxu0 0.0
      %2623 = vmatpush1.msra.mxu0 0.0
      %2624 = vmatprep.subr.mxu0 0.0
      %2625 = vmatpush1.msra.mxu0 0.0
      %2626 = vmatprep.subr.mxu0 0.0
      %2627 = vmatpush1.msra.mxu0 0.0
      %2628 = vmatprep.subr.mxu0 0.0
      %2629 = vmatpush1.msra.mxu0 0.0
      %2630 = vmatprep.subr.mxu0 0.0
      %2631 = vmatpush1.msra.mxu0 0.0
      %2632 = vmatprep.subr.mxu0 0.0
      %2633 = vmatpush1.msra.mxu0 0.0
      %2634 = vmatprep.subr.mxu0 0.0
      %2635 = vmatpush1.msra.mxu0 0.0
      %2636 = vmatprep.subr.mxu0 0.0
      %2637 = vmatpush1.msra.mxu0 0.0
      %2638 = vmatprep.subr.mxu0 0.0
      %2639 = vmatpush1.msra.mxu0 0.0
      %2640 = vmatprep.subr.mxu0 0.0
      %2641 = vmatpush1.msra.mxu0 0.0
      %2642 = vmatprep.subr.mxu0 0.0
      %2643 = vmatpush1.msra.mxu0 0.0
      %2644 = vmatprep.subr.mxu0 0.0
      %2645 = vmatpush1.msra.mxu0 0.0
      %2646 = vmatprep.subr.mxu0 0.0
      %2647 = vmatpush1.msra.mxu0 0.0
      %2648 = vmatprep.subr.mxu0 0.0
      %2649 = vmatpush1.msra.mxu0 0.0
      %2650 = vmatprep.subr.mxu0 0.0
      %2651 = vmatpush1.msra.mxu0 0.0
      %2652 = vmatprep.subr.mxu0 0.0
      %2653 = vmatpush1.msra.mxu0 0.0
      %2654 = vmatprep.subr.mxu0 0.0
      %2655 = vmatpush1.msra.mxu0 0.0
      %2656 = vmatprep.subr.mxu0 0.0
      %2657 = vmatpush1.msra.mxu0 0.0
      %2658 = vmatprep.subr.mxu0 0.0
      %2659 = vmatpush1.msra.mxu0 0.0
      %2660 = vmatprep.subr.mxu0 0.0
      %2661 = vmatpush1.msra.mxu0 0.0
      %2662 = vmatprep.subr.mxu0 0.0
      %2663 = vmatpush1.msra.mxu0 0.0
      %2664 = vmatprep.subr.mxu0 0.0
      %2665 = vmatpush1.msra.mxu0 0.0
      %2666 = vmatprep.subr.mxu0 0.0
      %2667 = vmatpush1.msra.mxu0 0.0
      %2668 = vmatprep.mubr.f32.mxu0 0.0
      %2669 = vmatmul.mubr.f32.gmra.mrb[0].mxu0 %v2599
      %v2670 = vpop.f32.mrb[0].mxu0
      %v2671 = vadd.f32 0.0, %v2670
      %v2672 = vpop.f32.mrb[0].mxu0
      %2673 = vmatprep.mubr.f32.mxu0 0.0
      %2674 = vmatmul.mubr.f32.gmra.mrb[0].mxu0 %v2602
      %v2675 = vpop.f32.mrb[0].mxu0
      %v2676 = vadd.f32 0.0, %v2675
      %v2677 = vpop.f32.mrb[0].mxu0
      %2678 = vdwg.mxu0
      %v2679 = vadd.f32 %v1097, %v2671
      %v2680 = vadd.f32 %v1102, %v2676
      %v2681 = vld [vmem:[%s854] sm:$0x1]
      %v2683 = vlaneseq
      %v2684 = vshrl.u32 %v2683, 7
      %v2685 = vsub.s32 0, %v2684
      %v2686 = vrot.slane %v2681, %v2685
      %v2688 = vadd.f32 %v2679, %v2686
      %v2689 = vadd.f32 %v2680, %v2686
      %v2690 = vld [vmem:[%s858] sm:$0x1]
      %v2691 = vld [vmem:[%s862] sm:$0x1]
      %v2692 = vsel %vm1107, %v2688, 0.0
      %2693 = vadd.xlane.f32.xlu0 %v2692
      %v2694 = vpop.xlane.xlu0 %2693
      %v2695 = vsel %vm1107, %v2689, 0.0
      %2696 = vadd.xlane.f32.xlu0 %v2695
      %v2697 = vpop.xlane.xlu0 %2696
      %v2698 = vmul.f32 %v2694, %v1114
      %v2699 = vmul.f32 %v2697, %v1114
      %v2700 = vsub.f32 %v2688, %v2698
      %v2701 = vsub.f32 %v2689, %v2699
      %v2702 = vmul.f32 %v2700, %v2700
      %v2703 = vmul.f32 %v2701, %v2701
      %v2704 = vsel %vm1107, %v2702, 0.0
      %2705 = vadd.xlane.f32.xlu0 %v2704
      %v2706 = vpop.xlane.xlu0 %2705
      %v2707 = vsel %vm1107, %v2703, 0.0
      %2708 = vadd.xlane.f32.xlu0 %v2707
      %v2709 = vpop.xlane.xlu0 %2708
      %v2710 = vmul.f32 %v2706, %v1114
      %v2711 = vmul.f32 %v2709, %v1114
      %v2712 = vadd.f32 %v2710, 1e-06
      %v2713 = vadd.f32 %v2711, 1e-06
      %v2714 = vrsqrt.pop %v2712
      %v2715 = vrsqrt.pop %v2713
      %v2716 = vmul.f32 %v2700, %v2714
      %v2717 = vmul.f32 %v2701, %v2715
      %v2719 = vlaneseq
      %v2720 = vshrl.u32 %v2719, 7
      %v2721 = vsub.s32 0, %v2720
      %v2722 = vrot.slane %v2690, %v2721
      %v2724 = vmul.f32 %v2716, %v2722
      %v2725 = vmul.f32 %v2717, %v2722
      %v2727 = vlaneseq
      %v2728 = vshrl.u32 %v2727, 7
      %v2729 = vsub.s32 0, %v2728
      %v2730 = vrot.slane %v2691, %v2729
      %v2732 = vadd.f32 %v2724, %v2730
      %v2733 = vadd.f32 %v2725, %v2730
      %v2734 = vld [vmem:[%s867] sm:$0xff]
      %v2735 = vld [vmem:[%s867 + $0x8] sm:$0xff]
      %v2736 = vld [vmem:[%s867 + $0x10] sm:$0xff]
      %v2737 = vld [vmem:[%s867 + $0x18] sm:$0xff]
      %v2738 = vld [vmem:[%s871] sm:$0x1]
      %v2740 = vlaneseq
      %v2741 = vshrl.u32 %v2740, 7
      %v2742 = vsub.s32 0, %v2741
      %v2743 = vrot.slane %v2738, %v2742
      %v2746 = vsel %vm1107, %v2732, 0
      %v2749 = vsel %vm1107, %v2733, 0
      %2751 = vmatprep.subr.mxu0 0.0
      %2752 = vmatpush1.msra.mxu0 %v2734
      %2753 = vmatprep.subr.mxu0 0.0
      %2754 = vmatpush1.msra.mxu0 %v2735
      %2755 = vmatprep.subr.mxu0 0.0
      %2756 = vmatpush1.msra.mxu0 %v2736
      %2757 = vmatprep.subr.mxu0 0.0
      %2758 = vmatpush1.msra.mxu0 %v2737
      %2759 = vmatprep.subr.mxu0 0.0
      %2760 = vmatpush1.msra.mxu0 0.0
      %2761 = vmatprep.subr.mxu0 0.0
      %2762 = vmatpush1.msra.mxu0 0.0
      %2763 = vmatprep.subr.mxu0 0.0
      %2764 = vmatpush1.msra.mxu0 0.0
      %2765 = vmatprep.subr.mxu0 0.0
      %2766 = vmatpush1.msra.mxu0 0.0
      %2767 = vmatprep.subr.mxu0 0.0
      %2768 = vmatpush1.msra.mxu0 0.0
      %2769 = vmatprep.subr.mxu0 0.0
      %2770 = vmatpush1.msra.mxu0 0.0
      %2771 = vmatprep.subr.mxu0 0.0
      %2772 = vmatpush1.msra.mxu0 0.0
      %2773 = vmatprep.subr.mxu0 0.0
      %2774 = vmatpush1.msra.mxu0 0.0
      %2775 = vmatprep.subr.mxu0 0.0
      %2776 = vmatpush1.msra.mxu0 0.0
      %2777 = vmatprep.subr.mxu0 0.0
      %2778 = vmatpush1.msra.mxu0 0.0
      %2779 = vmatprep.subr.mxu0 0.0
      %2780 = vmatpush1.msra.mxu0 0.0
      %2781 = vmatprep.subr.mxu0 0.0
      %2782 = vmatpush1.msra.mxu0 0.0
      %2783 = vmatprep.subr.mxu0 0.0
      %2784 = vmatpush1.msra.mxu0 0.0
      %2785 = vmatprep.subr.mxu0 0.0
      %2786 = vmatpush1.msra.mxu0 0.0
      %2787 = vmatprep.subr.mxu0 0.0
      %2788 = vmatpush1.msra.mxu0 0.0
      %2789 = vmatprep.subr.mxu0 0.0
      %2790 = vmatpush1.msra.mxu0 0.0
      %2791 = vmatprep.subr.mxu0 0.0
      %2792 = vmatpush1.msra.mxu0 0.0
      %2793 = vmatprep.subr.mxu0 0.0
      %2794 = vmatpush1.msra.mxu0 0.0
      %2795 = vmatprep.subr.mxu0 0.0
      %2796 = vmatpush1.msra.mxu0 0.0
      %2797 = vmatprep.subr.mxu0 0.0
      %2798 = vmatpush1.msra.mxu0 0.0
      %2799 = vmatprep.subr.mxu0 0.0
      %2800 = vmatpush1.msra.mxu0 0.0
      %2801 = vmatprep.subr.mxu0 0.0
      %2802 = vmatpush1.msra.mxu0 0.0
      %2803 = vmatprep.subr.mxu0 0.0
      %2804 = vmatpush1.msra.mxu0 0.0
      %2805 = vmatprep.subr.mxu0 0.0
      %2806 = vmatpush1.msra.mxu0 0.0
      %2807 = vmatprep.subr.mxu0 0.0
      %2808 = vmatpush1.msra.mxu0 0.0
      %2809 = vmatprep.subr.mxu0 0.0
      %2810 = vmatpush1.msra.mxu0 0.0
      %2811 = vmatprep.subr.mxu0 0.0
      %2812 = vmatpush1.msra.mxu0 0.0
      %2813 = vmatprep.subr.mxu0 0.0
      %2814 = vmatpush1.msra.mxu0 0.0
      %2815 = vmatprep.mubr.f32.mxu0 0.0
      %2816 = vmatmul.mubr.f32.gmra.mrb[0].mxu0 %v2746
      %v2817 = vpop.f32.mrb[0].mxu0
      %v2818 = vadd.f32 %v2743, %v2817
      %v2819 = vpop.f32.mrb[0].mxu0
      %2820 = vmatprep.mubr.f32.mxu0 0.0
      %2821 = vmatmul.mubr.f32.gmra.mrb[0].mxu0 %v2749
      %v2822 = vpop.f32.mrb[0].mxu0
      %v2823 = vadd.f32 %v2743, %v2822
      %v2824 = vpop.f32.mrb[0].mxu0
      %2825 = vdwg.mxu0
      %v2826 = vmul.f32 %v2818, %v2818
      %v2827 = vmul.f32 %v2823, %v2823
      %v2828 = vmul.f32 %v2818, %v2826
      %v2829 = vmul.f32 %v2823, %v2827
      %v2830 = vmul.f32 %v2828, 0.044715
      %v2831 = vmul.f32 %v2829, 0.044715
      %v2832 = vadd.f32 %v2818, %v2830
      %v2833 = vadd.f32 %v2823, %v2831
      %v2834 = vmul.f32 %v2832, 0.7978846
      %v2835 = vmul.f32 %v2833, 0.7978846
      %v2836 = vtanh.pop %v2834
      %v2837 = vtanh.pop %v2835
      %v2838 = vadd.f32 %v2836, 1.0
      %v2839 = vadd.f32 %v2837, 1.0
      %v2840 = vmul.f32 %v2838, 0.5
      %v2841 = vmul.f32 %v2839, 0.5
      %v2842 = vmul.f32 %v2818, %v2840
      %v2843 = vmul.f32 %v2823, %v2841
      %v2844 = vld [vmem:[%s876] sm:$0xff]
      %v2845 = vld [vmem:[%s876 + $0x8] sm:$0xff]
      %v2846 = vld [vmem:[%s876 + $0x10] sm:$0xff]
      %v2847 = vld [vmem:[%s876 + $0x18] sm:$0xff]
      %v2848 = vld [vmem:[%s876 + $0x20] sm:$0xff]
      %v2849 = vld [vmem:[%s876 + $0x28] sm:$0xff]
      %v2850 = vld [vmem:[%s876 + $0x30] sm:$0xff]
      %v2851 = vld [vmem:[%s876 + $0x38] sm:$0xff]
      %vm2852 = vcmask 523264
      %v2854 = vsel %vm2852, %v2842, 0
      %v2857 = vsel %vm2852, %v2843, 0
      %2859 = vmatprep.subr.mxu0 0.0
      %2860 = vmatpush1.msra.mxu0 %v2844
      %2861 = vmatprep.subr.mxu0 0.0
      %2862 = vmatpush1.msra.mxu0 %v2845
      %2863 = vmatprep.subr.mxu0 0.0
      %2864 = vmatpush1.msra.mxu0 %v2846
      %2865 = vmatprep.subr.mxu0 0.0
      %2866 = vmatpush1.msra.mxu0 %v2847
      %2867 = vmatprep.subr.mxu0 0.0
      %2868 = vmatpush1.msra.mxu0 %v2848
      %2869 = vmatprep.subr.mxu0 0.0
      %2870 = vmatpush1.msra.mxu0 %v2849
      %2871 = vmatprep.subr.mxu0 0.0
      %2872 = vmatpush1.msra.mxu0 %v2850
      %2873 = vmatprep.subr.mxu0 0.0
      %2874 = vmatpush1.msra.mxu0 %v2851
      %2875 = vmatprep.subr.mxu0 0.0
      %2876 = vmatpush1.msra.mxu0 0.0
      %2877 = vmatprep.subr.mxu0 0.0
      %2878 = vmatpush1.msra.mxu0 0.0
      %2879 = vmatprep.subr.mxu0 0.0
      %2880 = vmatpush1.msra.mxu0 0.0
      %2881 = vmatprep.subr.mxu0 0.0
      %2882 = vmatpush1.msra.mxu0 0.0
      %2883 = vmatprep.subr.mxu0 0.0
      %2884 = vmatpush1.msra.mxu0 0.0
      %2885 = vmatprep.subr.mxu0 0.0
      %2886 = vmatpush1.msra.mxu0 0.0
      %2887 = vmatprep.subr.mxu0 0.0
      %2888 = vmatpush1.msra.mxu0 0.0
      %2889 = vmatprep.subr.mxu0 0.0
      %2890 = vmatpush1.msra.mxu0 0.0
      %2891 = vmatprep.subr.mxu0 0.0
      %2892 = vmatpush1.msra.mxu0 0.0
      %2893 = vmatprep.subr.mxu0 0.0
      %2894 = vmatpush1.msra.mxu0 0.0
      %2895 = vmatprep.subr.mxu0 0.0
      %2896 = vmatpush1.msra.mxu0 0.0
      %2897 = vmatprep.subr.mxu0 0.0
      %2898 = vmatpush1.msra.mxu0 0.0
      %2899 = vmatprep.subr.mxu0 0.0
      %2900 = vmatpush1.msra.mxu0 0.0
      %2901 = vmatprep.subr.mxu0 0.0
      %2902 = vmatpush1.msra.mxu0 0.0
      %2903 = vmatprep.subr.mxu0 0.0
      %2904 = vmatpush1.msra.mxu0 0.0
      %2905 = vmatprep.subr.mxu0 0.0
      %2906 = vmatpush1.msra.mxu0 0.0
      %2907 = vmatprep.subr.mxu0 0.0
      %2908 = vmatpush1.msra.mxu0 0.0
      %2909 = vmatprep.subr.mxu0 0.0
      %2910 = vmatpush1.msra.mxu0 0.0
      %2911 = vmatprep.subr.mxu0 0.0
      %2912 = vmatpush1.msra.mxu0 0.0
      %2913 = vmatprep.subr.mxu0 0.0
      %2914 = vmatpush1.msra.mxu0 0.0
      %2915 = vmatprep.subr.mxu0 0.0
      %2916 = vmatpush1.msra.mxu0 0.0
      %2917 = vmatprep.subr.mxu0 0.0
      %2918 = vmatpush1.msra.mxu0 0.0
      %2919 = vmatprep.subr.mxu0 0.0
      %2920 = vmatpush1.msra.mxu0 0.0
      %2921 = vmatprep.subr.mxu0 0.0
      %2922 = vmatpush1.msra.mxu0 0.0
      %2923 = vmatprep.mubr.f32.mxu0 0.0
      %2924 = vmatmul.mubr.f32.gmra.mrb[0].mxu0 %v2854
      %v2925 = vpop.f32.mrb[0].mxu0
      %v2926 = vadd.f32 0.0, %v2925
      %v2927 = vpop.f32.mrb[0].mxu0
      %2928 = vmatprep.mubr.f32.mxu0 0.0
      %2929 = vmatmul.mubr.f32.gmra.mrb[0].mxu0 %v2857
      %v2930 = vpop.f32.mrb[0].mxu0
      %v2931 = vadd.f32 0.0, %v2930
      %v2932 = vpop.f32.mrb[0].mxu0
      %2933 = vdwg.mxu0
      %v2934 = vadd.f32 %v2688, %v2926
      %v2935 = vadd.f32 %v2689, %v2931
      %v2936 = vld [vmem:[%s880] sm:$0x1]
      %v2938 = vlaneseq
      %v2939 = vshrl.u32 %v2938, 7
      %v2940 = vsub.s32 0, %v2939
      %v2941 = vrot.slane %v2936, %v2940
      %v2943 = vadd.f32 %v2934, %v2941
      %v2944 = vadd.f32 %v2935, %v2941
      %s2945 = scalar_lea.vmem %s832, 1
      %v2946 = vld [vmem:[%s2945] sm:$0x1]
      %s2947 = scalar_lea.vmem %s836, 1
      %v2948 = vld [vmem:[%s2947] sm:$0x1]
      %v2949 = vsel %vm1107, %v2943, 0.0
      %2950 = vadd.xlane.f32.xlu0 %v2949
      %v2951 = vpop.xlane.xlu0 %2950
      %v2952 = vsel %vm1107, %v2944, 0.0
      %2953 = vadd.xlane.f32.xlu0 %v2952
      %v2954 = vpop.xlane.xlu0 %2953
      %v2955 = vmul.f32 %v2951, %v1114
      %v2956 = vmul.f32 %v2954, %v1114
      %v2957 = vsub.f32 %v2943, %v2955
      %v2958 = vsub.f32 %v2944, %v2956
      %v2959 = vmul.f32 %v2957, %v2957
      %v2960 = vmul.f32 %v2958, %v2958
      %v2961 = vsel %vm1107, %v2959, 0.0
      %2962 = vadd.xlane.f32.xlu0 %v2961
      %v2963 = vpop.xlane.xlu0 %2962
      %v2964 = vsel %vm1107, %v2960, 0.0
      %2965 = vadd.xlane.f32.xlu0 %v2964
      %v2966 = vpop.xlane.xlu0 %2965
      %v2967 = vmul.f32 %v2963, %v1114
      %v2968 = vmul.f32 %v2966, %v1114
      %v2969 = vadd.f32 %v2967, 1e-06
      %v2970 = vadd.f32 %v2968, 1e-06
      %v2971 = vrsqrt.pop %v2969
      %v2972 = vrsqrt.pop %v2970
      %v2973 = vmul.f32 %v2957, %v2971
      %v2974 = vmul.f32 %v2958, %v2972
      %v2976 = vlaneseq
      %v2977 = vshrl.u32 %v2976, 7
      %v2978 = vsub.s32 0, %v2977
      %v2979 = vrot.slane %v2946, %v2978
      %v2981 = vmul.f32 %v2973, %v2979
      %v2982 = vmul.f32 %v2974, %v2979
      %v2984 = vlaneseq
      %v2985 = vshrl.u32 %v2984, 7
      %v2986 = vsub.s32 0, %v2985
      %v2987 = vrot.slane %v2948, %v2986
      %v2989 = vadd.f32 %v2981, %v2987
      %v2990 = vadd.f32 %v2982, %v2987
      %s2991 = scalar_lea.vmem %s841, 32
      %v2992 = vld [vmem:[%s2991] sm:$0xff]
      %v2993 = vld [vmem:[%s2991 + $0x8] sm:$0xff]
      %v2994 = vld [vmem:[%s2991 + $0x10] sm:$0xff]
      %v2995 = vld [vmem:[%s2991 + $0x18] sm:$0xff]
      %s2996 = scalar_lea.vmem %s845, 1
      %v2997 = vld [vmem:[%s2996] sm:$0x1]
      %v2999 = vlaneseq
      %v3000 = vshrl.u32 %v2999, 7
      %v3001 = vsub.s32 0, %v3000
      %v3002 = vrot.slane %v2997, %v3001
      %v3005 = vsel %vm1107, %v2989, 0
      %v3008 = vsel %vm1107, %v2990, 0
      %3010 = vmatprep.subr.mxu0 0.0
      %3011 = vmatpush1.msra.mxu0 %v2992
      %3012 = vmatprep.subr.mxu0 0.0
      %3013 = vmatpush1.msra.mxu0 %v2993
      %3014 = vmatprep.subr.mxu0 0.0
      %3015 = vmatpush1.msra.mxu0 %v2994
      %3016 = vmatprep.subr.mxu0 0.0
      %3017 = vmatpush1.msra.mxu0 %v2995
      %3018 = vmatprep.subr.mxu0 0.0
      %3019 = vmatpush1.msra.mxu0 0.0
      %3020 = vmatprep.subr.mxu0 0.0
      %3021 = vmatpush1.msra.mxu0 0.0
      %3022 = vmatprep.subr.mxu0 0.0
      %3023 = vmatpush1.msra.mxu0 0.0
      %3024 = vmatprep.subr.mxu0 0.0
      %3025 = vmatpush1.msra.mxu0 0.0
      %3026 = vmatprep.subr.mxu0 0.0
      %3027 = vmatpush1.msra.mxu0 0.0
      %3028 = vmatprep.subr.mxu0 0.0
      %3029 = vmatpush1.msra.mxu0 0.0
      %3030 = vmatprep.subr.mxu0 0.0
      %3031 = vmatpush1.msra.mxu0 0.0
      %3032 = vmatprep.subr.mxu0 0.0
      %3033 = vmatpush1.msra.mxu0 0.0
      %3034 = vmatprep.subr.mxu0 0.0
      %3035 = vmatpush1.msra.mxu0 0.0
      %3036 = vmatprep.subr.mxu0 0.0
      %3037 = vmatpush1.msra.mxu0 0.0
      %3038 = vmatprep.subr.mxu0 0.0
      %3039 = vmatpush1.msra.mxu0 0.0
      %3040 = vmatprep.subr.mxu0 0.0
      %3041 = vmatpush1.msra.mxu0 0.0
      %3042 = vmatprep.subr.mxu0 0.0
      %3043 = vmatpush1.msra.mxu0 0.0
      %3044 = vmatprep.subr.mxu0 0.0
      %3045 = vmatpush1.msra.mxu0 0.0
      %3046 = vmatprep.subr.mxu0 0.0
      %3047 = vmatpush1.msra.mxu0 0.0
      %3048 = vmatprep.subr.mxu0 0.0
      %3049 = vmatpush1.msra.mxu0 0.0
      %3050 = vmatprep.subr.mxu0 0.0
      %3051 = vmatpush1.msra.mxu0 0.0
      %3052 = vmatprep.subr.mxu0 0.0
      %3053 = vmatpush1.msra.mxu0 0.0
      %3054 = vmatprep.subr.mxu0 0.0
      %3055 = vmatpush1.msra.mxu0 0.0
      %3056 = vmatprep.subr.mxu0 0.0
      %3057 = vmatpush1.msra.mxu0 0.0
      %3058 = vmatprep.subr.mxu0 0.0
      %3059 = vmatpush1.msra.mxu0 0.0
      %3060 = vmatprep.subr.mxu0 0.0
      %3061 = vmatpush1.msra.mxu0 0.0
      %3062 = vmatprep.subr.mxu0 0.0
      %3063 = vmatpush1.msra.mxu0 0.0
      %3064 = vmatprep.subr.mxu0 0.0
      %3065 = vmatpush1.msra.mxu0 0.0
      %3066 = vmatprep.subr.mxu0 0.0
      %3067 = vmatpush1.msra.mxu0 0.0
      %3068 = vmatprep.subr.mxu0 0.0
      %3069 = vmatpush1.msra.mxu0 0.0
      %3070 = vmatprep.subr.mxu0 0.0
      %3071 = vmatpush1.msra.mxu0 0.0
      %3072 = vmatprep.subr.mxu0 0.0
      %3073 = vmatpush1.msra.mxu0 0.0
      %3074 = vmatprep.mubr.f32.mxu0 0.0
      %3075 = vmatmul.mubr.f32.gmra.mrb[0].mxu0 %v3005
      %v3076 = vpop.f32.mrb[0].mxu0
      %v3077 = vadd.f32 %v3002, %v3076
      %v3078 = vpop.f32.mrb[0].mxu0
      %3079 = vmatprep.mubr.f32.mxu0 0.0
      %3080 = vmatmul.mubr.f32.gmra.mrb[0].mxu0 %v3008
      %v3081 = vpop.f32.mrb[0].mxu0
      %v3082 = vadd.f32 %v3002, %v3081
      %v3083 = vpop.f32.mrb[0].mxu0
      %3084 = vdwg.mxu0
      %3086 = vrot.lane.b32.xlu0 %v3077, 96
      %v3087 = vpop.permute.xlu0 %3086
      %v3088 = vsel %vm1246, %v3077, 0
      %v3090 = vsel %vm1246, %v3087, 0
      %3092 = vmatprep.subr.mxu0 0.0
      %3093 = vmatpush1.xpose.msra.mxu0 %v3090
      %3094 = vmatprep.subr.mxu0 0.0
      %3095 = vmatpush1.xpose.msra.mxu0 0.0
      %3096 = vmatprep.subr.mxu0 0.0
      %3097 = vmatpush1.xpose.msra.mxu0 0.0
      %3098 = vmatprep.subr.mxu0 0.0
      %3099 = vmatpush1.xpose.msra.mxu0 0.0
      %3100 = vmatprep.subr.mxu0 0.0
      %3101 = vmatpush1.xpose.msra.mxu0 0.0
      %3102 = vmatprep.subr.mxu0 0.0
      %3103 = vmatpush1.xpose.msra.mxu0 0.0
      %3104 = vmatprep.subr.mxu0 0.0
      %3105 = vmatpush1.xpose.msra.mxu0 0.0
      %3106 = vmatprep.subr.mxu0 0.0
      %3107 = vmatpush1.xpose.msra.mxu0 0.0
      %3108 = vmatprep.subr.mxu0 0.0
      %3109 = vmatpush1.xpose.msra.mxu0 0.0
      %3110 = vmatprep.subr.mxu0 0.0
      %3111 = vmatpush1.xpose.msra.mxu0 0.0
      %3112 = vmatprep.subr.mxu0 0.0
      %3113 = vmatpush1.xpose.msra.mxu0 0.0
      %3114 = vmatprep.subr.mxu0 0.0
      %3115 = vmatpush1.xpose.msra.mxu0 0.0
      %3116 = vmatprep.subr.mxu0 0.0
      %3117 = vmatpush1.xpose.msra.mxu0 0.0
      %3118 = vmatprep.subr.mxu0 0.0
      %3119 = vmatpush1.xpose.msra.mxu0 0.0
      %3120 = vmatprep.subr.mxu0 0.0
      %3121 = vmatpush1.xpose.msra.mxu0 0.0
      %3122 = vmatprep.subr.mxu0 0.0
      %3123 = vmatpush1.xpose.msra.mxu0 0.0
      %3124 = vmatprep.subr.mxu0 0.0
      %3125 = vmatpush1.xpose.msra.mxu0 0.0
      %3126 = vmatprep.subr.mxu0 0.0
      %3127 = vmatpush1.xpose.msra.mxu0 0.0
      %3128 = vmatprep.subr.mxu0 0.0
      %3129 = vmatpush1.xpose.msra.mxu0 0.0
      %3130 = vmatprep.subr.mxu0 0.0
      %3131 = vmatpush1.xpose.msra.mxu0 0.0
      %3132 = vmatprep.subr.mxu0 0.0
      %3133 = vmatpush1.xpose.msra.mxu0 0.0
      %3134 = vmatprep.subr.mxu0 0.0
      %3135 = vmatpush1.xpose.msra.mxu0 0.0
      %3136 = vmatprep.subr.mxu0 0.0
      %3137 = vmatpush1.xpose.msra.mxu0 0.0
      %3138 = vmatprep.subr.mxu0 0.0
      %3139 = vmatpush1.xpose.msra.mxu0 0.0
      %3140 = vmatprep.subr.mxu0 0.0
      %3141 = vmatpush1.xpose.msra.mxu0 0.0
      %3142 = vmatprep.subr.mxu0 0.0
      %3143 = vmatpush1.xpose.msra.mxu0 0.0
      %3144 = vmatprep.subr.mxu0 0.0
      %3145 = vmatpush1.xpose.msra.mxu0 0.0
      %3146 = vmatprep.subr.mxu0 0.0
      %3147 = vmatpush1.xpose.msra.mxu0 0.0
      %3148 = vmatprep.subr.mxu0 0.0
      %3149 = vmatpush1.xpose.msra.mxu0 0.0
      %3150 = vmatprep.subr.mxu0 0.0
      %3151 = vmatpush1.xpose.msra.mxu0 0.0
      %3152 = vmatprep.subr.mxu0 0.0
      %3153 = vmatpush1.xpose.msra.mxu0 0.0
      %3154 = vmatprep.subr.mxu0 0.0
      %3155 = vmatpush1.xpose.msra.mxu0 0.0
      %3156 = vmatprep.mubr.f32.mxu0 0.0
      %3157 = vmatmul.mubr.f32.gmra.mrb[0].mxu0 %v3088
      %v3158 = vpop.f32.mrb[0].mxu0
      %v3159 = vadd.f32 0.0, %v3158
      %v3160 = vpop.f32.mrb[0].mxu0
      %3161 = vdwg.mxu0
      %v3162 = vsel %vm1246, %v3159, -inf
      %3163 = vmax.xlane.f32.xlu0 %v3162
      %v3164 = vpop.xlane.xlu0 %3163
      %v3165 = vsub.f32 %v3159, %v3164
      %v3166 = vmul.f32 %v3165, 1.442695
      %v3167 = vpow.pop %v3166
      %v3168 = vsel %vm1246, %v3167, 0.0
      %3169 = vadd.xlane.f32.xlu0 %v3168
      %v3170 = vpop.xlane.xlu0 %3169
      %v3171 = vrcp.pop %v3170
      %v3172 = vmul.f32 %v3167, %v3171
      %3173 = vrot.lane.b32.xlu0 %v3077, 64
      %v3174 = vpop.permute.xlu0 %3173
      %v3177 = vsel %vm1246, %v3172, 0
      %3179 = vmatprep.subr.mxu0 0.0
      %3180 = vmatpush1.msra.mxu0 %v3174
      %3181 = vmatprep.subr.mxu0 0.0
      %3182 = vmatpush1.msra.mxu0 0.0
      %3183 = vmatprep.subr.mxu0 0.0
      %3184 = vmatpush1.msra.mxu0 0.0
      %3185 = vmatprep.subr.mxu0 0.0
      %3186 = vmatpush1.msra.mxu0 0.0
      %3187 = vmatprep.subr.mxu0 0.0
      %3188 = vmatpush1.msra.mxu0 0.0
      %3189 = vmatprep.subr.mxu0 0.0
      %3190 = vmatpush1.msra.mxu0 0.0
      %3191 = vmatprep.subr.mxu0 0.0
      %3192 = vmatpush1.msra.mxu0 0.0
      %3193 = vmatprep.subr.mxu0 0.0
      %3194 = vmatpush1.msra.mxu0 0.0
      %3195 = vmatprep.subr.mxu0 0.0
      %3196 = vmatpush1.msra.mxu0 0.0
      %3197 = vmatprep.subr.mxu0 0.0
      %3198 = vmatpush1.msra.mxu0 0.0
      %3199 = vmatprep.subr.mxu0 0.0
      %3200 = vmatpush1.msra.mxu0 0.0
      %3201 = vmatprep.subr.mxu0 0.0
      %3202 = vmatpush1.msra.mxu0 0.0
      %3203 = vmatprep.subr.mxu0 0.0
      %3204 = vmatpush1.msra.mxu0 0.0
      %3205 = vmatprep.subr.mxu0 0.0
      %3206 = vmatpush1.msra.mxu0 0.0
      %3207 = vmatprep.subr.mxu0 0.0
      %3208 = vmatpush1.msra.mxu0 0.0
      %3209 = vmatprep.subr.mxu0 0.0
      %3210 = vmatpush1.msra.mxu0 0.0
      %3211 = vmatprep.subr.mxu0 0.0
      %3212 = vmatpush1.msra.mxu0 0.0
      %3213 = vmatprep.subr.mxu0 0.0
      %3214 = vmatpush1.msra.mxu0 0.0
      %3215 = vmatprep.subr.mxu0 0.0
      %3216 = vmatpush1.msra.mxu0 0.0
      %3217 = vmatprep.subr.mxu0 0.0
      %3218 = vmatpush1.msra.mxu0 0.0
      %3219 = vmatprep.subr.mxu0 0.0
      %3220 = vmatpush1.msra.mxu0 0.0
      %3221 = vmatprep.subr.mxu0 0.0
      %3222 = vmatpush1.msra.mxu0 0.0
      %3223 = vmatprep.subr.mxu0 0.0
      %3224 = vmatpush1.msra.mxu0 0.0
      %3225 = vmatprep.subr.mxu0 0.0
      %3226 = vmatpush1.msra.mxu0 0.0
      %3227 = vmatprep.subr.mxu0 0.0
      %3228 = vmatpush1.msra.mxu0 0.0
      %3229 = vmatprep.subr.mxu0 0.0
      %3230 = vmatpush1.msra.mxu0 0.0
      %3231 = vmatprep.subr.mxu0 0.0
      %3232 = vmatpush1.msra.mxu0 0.0
      %3233 = vmatprep.subr.mxu0 0.0
      %3234 = vmatpush1.msra.mxu0 0.0
      %3235 = vmatprep.subr.mxu0 0.0
      %3236 = vmatpush1.msra.mxu0 0.0
      %3237 = vmatprep.subr.mxu0 0.0
      %3238 = vmatpush1.msra.mxu0 0.0
      %3239 = vmatprep.subr.mxu0 0.0
      %3240 = vmatpush1.msra.mxu0 0.0
      %3241 = vmatprep.subr.mxu0 0.0
      %3242 = vmatpush1.msra.mxu0 0.0
      %3243 = vmatprep.mubr.f32.mxu0 0.0
      %3244 = vmatmul.mubr.f32.gmra.mrb[0].mxu0 %v3177
      %v3245 = vpop.f32.mrb[0].mxu0
      %v3246 = vadd.f32 0.0, %v3245
      %v3247 = vpop.f32.mrb[0].mxu0
      %3248 = vdwg.mxu0
      %3249 = vrot.lane.b32.xlu0 %v3077, 120
      %v3250 = vpop.permute.xlu0 %3249
      %3251 = vrot.lane.b32.xlu0 %v3077, 88
      %v3252 = vpop.permute.xlu0 %3251
      %v3253 = vsel %vm1246, %v3250, 0
      %v3255 = vsel %vm1246, %v3252, 0
      %3257 = vmatprep.subr.mxu0 0.0
      %3258 = vmatpush1.xpose.msra.mxu0 %v3255
      %3259 = vmatprep.subr.mxu0 0.0
      %3260 = vmatpush1.xpose.msra.mxu0 0.0
      %3261 = vmatprep.subr.mxu0 0.0
      %3262 = vmatpush1.xpose.msra.mxu0 0.0
      %3263 = vmatprep.subr.mxu0 0.0
      %3264 = vmatpush1.xpose.msra.mxu0 0.0
      %3265 = vmatprep.subr.mxu0 0.0
      %3266 = vmatpush1.xpose.msra.mxu0 0.0
      %3267 = vmatprep.subr.mxu0 0.0
      %3268 = vmatpush1.xpose.msra.mxu0 0.0
      %3269 = vmatprep.subr.mxu0 0.0
      %3270 = vmatpush1.xpose.msra.mxu0 0.0
      %3271 = vmatprep.subr.mxu0 0.0
      %3272 = vmatpush1.xpose.msra.mxu0 0.0
      %3273 = vmatprep.subr.mxu0 0.0
      %3274 = vmatpush1.xpose.msra.mxu0 0.0
      %3275 = vmatprep.subr.mxu0 0.0
      %3276 = vmatpush1.xpose.msra.mxu0 0.0
      %3277 = vmatprep.subr.mxu0 0.0
      %3278 = vmatpush1.xpose.msra.mxu0 0.0
      %3279 = vmatprep.subr.mxu0 0.0
      %3280 = vmatpush1.xpose.msra.mxu0 0.0
      %3281 = vmatprep.subr.mxu0 0.0
      %3282 = vmatpush1.xpose.msra.mxu0 0.0
      %3283 = vmatprep.subr.mxu0 0.0
      %3284 = vmatpush1.xpose.msra.mxu0 0.0
      %3285 = vmatprep.subr.mxu0 0.0
      %3286 = vmatpush1.xpose.msra.mxu0 0.0
      %3287 = vmatprep.subr.mxu0 0.0
      %3288 = vmatpush1.xpose.msra.mxu0 0.0
      %3289 = vmatprep.subr.mxu0 0.0
      %3290 = vmatpush1.xpose.msra.mxu0 0.0
      %3291 = vmatprep.subr.mxu0 0.0
      %3292 = vmatpush1.xpose.msra.mxu0 0.0
      %3293 = vmatprep.subr.mxu0 0.0
      %3294 = vmatpush1.xpose.msra.mxu0 0.0
      %3295 = vmatprep.subr.mxu0 0.0
      %3296 = vmatpush1.xpose.msra.mxu0 0.0
      %3297 = vmatprep.subr.mxu0 0.0
      %3298 = vmatpush1.xpose.msra.mxu0 0.0
      %3299 = vmatprep.subr.mxu0 0.0
      %3300 = vmatpush1.xpose.msra.mxu0 0.0
      %3301 = vmatprep.subr.mxu0 0.0
      %3302 = vmatpush1.xpose.msra.mxu0 0.0
      %3303 = vmatprep.subr.mxu0 0.0
      %3304 = vmatpush1.xpose.msra.mxu0 0.0
      %3305 = vmatprep.subr.mxu0 0.0
      %3306 = vmatpush1.xpose.msra.mxu0 0.0
      %3307 = vmatprep.subr.mxu0 0.0
      %3308 = vmatpush1.xpose.msra.mxu0 0.0
      %3309 = vmatprep.subr.mxu0 0.0
      %3310 = vmatpush1.xpose.msra.mxu0 0.0
      %3311 = vmatprep.subr.mxu0 0.0
      %3312 = vmatpush1.xpose.msra.mxu0 0.0
      %3313 = vmatprep.subr.mxu0 0.0
      %3314 = vmatpush1.xpose.msra.mxu0 0.0
      %3315 = vmatprep.subr.mxu0 0.0
      %3316 = vmatpush1.xpose.msra.mxu0 0.0
      %3317 = vmatprep.subr.mxu0 0.0
      %3318 = vmatpush1.xpose.msra.mxu0 0.0
      %3319 = vmatprep.subr.mxu0 0.0
      %3320 = vmatpush1.xpose.msra.mxu0 0.0
      %3321 = vmatprep.mubr.f32.mxu0 0.0
      %3322 = vmatmul.mubr.f32.gmra.mrb[0].mxu0 %v3253
      %v3323 = vpop.f32.mrb[0].mxu0
      %v3324 = vadd.f32 0.0, %v3323
      %v3325 = vpop.f32.mrb[0].mxu0
      %3326 = vdwg.mxu0
      %v3327 = vsel %vm1246, %v3324, -inf
      %3328 = vmax.xlane.f32.xlu0 %v3327
      %v3329 = vpop.xlane.xlu0 %3328
      %v3330 = vsub.f32 %v3324, %v3329
      %v3331 = vmul.f32 %v3330, 1.442695
      %v3332 = vpow.pop %v3331
      %v3333 = vsel %vm1246, %v3332, 0.0
      %3334 = vadd.xlane.f32.xlu0 %v3333
      %v3335 = vpop.xlane.xlu0 %3334
      %v3336 = vrcp.pop %v3335
      %v3337 = vmul.f32 %v3332, %v3336
      %3338 = vrot.lane.b32.xlu0 %v3077, 56
      %v3339 = vpop.permute.xlu0 %3338
      %v3342 = vsel %vm1246, %v3337, 0
      %3344 = vmatprep.subr.mxu0 0.0
      %3345 = vmatpush1.msra.mxu0 %v3339
      %3346 = vmatprep.subr.mxu0 0.0
      %3347 = vmatpush1.msra.mxu0 0.0
      %3348 = vmatprep.subr.mxu0 0.0
      %3349 = vmatpush1.msra.mxu0 0.0
      %3350 = vmatprep.subr.mxu0 0.0
      %3351 = vmatpush1.msra.mxu0 0.0
      %3352 = vmatprep.subr.mxu0 0.0
      %3353 = vmatpush1.msra.mxu0 0.0
      %3354 = vmatprep.subr.mxu0 0.0
      %3355 = vmatpush1.msra.mxu0 0.0
      %3356 = vmatprep.subr.mxu0 0.0
      %3357 = vmatpush1.msra.mxu0 0.0
      %3358 = vmatprep.subr.mxu0 0.0
      %3359 = vmatpush1.msra.mxu0 0.0
      %3360 = vmatprep.subr.mxu0 0.0
      %3361 = vmatpush1.msra.mxu0 0.0
      %3362 = vmatprep.subr.mxu0 0.0
      %3363 = vmatpush1.msra.mxu0 0.0
      %3364 = vmatprep.subr.mxu0 0.0
      %3365 = vmatpush1.msra.mxu0 0.0
      %3366 = vmatprep.subr.mxu0 0.0
      %3367 = vmatpush1.msra.mxu0 0.0
      %3368 = vmatprep.subr.mxu0 0.0
      %3369 = vmatpush1.msra.mxu0 0.0
      %3370 = vmatprep.subr.mxu0 0.0
      %3371 = vmatpush1.msra.mxu0 0.0
      %3372 = vmatprep.subr.mxu0 0.0
      %3373 = vmatpush1.msra.mxu0 0.0
      %3374 = vmatprep.subr.mxu0 0.0
      %3375 = vmatpush1.msra.mxu0 0.0
      %3376 = vmatprep.subr.mxu0 0.0
      %3377 = vmatpush1.msra.mxu0 0.0
      %3378 = vmatprep.subr.mxu0 0.0
      %3379 = vmatpush1.msra.mxu0 0.0
      %3380 = vmatprep.subr.mxu0 0.0
      %3381 = vmatpush1.msra.mxu0 0.0
      %3382 = vmatprep.subr.mxu0 0.0
      %3383 = vmatpush1.msra.mxu0 0.0
      %3384 = vmatprep.subr.mxu0 0.0
      %3385 = vmatpush1.msra.mxu0 0.0
      %3386 = vmatprep.subr.mxu0 0.0
      %3387 = vmatpush1.msra.mxu0 0.0
      %3388 = vmatprep.subr.mxu0 0.0
      %3389 = vmatpush1.msra.mxu0 0.0
      %3390 = vmatprep.subr.mxu0 0.0
      %3391 = vmatpush1.msra.mxu0 0.0
      %3392 = vmatprep.subr.mxu0 0.0
      %3393 = vmatpush1.msra.mxu0 0.0
      %3394 = vmatprep.subr.mxu0 0.0
      %3395 = vmatpush1.msra.mxu0 0.0
      %3396 = vmatprep.subr.mxu0 0.0
      %3397 = vmatpush1.msra.mxu0 0.0
      %3398 = vmatprep.subr.mxu0 0.0
      %3399 = vmatpush1.msra.mxu0 0.0
      %3400 = vmatprep.subr.mxu0 0.0
      %3401 = vmatpush1.msra.mxu0 0.0
      %3402 = vmatprep.subr.mxu0 0.0
      %3403 = vmatpush1.msra.mxu0 0.0
      %3404 = vmatprep.subr.mxu0 0.0
      %3405 = vmatpush1.msra.mxu0 0.0
      %3406 = vmatprep.subr.mxu0 0.0
      %3407 = vmatpush1.msra.mxu0 0.0
      %3408 = vmatprep.mubr.f32.mxu0 0.0
      %3409 = vmatmul.mubr.f32.gmra.mrb[0].mxu0 %v3342
      %v3410 = vpop.f32.mrb[0].mxu0
      %v3411 = vadd.f32 0.0, %v3410
      %v3412 = vpop.f32.mrb[0].mxu0
      %3413 = vdwg.mxu0
      %3414 = vrot.lane.b32.xlu0 %v3077, 112
      %v3415 = vpop.permute.xlu0 %3414
      %3416 = vrot.lane.b32.xlu0 %v3077, 80
      %v3417 = vpop.permute.xlu0 %3416
      %v3418 = vsel %vm1246, %v3415, 0
      %v3420 = vsel %vm1246, %v3417, 0
      %3422 = vmatprep.subr.mxu0 0.0
      %3423 = vmatpush1.xpose.msra.mxu0 %v3420
      %3424 = vmatprep.subr.mxu0 0.0
      %3425 = vmatpush1.xpose.msra.mxu0 0.0
      %3426 = vmatprep.subr.mxu0 0.0
      %3427 = vmatpush1.xpose.msra.mxu0 0.0
      %3428 = vmatprep.subr.mxu0 0.0
      %3429 = vmatpush1.xpose.msra.mxu0 0.0
      %3430 = vmatprep.subr.mxu0 0.0
      %3431 = vmatpush1.xpose.msra.mxu0 0.0
      %3432 = vmatprep.subr.mxu0 0.0
      %3433 = vmatpush1.xpose.msra.mxu0 0.0
      %3434 = vmatprep.subr.mxu0 0.0
      %3435 = vmatpush1.xpose.msra.mxu0 0.0
      %3436 = vmatprep.subr.mxu0 0.0
      %3437 = vmatpush1.xpose.msra.mxu0 0.0
      %3438 = vmatprep.subr.mxu0 0.0
      %3439 = vmatpush1.xpose.msra.mxu0 0.0
      %3440 = vmatprep.subr.mxu0 0.0
      %3441 = vmatpush1.xpose.msra.mxu0 0.0
      %3442 = vmatprep.subr.mxu0 0.0
      %3443 = vmatpush1.xpose.msra.mxu0 0.0
      %3444 = vmatprep.subr.mxu0 0.0
      %3445 = vmatpush1.xpose.msra.mxu0 0.0
      %3446 = vmatprep.subr.mxu0 0.0
      %3447 = vmatpush1.xpose.msra.mxu0 0.0
      %3448 = vmatprep.subr.mxu0 0.0
      %3449 = vmatpush1.xpose.msra.mxu0 0.0
      %3450 = vmatprep.subr.mxu0 0.0
      %3451 = vmatpush1.xpose.msra.mxu0 0.0
      %3452 = vmatprep.subr.mxu0 0.0
      %3453 = vmatpush1.xpose.msra.mxu0 0.0
      %3454 = vmatprep.subr.mxu0 0.0
      %3455 = vmatpush1.xpose.msra.mxu0 0.0
      %3456 = vmatprep.subr.mxu0 0.0
      %3457 = vmatpush1.xpose.msra.mxu0 0.0
      %3458 = vmatprep.subr.mxu0 0.0
      %3459 = vmatpush1.xpose.msra.mxu0 0.0
      %3460 = vmatprep.subr.mxu0 0.0
      %3461 = vmatpush1.xpose.msra.mxu0 0.0
      %3462 = vmatprep.subr.mxu0 0.0
      %3463 = vmatpush1.xpose.msra.mxu0 0.0
      %3464 = vmatprep.subr.mxu0 0.0
      %3465 = vmatpush1.xpose.msra.mxu0 0.0
      %3466 = vmatprep.subr.mxu0 0.0
      %3467 = vmatpush1.xpose.msra.mxu0 0.0
      %3468 = vmatprep.subr.mxu0 0.0
      %3469 = vmatpush1.xpose.msra.mxu0 0.0
      %3470 = vmatprep.subr.mxu0 0.0
      %3471 = vmatpush1.xpose.msra.mxu0 0.0
      %3472 = vmatprep.subr.mxu0 0.0
      %3473 = vmatpush1.xpose.msra.mxu0 0.0
      %3474 = vmatprep.subr.mxu0 0.0
      %3475 = vmatpush1.xpose.msra.mxu0 0.0
      %3476 = vmatprep.subr.mxu0 0.0
      %3477 = vmatpush1.xpose.msra.mxu0 0.0
      %3478 = vmatprep.subr.mxu0 0.0
      %3479 = vmatpush1.xpose.msra.mxu0 0.0
      %3480 = vmatprep.subr.mxu0 0.0
      %3481 = vmatpush1.xpose.msra.mxu0 0.0
      %3482 = vmatprep.subr.mxu0 0.0
      %3483 = vmatpush1.xpose.msra.mxu0 0.0
      %3484 = vmatprep.subr.mxu0 0.0
      %3485 = vmatpush1.xpose.msra.mxu0 0.0
      %3486 = vmatprep.mubr.f32.mxu0 0.0
      %3487 = vmatmul.mubr.f32.gmra.mrb[0].mxu0 %v3418
      %v3488 = vpop.f32.mrb[0].mxu0
      %v3489 = vadd.f32 0.0, %v3488
      %v3490 = vpop.f32.mrb[0].mxu0
      %3491 = vdwg.mxu0
      %v3492 = vsel %vm1246, %v3489, -inf
      %3493 = vmax.xlane.f32.xlu0 %v3492
      %v3494 = vpop.xlane.xlu0 %3493
      %v3495 = vsub.f32 %v3489, %v3494
      %v3496 = vmul.f32 %v3495, 1.442695
      %v3497 = vpow.pop %v3496
      %v3498 = vsel %vm1246, %v3497, 0.0
      %3499 = vadd.xlane.f32.xlu0 %v3498
      %v3500 = vpop.xlane.xlu0 %3499
      %v3501 = vrcp.pop %v3500
      %v3502 = vmul.f32 %v3497, %v3501
      %3503 = vrot.lane.b32.xlu0 %v3077, 48
      %v3504 = vpop.permute.xlu0 %3503
      %v3507 = vsel %vm1246, %v3502, 0
      %3509 = vmatprep.subr.mxu0 0.0
      %3510 = vmatpush1.msra.mxu0 %v3504
      %3511 = vmatprep.subr.mxu0 0.0
      %3512 = vmatpush1.msra.mxu0 0.0
      %3513 = vmatprep.subr.mxu0 0.0
      %3514 = vmatpush1.msra.mxu0 0.0
      %3515 = vmatprep.subr.mxu0 0.0
      %3516 = vmatpush1.msra.mxu0 0.0
      %3517 = vmatprep.subr.mxu0 0.0
      %3518 = vmatpush1.msra.mxu0 0.0
      %3519 = vmatprep.subr.mxu0 0.0
      %3520 = vmatpush1.msra.mxu0 0.0
      %3521 = vmatprep.subr.mxu0 0.0
      %3522 = vmatpush1.msra.mxu0 0.0
      %3523 = vmatprep.subr.mxu0 0.0
      %3524 = vmatpush1.msra.mxu0 0.0
      %3525 = vmatprep.subr.mxu0 0.0
      %3526 = vmatpush1.msra.mxu0 0.0
      %3527 = vmatprep.subr.mxu0 0.0
      %3528 = vmatpush1.msra.mxu0 0.0
      %3529 = vmatprep.subr.mxu0 0.0
      %3530 = vmatpush1.msra.mxu0 0.0
      %3531 = vmatprep.subr.mxu0 0.0
      %3532 = vmatpush1.msra.mxu0 0.0
      %3533 = vmatprep.subr.mxu0 0.0
      %3534 = vmatpush1.msra.mxu0 0.0
      %3535 = vmatprep.subr.mxu0 0.0
      %3536 = vmatpush1.msra.mxu0 0.0
      %3537 = vmatprep.subr.mxu0 0.0
      %3538 = vmatpush1.msra.mxu0 0.0
      %3539 = vmatprep.subr.mxu0 0.0
      %3540 = vmatpush1.msra.mxu0 0.0
      %3541 = vmatprep.subr.mxu0 0.0
      %3542 = vmatpush1.msra.mxu0 0.0
      %3543 = vmatprep.subr.mxu0 0.0
      %3544 = vmatpush1.msra.mxu0 0.0
      %3545 = vmatprep.subr.mxu0 0.0
      %3546 = vmatpush1.msra.mxu0 0.0
      %3547 = vmatprep.subr.mxu0 0.0
      %3548 = vmatpush1.msra.mxu0 0.0
      %3549 = vmatprep.subr.mxu0 0.0
      %3550 = vmatpush1.msra.mxu0 0.0
      %3551 = vmatprep.subr.mxu0 0.0
      %3552 = vmatpush1.msra.mxu0 0.0
      %3553 = vmatprep.subr.mxu0 0.0
      %3554 = vmatpush1.msra.mxu0 0.0
      %3555 = vmatprep.subr.mxu0 0.0
      %3556 = vmatpush1.msra.mxu0 0.0
      %3557 = vmatprep.subr.mxu0 0.0
      %3558 = vmatpush1.msra.mxu0 0.0
      %3559 = vmatprep.subr.mxu0 0.0
      %3560 = vmatpush1.msra.mxu0 0.0
      %3561 = vmatprep.subr.mxu0 0.0
      %3562 = vmatpush1.msra.mxu0 0.0
      %3563 = vmatprep.subr.mxu0 0.0
      %3564 = vmatpush1.msra.mxu0 0.0
      %3565 = vmatprep.subr.mxu0 0.0
      %3566 = vmatpush1.msra.mxu0 0.0
      %3567 = vmatprep.subr.mxu0 0.0
      %3568 = vmatpush1.msra.mxu0 0.0
      %3569 = vmatprep.subr.mxu0 0.0
      %3570 = vmatpush1.msra.mxu0 0.0
      %3571 = vmatprep.subr.mxu0 0.0
      %3572 = vmatpush1.msra.mxu0 0.0
      %3573 = vmatprep.mubr.f32.mxu0 0.0
      %3574 = vmatmul.mubr.f32.gmra.mrb[0].mxu0 %v3507
      %v3575 = vpop.f32.mrb[0].mxu0
      %v3576 = vadd.f32 0.0, %v3575
      %v3577 = vpop.f32.mrb[0].mxu0
      %3578 = vdwg.mxu0
      %3579 = vrot.lane.b32.xlu0 %v3077, 104
      %v3580 = vpop.permute.xlu0 %3579
      %3581 = vrot.lane.b32.xlu0 %v3077, 72
      %v3582 = vpop.permute.xlu0 %3581
      %v3583 = vsel %vm1246, %v3580, 0
      %v3585 = vsel %vm1246, %v3582, 0
      %3587 = vmatprep.subr.mxu0 0.0
      %3588 = vmatpush1.xpose.msra.mxu0 %v3585
      %3589 = vmatprep.subr.mxu0 0.0
      %3590 = vmatpush1.xpose.msra.mxu0 0.0
      %3591 = vmatprep.subr.mxu0 0.0
      %3592 = vmatpush1.xpose.msra.mxu0 0.0
      %3593 = vmatprep.subr.mxu0 0.0
      %3594 = vmatpush1.xpose.msra.mxu0 0.0
      %3595 = vmatprep.subr.mxu0 0.0
      %3596 = vmatpush1.xpose.msra.mxu0 0.0
      %3597 = vmatprep.subr.mxu0 0.0
      %3598 = vmatpush1.xpose.msra.mxu0 0.0
      %3599 = vmatprep.subr.mxu0 0.0
      %3600 = vmatpush1.xpose.msra.mxu0 0.0
      %3601 = vmatprep.subr.mxu0 0.0
      %3602 = vmatpush1.xpose.msra.mxu0 0.0
      %3603 = vmatprep.subr.mxu0 0.0
      %3604 = vmatpush1.xpose.msra.mxu0 0.0
      %3605 = vmatprep.subr.mxu0 0.0
      %3606 = vmatpush1.xpose.msra.mxu0 0.0
      %3607 = vmatprep.subr.mxu0 0.0
      %3608 = vmatpush1.xpose.msra.mxu0 0.0
      %3609 = vmatprep.subr.mxu0 0.0
      %3610 = vmatpush1.xpose.msra.mxu0 0.0
      %3611 = vmatprep.subr.mxu0 0.0
      %3612 = vmatpush1.xpose.msra.mxu0 0.0
      %3613 = vmatprep.subr.mxu0 0.0
      %3614 = vmatpush1.xpose.msra.mxu0 0.0
      %3615 = vmatprep.subr.mxu0 0.0
      %3616 = vmatpush1.xpose.msra.mxu0 0.0
      %3617 = vmatprep.subr.mxu0 0.0
      %3618 = vmatpush1.xpose.msra.mxu0 0.0
      %3619 = vmatprep.subr.mxu0 0.0
      %3620 = vmatpush1.xpose.msra.mxu0 0.0
      %3621 = vmatprep.subr.mxu0 0.0
      %3622 = vmatpush1.xpose.msra.mxu0 0.0
      %3623 = vmatprep.subr.mxu0 0.0
      %3624 = vmatpush1.xpose.msra.mxu0 0.0
      %3625 = vmatprep.subr.mxu0 0.0
      %3626 = vmatpush1.xpose.msra.mxu0 0.0
      %3627 = vmatprep.subr.mxu0 0.0
      %3628 = vmatpush1.xpose.msra.mxu0 0.0
      %3629 = vmatprep.subr.mxu0 0.0
      %3630 = vmatpush1.xpose.msra.mxu0 0.0
      %3631 = vmatprep.subr.mxu0 0.0
      %3632 = vmatpush1.xpose.msra.mxu0 0.0
      %3633 = vmatprep.subr.mxu0 0.0
      %3634 = vmatpush1.xpose.msra.mxu0 0.0
      %3635 = vmatprep.subr.mxu0 0.0
      %3636 = vmatpush1.xpose.msra.mxu0 0.0
      %3637 = vmatprep.subr.mxu0 0.0
      %3638 = vmatpush1.xpose.msra.mxu0 0.0
      %3639 = vmatprep.subr.mxu0 0.0
      %3640 = vmatpush1.xpose.msra.mxu0 0.0
      %3641 = vmatprep.subr.mxu0 0.0
      %3642 = vmatpush1.xpose.msra.mxu0 0.0
      %3643 = vmatprep.subr.mxu0 0.0
      %3644 = vmatpush1.xpose.msra.mxu0 0.0
      %3645 = vmatprep.subr.mxu0 0.0
      %3646 = vmatpush1.xpose.msra.mxu0 0.0
      %3647 = vmatprep.subr.mxu0 0.0
      %3648 = vmatpush1.xpose.msra.mxu0 0.0
      %3649 = vmatprep.subr.mxu0 0.0
      %3650 = vmatpush1.xpose.msra.mxu0 0.0
      %3651 = vmatprep.mubr.f32.mxu0 0.0
      %3652 = vmatmul.mubr.f32.gmra.mrb[0].mxu0 %v3583
      %v3653 = vpop.f32.mrb[0].mxu0
      %v3654 = vadd.f32 0.0, %v3653
      %v3655 = vpop.f32.mrb[0].mxu0
      %3656 = vdwg.mxu0
      %v3657 = vsel %vm1246, %v3654, -inf
      %3658 = vmax.xlane.f32.xlu0 %v3657
      %v3659 = vpop.xlane.xlu0 %3658
      %v3660 = vsub.f32 %v3654, %v3659
      %v3661 = vmul.f32 %v3660, 1.442695
      %v3662 = vpow.pop %v3661
      %v3663 = vsel %vm1246, %v3662, 0.0
      %3664 = vadd.xlane.f32.xlu0 %v3663
      %v3665 = vpop.xlane.xlu0 %3664
      %v3666 = vrcp.pop %v3665
      %v3667 = vmul.f32 %v3662, %v3666
      %3668 = vrot.lane.b32.xlu0 %v3077, 40
      %v3669 = vpop.permute.xlu0 %3668
      %v3672 = vsel %vm1246, %v3667, 0
      %3674 = vmatprep.subr.mxu0 0.0
      %3675 = vmatpush1.msra.mxu0 %v3669
      %3676 = vmatprep.subr.mxu0 0.0
      %3677 = vmatpush1.msra.mxu0 0.0
      %3678 = vmatprep.subr.mxu0 0.0
      %3679 = vmatpush1.msra.mxu0 0.0
      %3680 = vmatprep.subr.mxu0 0.0
      %3681 = vmatpush1.msra.mxu0 0.0
      %3682 = vmatprep.subr.mxu0 0.0
      %3683 = vmatpush1.msra.mxu0 0.0
      %3684 = vmatprep.subr.mxu0 0.0
      %3685 = vmatpush1.msra.mxu0 0.0
      %3686 = vmatprep.subr.mxu0 0.0
      %3687 = vmatpush1.msra.mxu0 0.0
      %3688 = vmatprep.subr.mxu0 0.0
      %3689 = vmatpush1.msra.mxu0 0.0
      %3690 = vmatprep.subr.mxu0 0.0
      %3691 = vmatpush1.msra.mxu0 0.0
      %3692 = vmatprep.subr.mxu0 0.0
      %3693 = vmatpush1.msra.mxu0 0.0
      %3694 = vmatprep.subr.mxu0 0.0
      %3695 = vmatpush1.msra.mxu0 0.0
      %3696 = vmatprep.subr.mxu0 0.0
      %3697 = vmatpush1.msra.mxu0 0.0
      %3698 = vmatprep.subr.mxu0 0.0
      %3699 = vmatpush1.msra.mxu0 0.0
      %3700 = vmatprep.subr.mxu0 0.0
      %3701 = vmatpush1.msra.mxu0 0.0
      %3702 = vmatprep.subr.mxu0 0.0
      %3703 = vmatpush1.msra.mxu0 0.0
      %3704 = vmatprep.subr.mxu0 0.0
      %3705 = vmatpush1.msra.mxu0 0.0
      %3706 = vmatprep.subr.mxu0 0.0
      %3707 = vmatpush1.msra.mxu0 0.0
      %3708 = vmatprep.subr.mxu0 0.0
      %3709 = vmatpush1.msra.mxu0 0.0
      %3710 = vmatprep.subr.mxu0 0.0
      %3711 = vmatpush1.msra.mxu0 0.0
      %3712 = vmatprep.subr.mxu0 0.0
      %3713 = vmatpush1.msra.mxu0 0.0
      %3714 = vmatprep.subr.mxu0 0.0
      %3715 = vmatpush1.msra.mxu0 0.0
      %3716 = vmatprep.subr.mxu0 0.0
      %3717 = vmatpush1.msra.mxu0 0.0
      %3718 = vmatprep.subr.mxu0 0.0
      %3719 = vmatpush1.msra.mxu0 0.0
      %3720 = vmatprep.subr.mxu0 0.0
      %3721 = vmatpush1.msra.mxu0 0.0
      %3722 = vmatprep.subr.mxu0 0.0
      %3723 = vmatpush1.msra.mxu0 0.0
      %3724 = vmatprep.subr.mxu0 0.0
      %3725 = vmatpush1.msra.mxu0 0.0
      %3726 = vmatprep.subr.mxu0 0.0
      %3727 = vmatpush1.msra.mxu0 0.0
      %3728 = vmatprep.subr.mxu0 0.0
      %3729 = vmatpush1.msra.mxu0 0.0
      %3730 = vmatprep.subr.mxu0 0.0
      %3731 = vmatpush1.msra.mxu0 0.0
      %3732 = vmatprep.subr.mxu0 0.0
      %3733 = vmatpush1.msra.mxu0 0.0
      %3734 = vmatprep.subr.mxu0 0.0
      %3735 = vmatpush1.msra.mxu0 0.0
      %3736 = vmatprep.subr.mxu0 0.0
      %3737 = vmatpush1.msra.mxu0 0.0
      %3738 = vmatprep.mubr.f32.mxu0 0.0
      %3739 = vmatmul.mubr.f32.gmra.mrb[0].mxu0 %v3672
      %v3740 = vpop.f32.mrb[0].mxu0
      %v3741 = vadd.f32 0.0, %v3740
      %v3742 = vpop.f32.mrb[0].mxu0
      %3743 = vdwg.mxu0
      %3745 = vrot.lane.b32.xlu0 %v3411, 8
      %v3746 = vpop.permute.xlu0 %3745
      %3749 = vrot.lane.b32.xlu0 %v3576, 16
      %v3750 = vpop.permute.xlu0 %3749
      %3753 = vrot.lane.b32.xlu0 %v3741, 24
      %v3754 = vpop.permute.xlu0 %3753
      %v3756 = vsel %vm1246, %v3246, %v3746
      %v3757 = vsel %vm1916, %v3756, %v3750
      %v3758 = vsel %vm1918, %v3757, %v3754
      %3760 = vrot.lane.b32.xlu0 %v3082, 96
      %v3761 = vpop.permute.xlu0 %3760
      %v3762 = vsel %vm1246, %v3082, 0
      %v3764 = vsel %vm1246, %v3761, 0
      %3766 = vmatprep.subr.mxu0 0.0
      %3767 = vmatpush1.xpose.msra.mxu0 %v3764
      %3768 = vmatprep.subr.mxu0 0.0
      %3769 = vmatpush1.xpose.msra.mxu0 0.0
      %3770 = vmatprep.subr.mxu0 0.0
      %3771 = vmatpush1.xpose.msra.mxu0 0.0
      %3772 = vmatprep.subr.mxu0 0.0
      %3773 = vmatpush1.xpose.msra.mxu0 0.0
      %3774 = vmatprep.subr.mxu0 0.0
      %3775 = vmatpush1.xpose.msra.mxu0 0.0
      %3776 = vmatprep.subr.mxu0 0.0
      %3777 = vmatpush1.xpose.msra.mxu0 0.0
      %3778 = vmatprep.subr.mxu0 0.0
      %3779 = vmatpush1.xpose.msra.mxu0 0.0
      %3780 = vmatprep.subr.mxu0 0.0
      %3781 = vmatpush1.xpose.msra.mxu0 0.0
      %3782 = vmatprep.subr.mxu0 0.0
      %3783 = vmatpush1.xpose.msra.mxu0 0.0
      %3784 = vmatprep.subr.mxu0 0.0
      %3785 = vmatpush1.xpose.msra.mxu0 0.0
      %3786 = vmatprep.subr.mxu0 0.0
      %3787 = vmatpush1.xpose.msra.mxu0 0.0
      %3788 = vmatprep.subr.mxu0 0.0
      %3789 = vmatpush1.xpose.msra.mxu0 0.0
      %3790 = vmatprep.subr.mxu0 0.0
      %3791 = vmatpush1.xpose.msra.mxu0 0.0
      %3792 = vmatprep.subr.mxu0 0.0
      %3793 = vmatpush1.xpose.msra.mxu0 0.0
      %3794 = vmatprep.subr.mxu0 0.0
      %3795 = vmatpush1.xpose.msra.mxu0 0.0
      %3796 = vmatprep.subr.mxu0 0.0
      %3797 = vmatpush1.xpose.msra.mxu0 0.0
      %3798 = vmatprep.subr.mxu0 0.0
      %3799 = vmatpush1.xpose.msra.mxu0 0.0
      %3800 = vmatprep.subr.mxu0 0.0
      %3801 = vmatpush1.xpose.msra.mxu0 0.0
      %3802 = vmatprep.subr.mxu0 0.0
      %3803 = vmatpush1.xpose.msra.mxu0 0.0
      %3804 = vmatprep.subr.mxu0 0.0
      %3805 = vmatpush1.xpose.msra.mxu0 0.0
      %3806 = vmatprep.subr.mxu0 0.0
      %3807 = vmatpush1.xpose.msra.mxu0 0.0
      %3808 = vmatprep.subr.mxu0 0.0
      %3809 = vmatpush1.xpose.msra.mxu0 0.0
      %3810 = vmatprep.subr.mxu0 0.0
      %3811 = vmatpush1.xpose.msra.mxu0 0.0
      %3812 = vmatprep.subr.mxu0 0.0
      %3813 = vmatpush1.xpose.msra.mxu0 0.0
      %3814 = vmatprep.subr.mxu0 0.0
      %3815 = vmatpush1.xpose.msra.mxu0 0.0
      %3816 = vmatprep.subr.mxu0 0.0
      %3817 = vmatpush1.xpose.msra.mxu0 0.0
      %3818 = vmatprep.subr.mxu0 0.0
      %3819 = vmatpush1.xpose.msra.mxu0 0.0
      %3820 = vmatprep.subr.mxu0 0.0
      %3821 = vmatpush1.xpose.msra.mxu0 0.0
      %3822 = vmatprep.subr.mxu0 0.0
      %3823 = vmatpush1.xpose.msra.mxu0 0.0
      %3824 = vmatprep.subr.mxu0 0.0
      %3825 = vmatpush1.xpose.msra.mxu0 0.0
      %3826 = vmatprep.subr.mxu0 0.0
      %3827 = vmatpush1.xpose.msra.mxu0 0.0
      %3828 = vmatprep.subr.mxu0 0.0
      %3829 = vmatpush1.xpose.msra.mxu0 0.0
      %3830 = vmatprep.mubr.f32.mxu0 0.0
      %3831 = vmatmul.mubr.f32.gmra.mrb[0].mxu0 %v3762
      %v3832 = vpop.f32.mrb[0].mxu0
      %v3833 = vadd.f32 0.0, %v3832
      %v3834 = vpop.f32.mrb[0].mxu0
      %3835 = vdwg.mxu0
      %v3836 = vsel %vm1246, %v3833, -inf
      %3837 = vmax.xlane.f32.xlu0 %v3836
      %v3838 = vpop.xlane.xlu0 %3837
      %v3839 = vsub.f32 %v3833, %v3838
      %v3840 = vmul.f32 %v3839, 1.442695
      %v3841 = vpow.pop %v3840
      %v3842 = vsel %vm1246, %v3841, 0.0
      %3843 = vadd.xlane.f32.xlu0 %v3842
      %v3844 = vpop.xlane.xlu0 %3843
      %v3845 = vrcp.pop %v3844
      %v3846 = vmul.f32 %v3841, %v3845
      %3847 = vrot.lane.b32.xlu0 %v3082, 64
      %v3848 = vpop.permute.xlu0 %3847
      %v3851 = vsel %vm1246, %v3846, 0
      %3853 = vmatprep.subr.mxu0 0.0
      %3854 = vmatpush1.msra.mxu0 %v3848
      %3855 = vmatprep.subr.mxu0 0.0
      %3856 = vmatpush1.msra.mxu0 0.0
      %3857 = vmatprep.subr.mxu0 0.0
      %3858 = vmatpush1.msra.mxu0 0.0
      %3859 = vmatprep.subr.mxu0 0.0
      %3860 = vmatpush1.msra.mxu0 0.0
      %3861 = vmatprep.subr.mxu0 0.0
      %3862 = vmatpush1.msra.mxu0 0.0
      %3863 = vmatprep.subr.mxu0 0.0
      %3864 = vmatpush1.msra.mxu0 0.0
      %3865 = vmatprep.subr.mxu0 0.0
      %3866 = vmatpush1.msra.mxu0 0.0
      %3867 = vmatprep.subr.mxu0 0.0
      %3868 = vmatpush1.msra.mxu0 0.0
      %3869 = vmatprep.subr.mxu0 0.0
      %3870 = vmatpush1.msra.mxu0 0.0
      %3871 = vmatprep.subr.mxu0 0.0
      %3872 = vmatpush1.msra.mxu0 0.0
      %3873 = vmatprep.subr.mxu0 0.0
      %3874 = vmatpush1.msra.mxu0 0.0
      %3875 = vmatprep.subr.mxu0 0.0
      %3876 = vmatpush1.msra.mxu0 0.0
      %3877 = vmatprep.subr.mxu0 0.0
      %3878 = vmatpush1.msra.mxu0 0.0
      %3879 = vmatprep.subr.mxu0 0.0
      %3880 = vmatpush1.msra.mxu0 0.0
      %3881 = vmatprep.subr.mxu0 0.0
      %3882 = vmatpush1.msra.mxu0 0.0
      %3883 = vmatprep.subr.mxu0 0.0
      %3884 = vmatpush1.msra.mxu0 0.0
      %3885 = vmatprep.subr.mxu0 0.0
      %3886 = vmatpush1.msra.mxu0 0.0
      %3887 = vmatprep.subr.mxu0 0.0
      %3888 = vmatpush1.msra.mxu0 0.0
      %3889 = vmatprep.subr.mxu0 0.0
      %3890 = vmatpush1.msra.mxu0 0.0
      %3891 = vmatprep.subr.mxu0 0.0
      %3892 = vmatpush1.msra.mxu0 0.0
      %3893 = vmatprep.subr.mxu0 0.0
      %3894 = vmatpush1.msra.mxu0 0.0
      %3895 = vmatprep.subr.mxu0 0.0
      %3896 = vmatpush1.msra.mxu0 0.0
      %3897 = vmatprep.subr.mxu0 0.0
      %3898 = vmatpush1.msra.mxu0 0.0
      %3899 = vmatprep.subr.mxu0 0.0
      %3900 = vmatpush1.msra.mxu0 0.0
      %3901 = vmatprep.subr.mxu0 0.0
      %3902 = vmatpush1.msra.mxu0 0.0
      %3903 = vmatprep.subr.mxu0 0.0
      %3904 = vmatpush1.msra.mxu0 0.0
      %3905 = vmatprep.subr.mxu0 0.0
      %3906 = vmatpush1.msra.mxu0 0.0
      %3907 = vmatprep.subr.mxu0 0.0
      %3908 = vmatpush1.msra.mxu0 0.0
      %3909 = vmatprep.subr.mxu0 0.0
      %3910 = vmatpush1.msra.mxu0 0.0
      %3911 = vmatprep.subr.mxu0 0.0
      %3912 = vmatpush1.msra.mxu0 0.0
      %3913 = vmatprep.subr.mxu0 0.0
      %3914 = vmatpush1.msra.mxu0 0.0
      %3915 = vmatprep.subr.mxu0 0.0
      %3916 = vmatpush1.msra.mxu0 0.0
      %3917 = vmatprep.mubr.f32.mxu0 0.0
      %3918 = vmatmul.mubr.f32.gmra.mrb[0].mxu0 %v3851
      %v3919 = vpop.f32.mrb[0].mxu0
      %v3920 = vadd.f32 0.0, %v3919
      %v3921 = vpop.f32.mrb[0].mxu0
      %3922 = vdwg.mxu0
      %3923 = vrot.lane.b32.xlu0 %v3082, 120
      %v3924 = vpop.permute.xlu0 %3923
      %3925 = vrot.lane.b32.xlu0 %v3082, 88
      %v3926 = vpop.permute.xlu0 %3925
      %v3927 = vsel %vm1246, %v3924, 0
      %v3929 = vsel %vm1246, %v3926, 0
      %3931 = vmatprep.subr.mxu0 0.0
      %3932 = vmatpush1.xpose.msra.mxu0 %v3929
      %3933 = vmatprep.subr.mxu0 0.0
      %3934 = vmatpush1.xpose.msra.mxu0 0.0
      %3935 = vmatprep.subr.mxu0 0.0
      %3936 = vmatpush1.xpose.msra.mxu0 0.0
      %3937 = vmatprep.subr.mxu0 0.0
      %3938 = vmatpush1.xpose.msra.mxu0 0.0
      %3939 = vmatprep.subr.mxu0 0.0
      %3940 = vmatpush1.xpose.msra.mxu0 0.0
      %3941 = vmatprep.subr.mxu0 0.0
      %3942 = vmatpush1.xpose.msra.mxu0 0.0
      %3943 = vmatprep.subr.mxu0 0.0
      %3944 = vmatpush1.xpose.msra.mxu0 0.0
      %3945 = vmatprep.subr.mxu0 0.0
      %3946 = vmatpush1.xpose.msra.mxu0 0.0
      %3947 = vmatprep.subr.mxu0 0.0
      %3948 = vmatpush1.xpose.msra.mxu0 0.0
      %3949 = vmatprep.subr.mxu0 0.0
      %3950 = vmatpush1.xpose.msra.mxu0 0.0
      %3951 = vmatprep.subr.mxu0 0.0
      %3952 = vmatpush1.xpose.msra.mxu0 0.0
      %3953 = vmatprep.subr.mxu0 0.0
      %3954 = vmatpush1.xpose.msra.mxu0 0.0
      %3955 = vmatprep.subr.mxu0 0.0
      %3956 = vmatpush1.xpose.msra.mxu0 0.0
      %3957 = vmatprep.subr.mxu0 0.0
      %3958 = vmatpush1.xpose.msra.mxu0 0.0
      %3959 = vmatprep.subr.mxu0 0.0
      %3960 = vmatpush1.xpose.msra.mxu0 0.0
      %3961 = vmatprep.subr.mxu0 0.0
      %3962 = vmatpush1.xpose.msra.mxu0 0.0
      %3963 = vmatprep.subr.mxu0 0.0
      %3964 = vmatpush1.xpose.msra.mxu0 0.0
      %3965 = vmatprep.subr.mxu0 0.0
      %3966 = vmatpush1.xpose.msra.mxu0 0.0
      %3967 = vmatprep.subr.mxu0 0.0
      %3968 = vmatpush1.xpose.msra.mxu0 0.0
      %3969 = vmatprep.subr.mxu0 0.0
      %3970 = vmatpush1.xpose.msra.mxu0 0.0
      %3971 = vmatprep.subr.mxu0 0.0
      %3972 = vmatpush1.xpose.msra.mxu0 0.0
      %3973 = vmatprep.subr.mxu0 0.0
      %3974 = vmatpush1.xpose.msra.mxu0 0.0
      %3975 = vmatprep.subr.mxu0 0.0
      %3976 = vmatpush1.xpose.msra.mxu0 0.0
      %3977 = vmatprep.subr.mxu0 0.0
      %3978 = vmatpush1.xpose.msra.mxu0 0.0
      %3979 = vmatprep.subr.mxu0 0.0
      %3980 = vmatpush1.xpose.msra.mxu0 0.0
      %3981 = vmatprep.subr.mxu0 0.0
      %3982 = vmatpush1.xpose.msra.mxu0 0.0
      %3983 = vmatprep.subr.mxu0 0.0
      %3984 = vmatpush1.xpose.msra.mxu0 0.0
      %3985 = vmatprep.subr.mxu0 0.0
      %3986 = vmatpush1.xpose.msra.mxu0 0.0
      %3987 = vmatprep.subr.mxu0 0.0
      %3988 = vmatpush1.xpose.msra.mxu0 0.0
      %3989 = vmatprep.subr.mxu0 0.0
      %3990 = vmatpush1.xpose.msra.mxu0 0.0
      %3991 = vmatprep.subr.mxu0 0.0
      %3992 = vmatpush1.xpose.msra.mxu0 0.0
      %3993 = vmatprep.subr.mxu0 0.0
      %3994 = vmatpush1.xpose.msra.mxu0 0.0
      %3995 = vmatprep.mubr.f32.mxu0 0.0
      %3996 = vmatmul.mubr.f32.gmra.mrb[0].mxu0 %v3927
      %v3997 = vpop.f32.mrb[0].mxu0
      %v3998 = vadd.f32 0.0, %v3997
      %v3999 = vpop.f32.mrb[0].mxu0
      %4000 = vdwg.mxu0
      %v4001 = vsel %vm1246, %v3998, -inf
      %4002 = vmax.xlane.f32.xlu0 %v4001
      %v4003 = vpop.xlane.xlu0 %4002
      %v4004 = vsub.f32 %v3998, %v4003
      %v4005 = vmul.f32 %v4004, 1.442695
      %v4006 = vpow.pop %v4005
      %v4007 = vsel %vm1246, %v4006, 0.0
      %4008 = vadd.xlane.f32.xlu0 %v4007
      %v4009 = vpop.xlane.xlu0 %4008
      %v4010 = vrcp.pop %v4009
      %v4011 = vmul.f32 %v4006, %v4010
      %4012 = vrot.lane.b32.xlu0 %v3082, 56
      %v4013 = vpop.permute.xlu0 %4012
      %v4016 = vsel %vm1246, %v4011, 0
      %4018 = vmatprep.subr.mxu0 0.0
      %4019 = vmatpush1.msra.mxu0 %v4013
      %4020 = vmatprep.subr.mxu0 0.0
      %4021 = vmatpush1.msra.mxu0 0.0
      %4022 = vmatprep.subr.mxu0 0.0
      %4023 = vmatpush1.msra.mxu0 0.0
      %4024 = vmatprep.subr.mxu0 0.0
      %4025 = vmatpush1.msra.mxu0 0.0
      %4026 = vmatprep.subr.mxu0 0.0
      %4027 = vmatpush1.msra.mxu0 0.0
      %4028 = vmatprep.subr.mxu0 0.0
      %4029 = vmatpush1.msra.mxu0 0.0
      %4030 = vmatprep.subr.mxu0 0.0
      %4031 = vmatpush1.msra.mxu0 0.0
      %4032 = vmatprep.subr.mxu0 0.0
      %4033 = vmatpush1.msra.mxu0 0.0
      %4034 = vmatprep.subr.mxu0 0.0
      %4035 = vmatpush1.msra.mxu0 0.0
      %4036 = vmatprep.subr.mxu0 0.0
      %4037 = vmatpush1.msra.mxu0 0.0
      %4038 = vmatprep.subr.mxu0 0.0
      %4039 = vmatpush1.msra.mxu0 0.0
      %4040 = vmatprep.subr.mxu0 0.0
      %4041 = vmatpush1.msra.mxu0 0.0
      %4042 = vmatprep.subr.mxu0 0.0
      %4043 = vmatpush1.msra.mxu0 0.0
      %4044 = vmatprep.subr.mxu0 0.0
      %4045 = vmatpush1.msra.mxu0 0.0
      %4046 = vmatprep.subr.mxu0 0.0
      %4047 = vmatpush1.msra.mxu0 0.0
      %4048 = vmatprep.subr.mxu0 0.0
      %4049 = vmatpush1.msra.mxu0 0.0
      %4050 = vmatprep.subr.mxu0 0.0
      %4051 = vmatpush1.msra.mxu0 0.0
      %4052 = vmatprep.subr.mxu0 0.0
      %4053 = vmatpush1.msra.mxu0 0.0
      %4054 = vmatprep.subr.mxu0 0.0
      %4055 = vmatpush1.msra.mxu0 0.0
      %4056 = vmatprep.subr.mxu0 0.0
      %4057 = vmatpush1.msra.mxu0 0.0
      %4058 = vmatprep.subr.mxu0 0.0
      %4059 = vmatpush1.msra.mxu0 0.0
      %4060 = vmatprep.subr.mxu0 0.0
      %4061 = vmatpush1.msra.mxu0 0.0
      %4062 = vmatprep.subr.mxu0 0.0
      %4063 = vmatpush1.msra.mxu0 0.0
      %4064 = vmatprep.subr.mxu0 0.0
      %4065 = vmatpush1.msra.mxu0 0.0
      %4066 = vmatprep.subr.mxu0 0.0
      %4067 = vmatpush1.msra.mxu0 0.0
      %4068 = vmatprep.subr.mxu0 0.0
      %4069 = vmatpush1.msra.mxu0 0.0
      %4070 = vmatprep.subr.mxu0 0.0
      %4071 = vmatpush1.msra.mxu0 0.0
      %4072 = vmatprep.subr.mxu0 0.0
      %4073 = vmatpush1.msra.mxu0 0.0
      %4074 = vmatprep.subr.mxu0 0.0
      %4075 = vmatpush1.msra.mxu0 0.0
      %4076 = vmatprep.subr.mxu0 0.0
      %4077 = vmatpush1.msra.mxu0 0.0
      %4078 = vmatprep.subr.mxu0 0.0
      %4079 = vmatpush1.msra.mxu0 0.0
      %4080 = vmatprep.subr.mxu0 0.0
      %4081 = vmatpush1.msra.mxu0 0.0
      %4082 = vmatprep.mubr.f32.mxu0 0.0
      %4083 = vmatmul.mubr.f32.gmra.mrb[0].mxu0 %v4016
      %v4084 = vpop.f32.mrb[0].mxu0
      %v4085 = vadd.f32 0.0, %v4084
      %v4086 = vpop.f32.mrb[0].mxu0
      %4087 = vdwg.mxu0
      %4088 = vrot.lane.b32.xlu0 %v3082, 112
      %v4089 = vpop.permute.xlu0 %4088
      %4090 = vrot.lane.b32.xlu0 %v3082, 80
      %v4091 = vpop.permute.xlu0 %4090
      %v4092 = vsel %vm1246, %v4089, 0
      %v4094 = vsel %vm1246, %v4091, 0
      %4096 = vmatprep.subr.mxu0 0.0
      %4097 = vmatpush1.xpose.msra.mxu0 %v4094
      %4098 = vmatprep.subr.mxu0 0.0
      %4099 = vmatpush1.xpose.msra.mxu0 0.0
      %4100 = vmatprep.subr.mxu0 0.0
      %4101 = vmatpush1.xpose.msra.mxu0 0.0
      %4102 = vmatprep.subr.mxu0 0.0
      %4103 = vmatpush1.xpose.msra.mxu0 0.0
      %4104 = vmatprep.subr.mxu0 0.0
      %4105 = vmatpush1.xpose.msra.mxu0 0.0
      %4106 = vmatprep.subr.mxu0 0.0
      %4107 = vmatpush1.xpose.msra.mxu0 0.0
      %4108 = vmatprep.subr.mxu0 0.0
      %4109 = vmatpush1.xpose.msra.mxu0 0.0
      %4110 = vmatprep.subr.mxu0 0.0
      %4111 = vmatpush1.xpose.msra.mxu0 0.0
      %4112 = vmatprep.subr.mxu0 0.0
      %4113 = vmatpush1.xpose.msra.mxu0 0.0
      %4114 = vmatprep.subr.mxu0 0.0
      %4115 = vmatpush1.xpose.msra.mxu0 0.0
      %4116 = vmatprep.subr.mxu0 0.0
      %4117 = vmatpush1.xpose.msra.mxu0 0.0
      %4118 = vmatprep.subr.mxu0 0.0
      %4119 = vmatpush1.xpose.msra.mxu0 0.0
      %4120 = vmatprep.subr.mxu0 0.0
      %4121 = vmatpush1.xpose.msra.mxu0 0.0
      %4122 = vmatprep.subr.mxu0 0.0
      %4123 = vmatpush1.xpose.msra.mxu0 0.0
      %4124 = vmatprep.subr.mxu0 0.0
      %4125 = vmatpush1.xpose.msra.mxu0 0.0
      %4126 = vmatprep.subr.mxu0 0.0
      %4127 = vmatpush1.xpose.msra.mxu0 0.0
      %4128 = vmatprep.subr.mxu0 0.0
      %4129 = vmatpush1.xpose.msra.mxu0 0.0
      %4130 = vmatprep.subr.mxu0 0.0
      %4131 = vmatpush1.xpose.msra.mxu0 0.0
      %4132 = vmatprep.subr.mxu0 0.0
      %4133 = vmatpush1.xpose.msra.mxu0 0.0
      %4134 = vmatprep.subr.mxu0 0.0
      %4135 = vmatpush1.xpose.msra.mxu0 0.0
      %4136 = vmatprep.subr.mxu0 0.0
      %4137 = vmatpush1.xpose.msra.mxu0 0.0
      %4138 = vmatprep.subr.mxu0 0.0
      %4139 = vmatpush1.xpose.msra.mxu0 0.0
      %4140 = vmatprep.subr.mxu0 0.0
      %4141 = vmatpush1.xpose.msra.mxu0 0.0
      %4142 = vmatprep.subr.mxu0 0.0
      %4143 = vmatpush1.xpose.msra.mxu0 0.0
      %4144 = vmatprep.subr.mxu0 0.0
      %4145 = vmatpush1.xpose.msra.mxu0 0.0
      %4146 = vmatprep.subr.mxu0 0.0
      %4147 = vmatpush1.xpose.msra.mxu0 0.0
      %4148 = vmatprep.subr.mxu0 0.0
      %4149 = vmatpush1.xpose.msra.mxu0 0.0
      %4150 = vmatprep.subr.mxu0 0.0
      %4151 = vmatpush1.xpose.msra.mxu0 0.0
      %4152 = vmatprep.subr.mxu0 0.0
      %4153 = vmatpush1.xpose.msra.mxu0 0.0
      %4154 = vmatprep.subr.mxu0 0.0
      %4155 = vmatpush1.xpose.msra.mxu0 0.0
      %4156 = vmatprep.subr.mxu0 0.0
      %4157 = vmatpush1.xpose.msra.mxu0 0.0
      %4158 = vmatprep.subr.mxu0 0.0
      %4159 = vmatpush1.xpose.msra.mxu0 0.0
      %4160 = vmatprep.mubr.f32.mxu0 0.0
      %4161 = vmatmul.mubr.f32.gmra.mrb[0].mxu0 %v4092
      %v4162 = vpop.f32.mrb[0].mxu0
      %v4163 = vadd.f32 0.0, %v4162
      %v4164 = vpop.f32.mrb[0].mxu0
      %4165 = vdwg.mxu0
      %v4166 = vsel %vm1246, %v4163, -inf
      %4167 = vmax.xlane.f32.xlu0 %v4166
      %v4168 = vpop.xlane.xlu0 %4167
      %v4169 = vsub.f32 %v4163, %v4168
      %v4170 = vmul.f32 %v4169, 1.442695
      %v4171 = vpow.pop %v4170
      %v4172 = vsel %vm1246, %v4171, 0.0
      %4173 = vadd.xlane.f32.xlu0 %v4172
      %v4174 = vpop.xlane.xlu0 %4173
      %v4175 = vrcp.pop %v4174
      %v4176 = vmul.f32 %v4171, %v4175
      %4177 = vrot.lane.b32.xlu0 %v3082, 48
      %v4178 = vpop.permute.xlu0 %4177
      %v4181 = vsel %vm1246, %v4176, 0
      %4183 = vmatprep.subr.mxu0 0.0
      %4184 = vmatpush1.msra.mxu0 %v4178
      %4185 = vmatprep.subr.mxu0 0.0
      %4186 = vmatpush1.msra.mxu0 0.0
      %4187 = vmatprep.subr.mxu0 0.0
      %4188 = vmatpush1.msra.mxu0 0.0
      %4189 = vmatprep.subr.mxu0 0.0
      %4190 = vmatpush1.msra.mxu0 0.0
      %4191 = vmatprep.subr.mxu0 0.0
      %4192 = vmatpush1.msra.mxu0 0.0
      %4193 = vmatprep.subr.mxu0 0.0
      %4194 = vmatpush1.msra.mxu0 0.0
      %4195 = vmatprep.subr.mxu0 0.0
      %4196 = vmatpush1.msra.mxu0 0.0
      %4197 = vmatprep.subr.mxu0 0.0
      %4198 = vmatpush1.msra.mxu0 0.0
      %4199 = vmatprep.subr.mxu0 0.0
      %4200 = vmatpush1.msra.mxu0 0.0
      %4201 = vmatprep.subr.mxu0 0.0
      %4202 = vmatpush1.msra.mxu0 0.0
      %4203 = vmatprep.subr.mxu0 0.0
      %4204 = vmatpush1.msra.mxu0 0.0
      %4205 = vmatprep.subr.mxu0 0.0
      %4206 = vmatpush1.msra.mxu0 0.0
      %4207 = vmatprep.subr.mxu0 0.0
      %4208 = vmatpush1.msra.mxu0 0.0
      %4209 = vmatprep.subr.mxu0 0.0
      %4210 = vmatpush1.msra.mxu0 0.0
      %4211 = vmatprep.subr.mxu0 0.0
      %4212 = vmatpush1.msra.mxu0 0.0
      %4213 = vmatprep.subr.mxu0 0.0
      %4214 = vmatpush1.msra.mxu0 0.0
      %4215 = vmatprep.subr.mxu0 0.0
      %4216 = vmatpush1.msra.mxu0 0.0
      %4217 = vmatprep.subr.mxu0 0.0
      %4218 = vmatpush1.msra.mxu0 0.0
      %4219 = vmatprep.subr.mxu0 0.0
      %4220 = vmatpush1.msra.mxu0 0.0
      %4221 = vmatprep.subr.mxu0 0.0
      %4222 = vmatpush1.msra.mxu0 0.0
      %4223 = vmatprep.subr.mxu0 0.0
      %4224 = vmatpush1.msra.mxu0 0.0
      %4225 = vmatprep.subr.mxu0 0.0
      %4226 = vmatpush1.msra.mxu0 0.0
      %4227 = vmatprep.subr.mxu0 0.0
      %4228 = vmatpush1.msra.mxu0 0.0
      %4229 = vmatprep.subr.mxu0 0.0
      %4230 = vmatpush1.msra.mxu0 0.0
      %4231 = vmatprep.subr.mxu0 0.0
      %4232 = vmatpush1.msra.mxu0 0.0
      %4233 = vmatprep.subr.mxu0 0.0
      %4234 = vmatpush1.msra.mxu0 0.0
      %4235 = vmatprep.subr.mxu0 0.0
      %4236 = vmatpush1.msra.mxu0 0.0
      %4237 = vmatprep.subr.mxu0 0.0
      %4238 = vmatpush1.msra.mxu0 0.0
      %4239 = vmatprep.subr.mxu0 0.0
      %4240 = vmatpush1.msra.mxu0 0.0
      %4241 = vmatprep.subr.mxu0 0.0
      %4242 = vmatpush1.msra.mxu0 0.0
      %4243 = vmatprep.subr.mxu0 0.0
      %4244 = vmatpush1.msra.mxu0 0.0
      %4245 = vmatprep.subr.mxu0 0.0
      %4246 = vmatpush1.msra.mxu0 0.0
      %4247 = vmatprep.mubr.f32.mxu0 0.0
      %4248 = vmatmul.mubr.f32.gmra.mrb[0].mxu0 %v4181
      %v4249 = vpop.f32.mrb[0].mxu0
      %v4250 = vadd.f32 0.0, %v4249
      %v4251 = vpop.f32.mrb[0].mxu0
      %4252 = vdwg.mxu0
      %4253 = vrot.lane.b32.xlu0 %v3082, 104
      %v4254 = vpop.permute.xlu0 %4253
      %4255 = vrot.lane.b32.xlu0 %v3082, 72
      %v4256 = vpop.permute.xlu0 %4255
      %v4257 = vsel %vm1246, %v4254, 0
      %v4259 = vsel %vm1246, %v4256, 0
      %4261 = vmatprep.subr.mxu0 0.0
      %4262 = vmatpush1.xpose.msra.mxu0 %v4259
      %4263 = vmatprep.subr.mxu0 0.0
      %4264 = vmatpush1.xpose.msra.mxu0 0.0
      %4265 = vmatprep.subr.mxu0 0.0
      %4266 = vmatpush1.xpose.msra.mxu0 0.0
      %4267 = vmatprep.subr.mxu0 0.0
      %4268 = vmatpush1.xpose.msra.mxu0 0.0
      %4269 = vmatprep.subr.mxu0 0.0
      %4270 = vmatpush1.xpose.msra.mxu0 0.0
      %4271 = vmatprep.subr.mxu0 0.0
      %4272 = vmatpush1.xpose.msra.mxu0 0.0
      %4273 = vmatprep.subr.mxu0 0.0
      %4274 = vmatpush1.xpose.msra.mxu0 0.0
      %4275 = vmatprep.subr.mxu0 0.0
      %4276 = vmatpush1.xpose.msra.mxu0 0.0
      %4277 = vmatprep.subr.mxu0 0.0
      %4278 = vmatpush1.xpose.msra.mxu0 0.0
      %4279 = vmatprep.subr.mxu0 0.0
      %4280 = vmatpush1.xpose.msra.mxu0 0.0
      %4281 = vmatprep.subr.mxu0 0.0
      %4282 = vmatpush1.xpose.msra.mxu0 0.0
      %4283 = vmatprep.subr.mxu0 0.0
      %4284 = vmatpush1.xpose.msra.mxu0 0.0
      %4285 = vmatprep.subr.mxu0 0.0
      %4286 = vmatpush1.xpose.msra.mxu0 0.0
      %4287 = vmatprep.subr.mxu0 0.0
      %4288 = vmatpush1.xpose.msra.mxu0 0.0
      %4289 = vmatprep.subr.mxu0 0.0
      %4290 = vmatpush1.xpose.msra.mxu0 0.0
      %4291 = vmatprep.subr.mxu0 0.0
      %4292 = vmatpush1.xpose.msra.mxu0 0.0
      %4293 = vmatprep.subr.mxu0 0.0
      %4294 = vmatpush1.xpose.msra.mxu0 0.0
      %4295 = vmatprep.subr.mxu0 0.0
      %4296 = vmatpush1.xpose.msra.mxu0 0.0
      %4297 = vmatprep.subr.mxu0 0.0
      %4298 = vmatpush1.xpose.msra.mxu0 0.0
      %4299 = vmatprep.subr.mxu0 0.0
      %4300 = vmatpush1.xpose.msra.mxu0 0.0
      %4301 = vmatprep.subr.mxu0 0.0
      %4302 = vmatpush1.xpose.msra.mxu0 0.0
      %4303 = vmatprep.subr.mxu0 0.0
      %4304 = vmatpush1.xpose.msra.mxu0 0.0
      %4305 = vmatprep.subr.mxu0 0.0
      %4306 = vmatpush1.xpose.msra.mxu0 0.0
      %4307 = vmatprep.subr.mxu0 0.0
      %4308 = vmatpush1.xpose.msra.mxu0 0.0
      %4309 = vmatprep.subr.mxu0 0.0
      %4310 = vmatpush1.xpose.msra.mxu0 0.0
      %4311 = vmatprep.subr.mxu0 0.0
      %4312 = vmatpush1.xpose.msra.mxu0 0.0
      %4313 = vmatprep.subr.mxu0 0.0
      %4314 = vmatpush1.xpose.msra.mxu0 0.0
      %4315 = vmatprep.subr.mxu0 0.0
      %4316 = vmatpush1.xpose.msra.mxu0 0.0
      %4317 = vmatprep.subr.mxu0 0.0
      %4318 = vmatpush1.xpose.msra.mxu0 0.0
      %4319 = vmatprep.subr.mxu0 0.0
      %4320 = vmatpush1.xpose.msra.mxu0 0.0
      %4321 = vmatprep.subr.mxu0 0.0
      %4322 = vmatpush1.xpose.msra.mxu0 0.0
      %4323 = vmatprep.subr.mxu0 0.0
      %4324 = vmatpush1.xpose.msra.mxu0 0.0
      %4325 = vmatprep.mubr.f32.mxu0 0.0
      %4326 = vmatmul.mubr.f32.gmra.mrb[0].mxu0 %v4257
      %v4327 = vpop.f32.mrb[0].mxu0
      %v4328 = vadd.f32 0.0, %v4327
      %v4329 = vpop.f32.mrb[0].mxu0
      %4330 = vdwg.mxu0
      %v4331 = vsel %vm1246, %v4328, -inf
      %4332 = vmax.xlane.f32.xlu0 %v4331
      %v4333 = vpop.xlane.xlu0 %4332
      %v4334 = vsub.f32 %v4328, %v4333
      %v4335 = vmul.f32 %v4334, 1.442695
      %v4336 = vpow.pop %v4335
      %v4337 = vsel %vm1246, %v4336, 0.0
      %4338 = vadd.xlane.f32.xlu0 %v4337
      %v4339 = vpop.xlane.xlu0 %4338
      %v4340 = vrcp.pop %v4339
      %v4341 = vmul.f32 %v4336, %v4340
      %4342 = vrot.lane.b32.xlu0 %v3082, 40
      %v4343 = vpop.permute.xlu0 %4342
      %v4346 = vsel %vm1246, %v4341, 0
      %4348 = vmatprep.subr.mxu0 0.0
      %4349 = vmatpush1.msra.mxu0 %v4343
      %4350 = vmatprep.subr.mxu0 0.0
      %4351 = vmatpush1.msra.mxu0 0.0
      %4352 = vmatprep.subr.mxu0 0.0
      %4353 = vmatpush1.msra.mxu0 0.0
      %4354 = vmatprep.subr.mxu0 0.0
      %4355 = vmatpush1.msra.mxu0 0.0
      %4356 = vmatprep.subr.mxu0 0.0
      %4357 = vmatpush1.msra.mxu0 0.0
      %4358 = vmatprep.subr.mxu0 0.0
      %4359 = vmatpush1.msra.mxu0 0.0
      %4360 = vmatprep.subr.mxu0 0.0
      %4361 = vmatpush1.msra.mxu0 0.0
      %4362 = vmatprep.subr.mxu0 0.0
      %4363 = vmatpush1.msra.mxu0 0.0
      %4364 = vmatprep.subr.mxu0 0.0
      %4365 = vmatpush1.msra.mxu0 0.0
      %4366 = vmatprep.subr.mxu0 0.0
      %4367 = vmatpush1.msra.mxu0 0.0
      %4368 = vmatprep.subr.mxu0 0.0
      %4369 = vmatpush1.msra.mxu0 0.0
      %4370 = vmatprep.subr.mxu0 0.0
      %4371 = vmatpush1.msra.mxu0 0.0
      %4372 = vmatprep.subr.mxu0 0.0
      %4373 = vmatpush1.msra.mxu0 0.0
      %4374 = vmatprep.subr.mxu0 0.0
      %4375 = vmatpush1.msra.mxu0 0.0
      %4376 = vmatprep.subr.mxu0 0.0
      %4377 = vmatpush1.msra.mxu0 0.0
      %4378 = vmatprep.subr.mxu0 0.0
      %4379 = vmatpush1.msra.mxu0 0.0
      %4380 = vmatprep.subr.mxu0 0.0
      %4381 = vmatpush1.msra.mxu0 0.0
      %4382 = vmatprep.subr.mxu0 0.0
      %4383 = vmatpush1.msra.mxu0 0.0
      %4384 = vmatprep.subr.mxu0 0.0
      %4385 = vmatpush1.msra.mxu0 0.0
      %4386 = vmatprep.subr.mxu0 0.0
      %4387 = vmatpush1.msra.mxu0 0.0
      %4388 = vmatprep.subr.mxu0 0.0
      %4389 = vmatpush1.msra.mxu0 0.0
      %4390 = vmatprep.subr.mxu0 0.0
      %4391 = vmatpush1.msra.mxu0 0.0
      %4392 = vmatprep.subr.mxu0 0.0
      %4393 = vmatpush1.msra.mxu0 0.0
      %4394 = vmatprep.subr.mxu0 0.0
      %4395 = vmatpush1.msra.mxu0 0.0
      %4396 = vmatprep.subr.mxu0 0.0
      %4397 = vmatpush1.msra.mxu0 0.0
      %4398 = vmatprep.subr.mxu0 0.0
      %4399 = vmatpush1.msra.mxu0 0.0
      %4400 = vmatprep.subr.mxu0 0.0
      %4401 = vmatpush1.msra.mxu0 0.0
      %4402 = vmatprep.subr.mxu0 0.0
      %4403 = vmatpush1.msra.mxu0 0.0
      %4404 = vmatprep.subr.mxu0 0.0
      %4405 = vmatpush1.msra.mxu0 0.0
      %4406 = vmatprep.subr.mxu0 0.0
      %4407 = vmatpush1.msra.mxu0 0.0
      %4408 = vmatprep.subr.mxu0 0.0
      %4409 = vmatpush1.msra.mxu0 0.0
      %4410 = vmatprep.subr.mxu0 0.0
      %4411 = vmatpush1.msra.mxu0 0.0
      %4412 = vmatprep.mubr.f32.mxu0 0.0
      %4413 = vmatmul.mubr.f32.gmra.mrb[0].mxu0 %v4346
      %v4414 = vpop.f32.mrb[0].mxu0
      %v4415 = vadd.f32 0.0, %v4414
      %v4416 = vpop.f32.mrb[0].mxu0
      %4417 = vdwg.mxu0
      %4419 = vrot.lane.b32.xlu0 %v4085, 8
      %v4420 = vpop.permute.xlu0 %4419
      %4423 = vrot.lane.b32.xlu0 %v4250, 16
      %v4424 = vpop.permute.xlu0 %4423
      %4427 = vrot.lane.b32.xlu0 %v4415, 24
      %v4428 = vpop.permute.xlu0 %4427
      %v4430 = vsel %vm1246, %v3920, %v4420
      %v4431 = vsel %vm1916, %v4430, %v4424
      %v4432 = vsel %vm1918, %v4431, %v4428
      %s4433 = scalar_lea.vmem %s850, 32
      %v4434 = vld [vmem:[%s4433] sm:$0xff]
      %v4435 = vld [vmem:[%s4433 + $0x8] sm:$0xff]
      %v4436 = vld [vmem:[%s4433 + $0x10] sm:$0xff]
      %v4437 = vld [vmem:[%s4433 + $0x18] sm:$0xff]
      %v4439 = vsel %vm1107, %v3758, 0
      %v4442 = vsel %vm1107, %v4432, 0
      %4444 = vmatprep.subr.mxu0 0.0
      %4445 = vmatpush1.msra.mxu0 %v4434
      %4446 = vmatprep.subr.mxu0 0.0
      %4447 = vmatpush1.msra.mxu0 %v4435
      %4448 = vmatprep.subr.mxu0 0.0
      %4449 = vmatpush1.msra.mxu0 %v4436
      %4450 = vmatprep.subr.mxu0 0.0
      %4451 = vmatpush1.msra.mxu0 %v4437
      %4452 = vmatprep.subr.mxu0 0.0
      %4453 = vmatpush1.msra.mxu0 0.0
      %4454 = vmatprep.subr.mxu0 0.0
      %4455 = vmatpush1.msra.mxu0 0.0
      %4456 = vmatprep.subr.mxu0 0.0
      %4457 = vmatpush1.msra.mxu0 0.0
      %4458 = vmatprep.subr.mxu0 0.0
      %4459 = vmatpush1.msra.mxu0 0.0
      %4460 = vmatprep.subr.mxu0 0.0
      %4461 = vmatpush1.msra.mxu0 0.0
      %4462 = vmatprep.subr.mxu0 0.0
      %4463 = vmatpush1.msra.mxu0 0.0
      %4464 = vmatprep.subr.mxu0 0.0
      %4465 = vmatpush1.msra.mxu0 0.0
      %4466 = vmatprep.subr.mxu0 0.0
      %4467 = vmatpush1.msra.mxu0 0.0
      %4468 = vmatprep.subr.mxu0 0.0
      %4469 = vmatpush1.msra.mxu0 0.0
      %4470 = vmatprep.subr.mxu0 0.0
      %4471 = vmatpush1.msra.mxu0 0.0
      %4472 = vmatprep.subr.mxu0 0.0
      %4473 = vmatpush1.msra.mxu0 0.0
      %4474 = vmatprep.subr.mxu0 0.0
      %4475 = vmatpush1.msra.mxu0 0.0
      %4476 = vmatprep.subr.mxu0 0.0
      %4477 = vmatpush1.msra.mxu0 0.0
      %4478 = vmatprep.subr.mxu0 0.0
      %4479 = vmatpush1.msra.mxu0 0.0
      %4480 = vmatprep.subr.mxu0 0.0
      %4481 = vmatpush1.msra.mxu0 0.0
      %4482 = vmatprep.subr.mxu0 0.0
      %4483 = vmatpush1.msra.mxu0 0.0
      %4484 = vmatprep.subr.mxu0 0.0
      %4485 = vmatpush1.msra.mxu0 0.0
      %4486 = vmatprep.subr.mxu0 0.0
      %4487 = vmatpush1.msra.mxu0 0.0
      %4488 = vmatprep.subr.mxu0 0.0
      %4489 = vmatpush1.msra.mxu0 0.0
      %4490 = vmatprep.subr.mxu0 0.0
      %4491 = vmatpush1.msra.mxu0 0.0
      %4492 = vmatprep.subr.mxu0 0.0
      %4493 = vmatpush1.msra.mxu0 0.0
      %4494 = vmatprep.subr.mxu0 0.0
      %4495 = vmatpush1.msra.mxu0 0.0
      %4496 = vmatprep.subr.mxu0 0.0
      %4497 = vmatpush1.msra.mxu0 0.0
      %4498 = vmatprep.subr.mxu0 0.0
      %4499 = vmatpush1.msra.mxu0 0.0
      %4500 = vmatprep.subr.mxu0 0.0
      %4501 = vmatpush1.msra.mxu0 0.0
      %4502 = vmatprep.subr.mxu0 0.0
      %4503 = vmatpush1.msra.mxu0 0.0
      %4504 = vmatprep.subr.mxu0 0.0
      %4505 = vmatpush1.msra.mxu0 0.0
      %4506 = vmatprep.subr.mxu0 0.0
      %4507 = vmatpush1.msra.mxu0 0.0
      %4508 = vmatprep.mubr.f32.mxu0 0.0
      %4509 = vmatmul.mubr.f32.gmra.mrb[0].mxu0 %v4439
      %v4510 = vpop.f32.mrb[0].mxu0
      %v4511 = vadd.f32 0.0, %v4510
      %v4512 = vpop.f32.mrb[0].mxu0
      %4513 = vmatprep.mubr.f32.mxu0 0.0
      %4514 = vmatmul.mubr.f32.gmra.mrb[0].mxu0 %v4442
      %v4515 = vpop.f32.mrb[0].mxu0
      %v4516 = vadd.f32 0.0, %v4515
      %v4517 = vpop.f32.mrb[0].mxu0
      %4518 = vdwg.mxu0
      %v4519 = vadd.f32 %v2943, %v4511
      %v4520 = vadd.f32 %v2944, %v4516
      %s4521 = scalar_lea.vmem %s854, 1
      %v4522 = vld [vmem:[%s4521] sm:$0x1]
      %v4524 = vlaneseq
      %v4525 = vshrl.u32 %v4524, 7
      %v4526 = vsub.s32 0, %v4525
      %v4527 = vrot.slane %v4522, %v4526
      %v4529 = vadd.f32 %v4519, %v4527
      %v4530 = vadd.f32 %v4520, %v4527
      %s4531 = scalar_lea.vmem %s858, 1
      %v4532 = vld [vmem:[%s4531] sm:$0x1]
      %s4533 = scalar_lea.vmem %s862, 1
      %v4534 = vld [vmem:[%s4533] sm:$0x1]
      %v4535 = vsel %vm1107, %v4529, 0.0
      %4536 = vadd.xlane.f32.xlu0 %v4535
      %v4537 = vpop.xlane.xlu0 %4536
      %v4538 = vsel %vm1107, %v4530, 0.0
      %4539 = vadd.xlane.f32.xlu0 %v4538
      %v4540 = vpop.xlane.xlu0 %4539
      %v4541 = vmul.f32 %v4537, %v1114
      %v4542 = vmul.f32 %v4540, %v1114
      %v4543 = vsub.f32 %v4529, %v4541
      %v4544 = vsub.f32 %v4530, %v4542
      %v4545 = vmul.f32 %v4543, %v4543
      %v4546 = vmul.f32 %v4544, %v4544
      %v4547 = vsel %vm1107, %v4545, 0.0
      %4548 = vadd.xlane.f32.xlu0 %v4547
      %v4549 = vpop.xlane.xlu0 %4548
      %v4550 = vsel %vm1107, %v4546, 0.0
      %4551 = vadd.xlane.f32.xlu0 %v4550
      %v4552 = vpop.xlane.xlu0 %4551
      %v4553 = vmul.f32 %v4549, %v1114
      %v4554 = vmul.f32 %v4552, %v1114
      %v4555 = vadd.f32 %v4553, 1e-06
      %v4556 = vadd.f32 %v4554, 1e-06
      %v4557 = vrsqrt.pop %v4555
      %v4558 = vrsqrt.pop %v4556
      %v4559 = vmul.f32 %v4543, %v4557
      %v4560 = vmul.f32 %v4544, %v4558
      %v4562 = vlaneseq
      %v4563 = vshrl.u32 %v4562, 7
      %v4564 = vsub.s32 0, %v4563
      %v4565 = vrot.slane %v4532, %v4564
      %v4567 = vmul.f32 %v4559, %v4565
      %v4568 = vmul.f32 %v4560, %v4565
      %v4570 = vlaneseq
      %v4571 = vshrl.u32 %v4570, 7
      %v4572 = vsub.s32 0, %v4571
      %v4573 = vrot.slane %v4534, %v4572
      %v4575 = vadd.f32 %v4567, %v4573
      %v4576 = vadd.f32 %v4568, %v4573
      %s4577 = scalar_lea.vmem %s867, 32
      %v4578 = vld [vmem:[%s4577] sm:$0xff]
      %v4579 = vld [vmem:[%s4577 + $0x8] sm:$0xff]
      %v4580 = vld [vmem:[%s4577 + $0x10] sm:$0xff]
      %v4581 = vld [vmem:[%s4577 + $0x18] sm:$0xff]
      %s4582 = scalar_lea.vmem %s871, 1
      %v4583 = vld [vmem:[%s4582] sm:$0x1]
      %v4585 = vlaneseq
      %v4586 = vshrl.u32 %v4585, 7
      %v4587 = vsub.s32 0, %v4586
      %v4588 = vrot.slane %v4583, %v4587
      %v4591 = vsel %vm1107, %v4575, 0
      %v4594 = vsel %vm1107, %v4576, 0
      %4596 = vmatprep.subr.mxu0 0.0
      %4597 = vmatpush1.msra.mxu0 %v4578
      %4598 = vmatprep.subr.mxu0 0.0
      %4599 = vmatpush1.msra.mxu0 %v4579
      %4600 = vmatprep.subr.mxu0 0.0
      %4601 = vmatpush1.msra.mxu0 %v4580
      %4602 = vmatprep.subr.mxu0 0.0
      %4603 = vmatpush1.msra.mxu0 %v4581
      %4604 = vmatprep.subr.mxu0 0.0
      %4605 = vmatpush1.msra.mxu0 0.0
      %4606 = vmatprep.subr.mxu0 0.0
      %4607 = vmatpush1.msra.mxu0 0.0
      %4608 = vmatprep.subr.mxu0 0.0
      %4609 = vmatpush1.msra.mxu0 0.0
      %4610 = vmatprep.subr.mxu0 0.0
      %4611 = vmatpush1.msra.mxu0 0.0
      %4612 = vmatprep.subr.mxu0 0.0
      %4613 = vmatpush1.msra.mxu0 0.0
      %4614 = vmatprep.subr.mxu0 0.0
      %4615 = vmatpush1.msra.mxu0 0.0
      %4616 = vmatprep.subr.mxu0 0.0
      %4617 = vmatpush1.msra.mxu0 0.0
      %4618 = vmatprep.subr.mxu0 0.0
      %4619 = vmatpush1.msra.mxu0 0.0
      %4620 = vmatprep.subr.mxu0 0.0
      %4621 = vmatpush1.msra.mxu0 0.0
      %4622 = vmatprep.subr.mxu0 0.0
      %4623 = vmatpush1.msra.mxu0 0.0
      %4624 = vmatprep.subr.mxu0 0.0
      %4625 = vmatpush1.msra.mxu0 0.0
      %4626 = vmatprep.subr.mxu0 0.0
      %4627 = vmatpush1.msra.mxu0 0.0
      %4628 = vmatprep.subr.mxu0 0.0
      %4629 = vmatpush1.msra.mxu0 0.0
      %4630 = vmatprep.subr.mxu0 0.0
      %4631 = vmatpush1.msra.mxu0 0.0
      %4632 = vmatprep.subr.mxu0 0.0
      %4633 = vmatpush1.msra.mxu0 0.0
      %4634 = vmatprep.subr.mxu0 0.0
      %4635 = vmatpush1.msra.mxu0 0.0
      %4636 = vmatprep.subr.mxu0 0.0
      %4637 = vmatpush1.msra.mxu0 0.0
      %4638 = vmatprep.subr.mxu0 0.0
      %4639 = vmatpush1.msra.mxu0 0.0
      %4640 = vmatprep.subr.mxu0 0.0
      %4641 = vmatpush1.msra.mxu0 0.0
      %4642 = vmatprep.subr.mxu0 0.0
      %4643 = vmatpush1.msra.mxu0 0.0
      %4644 = vmatprep.subr.mxu0 0.0
      %4645 = vmatpush1.msra.mxu0 0.0
      %4646 = vmatprep.subr.mxu0 0.0
      %4647 = vmatpush1.msra.mxu0 0.0
      %4648 = vmatprep.subr.mxu0 0.0
      %4649 = vmatpush1.msra.mxu0 0.0
      %4650 = vmatprep.subr.mxu0 0.0
      %4651 = vmatpush1.msra.mxu0 0.0
      %4652 = vmatprep.subr.mxu0 0.0
      %4653 = vmatpush1.msra.mxu0 0.0
      %4654 = vmatprep.subr.mxu0 0.0
      %4655 = vmatpush1.msra.mxu0 0.0
      %4656 = vmatprep.subr.mxu0 0.0
      %4657 = vmatpush1.msra.mxu0 0.0
      %4658 = vmatprep.subr.mxu0 0.0
      %4659 = vmatpush1.msra.mxu0 0.0
      %4660 = vmatprep.mubr.f32.mxu0 0.0
      %4661 = vmatmul.mubr.f32.gmra.mrb[0].mxu0 %v4591
      %v4662 = vpop.f32.mrb[0].mxu0
      %v4663 = vadd.f32 %v4588, %v4662
      %v4664 = vpop.f32.mrb[0].mxu0
      %4665 = vmatprep.mubr.f32.mxu0 0.0
      %4666 = vmatmul.mubr.f32.gmra.mrb[0].mxu0 %v4594
      %v4667 = vpop.f32.mrb[0].mxu0
      %v4668 = vadd.f32 %v4588, %v4667
      %v4669 = vpop.f32.mrb[0].mxu0
      %4670 = vdwg.mxu0
      %v4671 = vmul.f32 %v4663, %v4663
      %v4672 = vmul.f32 %v4668, %v4668
      %v4673 = vmul.f32 %v4663, %v4671
      %v4674 = vmul.f32 %v4668, %v4672
      %v4675 = vmul.f32 %v4673, 0.044715
      %v4676 = vmul.f32 %v4674, 0.044715
      %v4677 = vadd.f32 %v4663, %v4675
      %v4678 = vadd.f32 %v4668, %v4676
      %v4679 = vmul.f32 %v4677, 0.7978846
      %v4680 = vmul.f32 %v4678, 0.7978846
      %v4681 = vtanh.pop %v4679
      %v4682 = vtanh.pop %v4680
      %v4683 = vadd.f32 %v4681, 1.0
      %v4684 = vadd.f32 %v4682, 1.0
      %v4685 = vmul.f32 %v4683, 0.5
      %v4686 = vmul.f32 %v4684, 0.5
      %v4687 = vmul.f32 %v4663, %v4685
      %v4688 = vmul.f32 %v4668, %v4686
      %s4689 = scalar_lea.vmem %s876, 64
      %v4690 = vld [vmem:[%s4689] sm:$0xff]
      %v4691 = vld [vmem:[%s4689 + $0x8] sm:$0xff]
      %v4692 = vld [vmem:[%s4689 + $0x10] sm:$0xff]
      %v4693 = vld [vmem:[%s4689 + $0x18] sm:$0xff]
      %v4694 = vld [vmem:[%s4689 + $0x20] sm:$0xff]
      %v4695 = vld [vmem:[%s4689 + $0x28] sm:$0xff]
      %v4696 = vld [vmem:[%s4689 + $0x30] sm:$0xff]
      %v4697 = vld [vmem:[%s4689 + $0x38] sm:$0xff]
      %v4699 = vsel %vm2852, %v4687, 0
      %v4702 = vsel %vm2852, %v4688, 0
      %4704 = vmatprep.subr.mxu0 0.0
      %4705 = vmatpush1.msra.mxu0 %v4690
      %4706 = vmatprep.subr.mxu0 0.0
      %4707 = vmatpush1.msra.mxu0 %v4691
      %4708 = vmatprep.subr.mxu0 0.0
      %4709 = vmatpush1.msra.mxu0 %v4692
      %4710 = vmatprep.subr.mxu0 0.0
      %4711 = vmatpush1.msra.mxu0 %v4693
      %4712 = vmatprep.subr.mxu0 0.0
      %4713 = vmatpush1.msra.mxu0 %v4694
      %4714 = vmatprep.subr.mxu0 0.0
      %4715 = vmatpush1.msra.mxu0 %v4695
      %4716 = vmatprep.subr.mxu0 0.0
      %4717 = vmatpush1.msra.mxu0 %v4696
      %4718 = vmatprep.subr.mxu0 0.0
      %4719 = vmatpush1.msra.mxu0 %v4697
      %4720 = vmatprep.subr.mxu0 0.0
      %4721 = vmatpush1.msra.mxu0 0.0
      %4722 = vmatprep.subr.mxu0 0.0
      %4723 = vmatpush1.msra.mxu0 0.0
      %4724 = vmatprep.subr.mxu0 0.0
      %4725 = vmatpush1.msra.mxu0 0.0
      %4726 = vmatprep.subr.mxu0 0.0
      %4727 = vmatpush1.msra.mxu0 0.0
      %4728 = vmatprep.subr.mxu0 0.0
      %4729 = vmatpush1.msra.mxu0 0.0
      %4730 = vmatprep.subr.mxu0 0.0
      %4731 = vmatpush1.msra.mxu0 0.0
      %4732 = vmatprep.subr.mxu0 0.0
      %4733 = vmatpush1.msra.mxu0 0.0
      %4734 = vmatprep.subr.mxu0 0.0
      %4735 = vmatpush1.msra.mxu0 0.0
      %4736 = vmatprep.subr.mxu0 0.0
      %4737 = vmatpush1.msra.mxu0 0.0
      %4738 = vmatprep.subr.mxu0 0.0
      %4739 = vmatpush1.msra.mxu0 0.0
      %4740 = vmatprep.subr.mxu0 0.0
      %4741 = vmatpush1.msra.mxu0 0.0
      %4742 = vmatprep.subr.mxu0 0.0
      %4743 = vmatpush1.msra.mxu0 0.0
      %4744 = vmatprep.subr.mxu0 0.0
      %4745 = vmatpush1.msra.mxu0 0.0
      %4746 = vmatprep.subr.mxu0 0.0
      %4747 = vmatpush1.msra.mxu0 0.0
      %4748 = vmatprep.subr.mxu0 0.0
      %4749 = vmatpush1.msra.mxu0 0.0
      %4750 = vmatprep.subr.mxu0 0.0
      %4751 = vmatpush1.msra.mxu0 0.0
      %4752 = vmatprep.subr.mxu0 0.0
      %4753 = vmatpush1.msra.mxu0 0.0
      %4754 = vmatprep.subr.mxu0 0.0
      %4755 = vmatpush1.msra.mxu0 0.0
      %4756 = vmatprep.subr.mxu0 0.0
      %4757 = vmatpush1.msra.mxu0 0.0
      %4758 = vmatprep.subr.mxu0 0.0
      %4759 = vmatpush1.msra.mxu0 0.0
      %4760 = vmatprep.subr.mxu0 0.0
      %4761 = vmatpush1.msra.mxu0 0.0
      %4762 = vmatprep.subr.mxu0 0.0
      %4763 = vmatpush1.msra.mxu0 0.0
      %4764 = vmatprep.subr.mxu0 0.0
      %4765 = vmatpush1.msra.mxu0 0.0
      %4766 = vmatprep.subr.mxu0 0.0
      %4767 = vmatpush1.msra.mxu0 0.0
      %4768 = vmatprep.mubr.f32.mxu0 0.0
      %4769 = vmatmul.mubr.f32.gmra.mrb[0].mxu0 %v4699
      %v4770 = vpop.f32.mrb[0].mxu0
      %v4771 = vadd.f32 0.0, %v4770
      %v4772 = vpop.f32.mrb[0].mxu0
      %4773 = vmatprep.mubr.f32.mxu0 0.0
      %4774 = vmatmul.mubr.f32.gmra.mrb[0].mxu0 %v4702
      %v4775 = vpop.f32.mrb[0].mxu0
      %v4776 = vadd.f32 0.0, %v4775
      %v4777 = vpop.f32.mrb[0].mxu0
      %4778 = vdwg.mxu0
      %v4779 = vadd.f32 %v4529, %v4771
      %v4780 = vadd.f32 %v4530, %v4776
      %s4781 = scalar_lea.vmem %s880, 1
      %v4782 = vld [vmem:[%s4781] sm:$0x1]
      %v4784 = vlaneseq
      %v4785 = vshrl.u32 %v4784, 7
      %v4786 = vsub.s32 0, %v4785
      %v4787 = vrot.slane %v4782, %v4786
      %v4789 = vadd.f32 %v4779, %v4787
      %v4790 = vadd.f32 %v4780, %v4787
      %v4791 = vsel %vm1107, %v4789, 0.0
      %v4792 = vrot.slane %v4791, 4
      %v4793 = vadd.f32 %v4791, %v4792
      %v4794 = vrot.slane %v4793, 2
      %v4795 = vadd.f32 %v4793, %v4794
      %v4796 = vrot.slane %v4795, 1
      %v4797 = vadd.f32 %v4795, %v4796
      %v4798 = vrcp.pop 8.0
      %v4799 = vmul.f32 %v4797, %v4798
      %v4800 = vsel %vm1107, %v4790, 0.0
      %v4801 = vrot.slane %v4800, 4
      %v4802 = vadd.f32 %v4800, %v4801
      %v4803 = vrot.slane %v4802, 2
      %v4804 = vadd.f32 %v4802, %v4803
      %v4805 = vrot.slane %v4804, 1
      %v4806 = vadd.f32 %v4804, %v4805
      %v4807 = vmul.f32 %v4806, %v4798
      %vm4808 = vcmask 1040384
      %v4809 = vsel %vm4808, %v4799, %v4807
      %v4810 = vld [vmem:[%s883] sm:$0x1]
      %v4811 = vld [vmem:[%s886] sm:$0x1]
      %vm4812 = vcmask 254976
      %v4813 = vsel %vm4812, %v4809, 0.0
      %4814 = vadd.xlane.f32.xlu0 %v4813
      %v4815 = vpop.xlane.xlu0 %4814
      %v4816 = vmul.f32 %v4815, %v1114
      %v4817 = vsub.f32 %v4809, %v4816
      %v4818 = vmul.f32 %v4817, %v4817
      %v4819 = vsel %vm4812, %v4818, 0.0
      %4820 = vadd.xlane.f32.xlu0 %v4819
      %v4821 = vpop.xlane.xlu0 %4820
      %v4822 = vmul.f32 %v4821, %v1114
      %v4823 = vadd.f32 %v4822, 1e-06
      %v4824 = vrsqrt.pop %v4823
      %v4825 = vmul.f32 %v4817, %v4824
      %v4827 = vlaneseq
      %v4828 = vshrl.u32 %v4827, 7
      %v4829 = vsub.s32 0, %v4828
      %v4830 = vrot.slane %v4810, %v4829
      %v4832 = vmul.f32 %v4825, %v4830
      %v4834 = vlaneseq
      %v4835 = vshrl.u32 %v4834, 7
      %v4836 = vsub.s32 0, %v4835
      %v4837 = vrot.slane %v4811, %v4836
      %v4839 = vadd.f32 %v4832, %v4837
      %v4840 = vld [vmem:[%s891] sm:$0xff]
      %v4841 = vld [vmem:[%s891 + $0x8] sm:$0xff]
      %v4842 = vld [vmem:[%s891 + $0x10] sm:$0xff]
      %v4843 = vld [vmem:[%s891 + $0x18] sm:$0xff]
      %v4844 = vld [vmem:[%s894] sm:$0x1]
      %v4846 = vlaneseq
      %v4847 = vshrl.u32 %v4846, 7
      %v4848 = vsub.s32 0, %v4847
      %v4849 = vrot.slane %v4844, %v4848
      %v4852 = vsel %vm1107, %v4839, 0
      %4854 = vmatprep.subr.mxu0 0.0
      %4855 = vmatpush1.msra.mxu0 %v4840
      %4856 = vmatprep.subr.mxu0 0.0
      %4857 = vmatpush1.msra.mxu0 %v4841
      %4858 = vmatprep.subr.mxu0 0.0
      %4859 = vmatpush1.msra.mxu0 %v4842
      %4860 = vmatprep.subr.mxu0 0.0
      %4861 = vmatpush1.msra.mxu0 %v4843
      %4862 = vmatprep.subr.mxu0 0.0
      %4863 = vmatpush1.msra.mxu0 0.0
      %4864 = vmatprep.subr.mxu0 0.0
      %4865 = vmatpush1.msra.mxu0 0.0
      %4866 = vmatprep.subr.mxu0 0.0
      %4867 = vmatpush1.msra.mxu0 0.0
      %4868 = vmatprep.subr.mxu0 0.0
      %4869 = vmatpush1.msra.mxu0 0.0
      %4870 = vmatprep.subr.mxu0 0.0
      %4871 = vmatpush1.msra.mxu0 0.0
      %4872 = vmatprep.subr.mxu0 0.0
      %4873 = vmatpush1.msra.mxu0 0.0
      %4874 = vmatprep.subr.mxu0 0.0
      %4875 = vmatpush1.msra.mxu0 0.0
      %4876 = vmatprep.subr.mxu0 0.0
      %4877 = vmatpush1.msra.mxu0 0.0
      %4878 = vmatprep.subr.mxu0 0.0
      %4879 = vmatpush1.msra.mxu0 0.0
      %4880 = vmatprep.subr.mxu0 0.0
      %4881 = vmatpush1.msra.mxu0 0.0
      %4882 = vmatprep.subr.mxu0 0.0
      %4883 = vmatpush1.msra.mxu0 0.0
      %4884 = vmatprep.subr.mxu0 0.0
      %4885 = vmatpush1.msra.mxu0 0.0
      %4886 = vmatprep.subr.mxu0 0.0
      %4887 = vmatpush1.msra.mxu0 0.0
      %4888 = vmatprep.subr.mxu0 0.0
      %4889 = vmatpush1.msra.mxu0 0.0
      %4890 = vmatprep.subr.mxu0 0.0
      %4891 = vmatpush1.msra.mxu0 0.0
      %4892 = vmatprep.subr.mxu0 0.0
      %4893 = vmatpush1.msra.mxu0 0.0
      %4894 = vmatprep.subr.mxu0 0.0
      %4895 = vmatpush1.msra.mxu0 0.0
      %4896 = vmatprep.subr.mxu0 0.0
      %4897 = vmatpush1.msra.mxu0 0.0
      %4898 = vmatprep.subr.mxu0 0.0
      %4899 = vmatpush1.msra.mxu0 0.0
      %4900 = vmatprep.subr.mxu0 0.0
      %4901 = vmatpush1.msra.mxu0 0.0
      %4902 = vmatprep.subr.mxu0 0.0
      %4903 = vmatpush1.msra.mxu0 0.0
      %4904 = vmatprep.subr.mxu0 0.0
      %4905 = vmatpush1.msra.mxu0 0.0
      %4906 = vmatprep.subr.mxu0 0.0
      %4907 = vmatpush1.msra.mxu0 0.0
      %4908 = vmatprep.subr.mxu0 0.0
      %4909 = vmatpush1.msra.mxu0 0.0
      %4910 = vmatprep.subr.mxu0 0.0
      %4911 = vmatpush1.msra.mxu0 0.0
      %4912 = vmatprep.subr.mxu0 0.0
      %4913 = vmatpush1.msra.mxu0 0.0
      %4914 = vmatprep.subr.mxu0 0.0
      %4915 = vmatpush1.msra.mxu0 0.0
      %4916 = vmatprep.subr.mxu0 0.0
      %4917 = vmatpush1.msra.mxu0 0.0
      %4918 = vmatprep.mubr.f32.mxu0 0.0
      %4919 = vmatmul.mubr.f32.gmra.mrb[0].mxu0 %v4852
      %v4920 = vpop.f32.mrb[0].mxu0
      %v4921 = vadd.f32 %v4849, %v4920
      %v4922 = vpop.f32.mrb[0].mxu0
      %4923 = vdwg.mxu0
      %4924 = vst [vmem:[%s898] sm:$0x3] %v4921
      %p4925 = scmp.lt.s32.totalorder %s30, 1
      %s4926 = scalar_select %p4925, %s30, 1
      %s4927 = smul.addr %s4926, 2
      %s4928 = scalar_lea.vmem %s19, %s4927
      // Predicated region
      $region97: #{verb_noun_forward.1} parent=95 // pred_check
        %p4929 = pneg %p537
      $region98: #{verb_noun_forward.1} parent=95 // pred_check_branch
        %4931 = sbr.rel (%p4929) target = $region100
      $region99: #{verb_noun_forward.1} parent=95 // pred_region
        _
      $region100: #{verb_noun_forward.1} parent=95 // pred_fallthru
        _
    $region96: #{verb_noun_forward.1} parent=5 // pred_fallthru
      _
    %p4932 = scmp.le.s32.totalorder 2, %s25
    // Predicated region
    $region101: #{verb_noun_forward.1} parent=5 // pred_check
      %p4933 = pneg %p4932
    $region102: #{verb_noun_forward.1} parent=5 // pred_check_branch
      %4935 = sbr.rel (%p4933) target = $region104
    $region103: #{verb_noun_forward.1} parent=5 // pred_region
      %s4936 = ssub.s32 %s25, 2
      // Predicated region
      $region105: #{verb_noun_forward.1} parent=103 // pred_check
        %p4937 = pneg %p543
      $region106: #{verb_noun_forward.1} parent=103 // pred_check_branch
        %4939 = sbr.rel (%p4937) target = $region108
      $region107: #{verb_noun_forward.1} parent=103 // pred_region
        %p4940 = scmp.lt.s32.totalorder %s31, 1
        %s4941 = scalar_select %p4940, %s31, 1
        %s4942 = smul.addr %s4941, 2
        %s4943 = scalar_lea.vmem %s19, %s4942
      $region108: #{verb_noun_forward.1} parent=103 // pred_fallthru
        _
    $region104: #{verb_noun_forward.1} parent=5 // pred_fallthru
      _
  $region6: #{verb_noun_forward.1} parent=0 // loop_footer
    %s29 = sadd.s32 1, %s25
  $region7: #{verb_noun_forward.1} parent=0 // loop_footer_branch
    %24 = sbr.rel target = $region3
  $region8: #{verb_noun_forward.1} parent=0 // loop_exit
    _

</llo_original>
